<compile_context>
chip_gen: v7x
topology: tpu7x:2x2x1
jax: 0.10.0
libtpu: 0.0.40
codegen_flags: <defaults>
</compile_context>

<pallas_src>
import functools
import math

import jax
import jax.numpy as jnp
from jax.experimental import pallas as pl
from jax.experimental.pallas import tpu as pltpu

VMEM_SPEC = pl.BlockSpec(memory_space=pltpu.MemorySpace.VMEM)


# ---------------------------------------------------------------------------
# Fused kernel: LSTM -> coupling stack -> scaling + Normal log_prob + log|det|
# ---------------------------------------------------------------------------
def _nice_ts_fused_kernel(x_ref,      # (B, T, W)        raw input
                          t_ref,      # (B, T, I_t)      time features
                          plstm_ref,  # (W+I_t+H+1, 4H)  [w_ih ; w_hh ; b_ih+b_hh]
                          pc32_ref,   # (L*W + L*n_mid*mid + L*n_mid, mid)
                          pemb_ref,   # (H+1, L*mid)     [w_in_emb_all ; b_in_all]
                          pcw_ref,    # (L*mid + L + 2, W)  [w_out_exp; b_out_exp; exp(scale); logdet]
                          out_ref,    # (B, 1)           log-likelihood
                          *, T, B, W, I_t, H, mid, L, n_mid):
    G = 4 * H
    i_tot = W + I_t

    # ---------------- LSTM ----------------
    xv = x_ref[...]                                   # (B, T, W)
    x2d = xv.reshape(B * T, W)                        # row = b*T + t (layout no-op)
    t2d = t_ref[...].reshape(B * T, I_t)

    # Hoisted input projection for all timesteps (off the serial path):
    # gates_in = x@Wx + time@Wt + (b_ih + b_hh), fused 4H-wide (i,f,g,o order).
    gin = (jnp.dot(x2d, plstm_ref[0:W, :], preferred_element_type=jnp.float32)
           + jnp.dot(t2d, plstm_ref[W:i_tot, :], preferred_element_type=jnp.float32)
           + plstm_ref[i_tot + H:i_tot + H + 1, :]
           ).reshape(B, T, G)

    whh = plstm_ref[i_tot:i_tot + H, :]               # (H, 4H), loaded once

    h = jnp.zeros((B, H), jnp.float32)
    c = jnp.zeros((B, H), jnp.float32)
    for t in range(T):                                # static unroll
        # One fused recurrent matmul per step (critical path).
        gates = gin[:, t, :] + jnp.dot(h, whh, preferred_element_type=jnp.float32)
        sg = jax.nn.sigmoid(gates)                    # one wide sigmoid (i,f,_,o)
        tg = jnp.tanh(gates)                          # one wide tanh    (_,_,g,_)
        c = sg[:, H:2 * H] * c + sg[:, 0:H] * tg[:, 2 * H:3 * H]
        h = sg[:, 3 * H:4 * H] * jnp.tanh(c)
    emb = h                                           # (B, H) last hidden state

    # ------------- Coupling stack -------------
    # emb contribution + in_block bias for ALL layers in one lane-dense matmul.
    emb_all = (jnp.dot(emb, pemb_ref[0:H, :], preferred_element_type=jnp.float32)
               + pemb_ref[H:H + 1, :])                # (B, L*mid)

    # NVP input stays in the original interleaved layout the whole way through:
    # zero-expanded w_in / w_out / b_out (built in prepare_params) absorb the
    # even/odd on/off masking exactly.
    xf = xv[:, T - 1, :]                              # (B, W)

    off_wmid = L * W
    off_bmid = off_wmid + L * n_mid * mid
    for l in range(L):                                # static unroll
        w_in = pc32_ref[l * W:(l + 1) * W, :]         # (W, mid), zero rows at 'on'
        a = jnp.maximum(
            jnp.dot(xf, w_in, preferred_element_type=jnp.float32)
            + emb_all[:, l * mid:(l + 1) * mid], 0.0)
        for j in range(n_mid):                        # static unroll
            k = l * n_mid + j
            a = jnp.maximum(
                jnp.dot(a, pc32_ref[off_wmid + k * mid:off_wmid + (k + 1) * mid, :],
                        preferred_element_type=jnp.float32)
                + pc32_ref[off_bmid + k:off_bmid + k + 1, :], 0.0)
        shift = (jnp.dot(a, pcw_ref[l * mid:(l + 1) * mid, :],
                         preferred_element_type=jnp.float32)
                 + pcw_ref[L * mid + l:L * mid + l + 1, :])
        xf = xf + shift                               # exact zeros on 'off' lanes

    # ------- Scaling + standard-Normal prior log_prob + log|det J| -------
    off_es = L * mid + L
    z = xf * pcw_ref[off_es:off_es + 1, :]            # exp(scale), precomputed
    log_pz = jnp.sum(-0.5 * z * z - 0.5 * math.log(2.0 * math.pi),
                     axis=1, keepdims=True)           # (B, 1)
    # + log|det J| = sum(scale), precomputed, stored at [off_es+1, 0].
    out_ref[...] = log_pz + pcw_ref[off_es + 1:off_es + 2, 0:1]


# ---------------------------------------------------------------------------
# Forward = log_prob(x, time): one fused pallas_call, zero wrapper prep
# ---------------------------------------------------------------------------
def nice_ts_forward(x, time, p, dims):
    B, T, W = x.shape
    I_t = time.shape[-1]
    kernel = functools.partial(
        _nice_ts_fused_kernel,
        T=T, B=B, W=W, I_t=I_t,
        H=dims["H"], mid=dims["mid"], L=dims["L"], n_mid=dims["n_mid"])

    out = pl.pallas_call(
        kernel,
        out_shape=jax.ShapeDtypeStruct((B, 1), jnp.float32),
        in_specs=[VMEM_SPEC] * 6,
        out_specs=VMEM_SPEC,
    )(x, time, p["p_lstm"], p["p_c32"], p["p_emb"], p["p_cw"])
    return out[:, 0]


# ---------------------------------------------------------------------------
# Parameter init (PyTorch-like layout)
# ---------------------------------------------------------------------------
def init_params(key, len_input, emb_dim, mid_dim, hidden, n_coupling, len_input_rnn):
    W2 = len_input // 2
    H = emb_dim
    I = len_input_rnn
    keys = jax.random.split(key, 3 + n_coupling)

    def dense(k, shape, scale=0.1):
        return jax.random.normal(k, shape, dtype=jnp.float32) * scale

    lstm = {
        "w_ih": dense(keys[0], (I, 4 * H)),     # columns in PyTorch i,f,g,o order
        "w_hh": dense(keys[1], (H, 4 * H)),
        "b": dense(keys[2], (1, 4 * H)),        # b_ih + b_hh combined (sum the two
                                                # biases here when loading real
                                                # PyTorch LSTM weights)
    }
    coupling = []
    for i in range(n_coupling):
        ks = jax.random.split(keys[3 + i], 6)
        coupling.append({
            "w_in": dense(ks[0], (W2 + emb_dim, mid_dim)),
            "b_in": dense(ks[1], (1, mid_dim)),
            "w_mid": dense(ks[2], (hidden - 1, mid_dim, mid_dim)),
            "b_mid": dense(ks[3], (hidden - 1, 1, mid_dim)),
            "w_out": dense(ks[4], (mid_dim, W2)),
            "b_out": dense(ks[5], (1, W2)),
        })
    scale = jnp.zeros((1, len_input), dtype=jnp.float32)   # nn.Parameter(zeros)
    return {"lstm": lstm, "coupling": coupling, "scale": scale}


# ---------------------------------------------------------------------------
# One-time re-pack into the fused-kernel layout (outside the jitted forward)
# ---------------------------------------------------------------------------
def prepare_params(params, len_input, mask_config):
    W = len_input
    W2 = W // 2
    lstm = params["lstm"]
    H = lstm["w_hh"].shape[0]
    cps = params["coupling"]
    L = len(cps)
    mid = cps[0]["w_in"].shape[1]
    n_mid = cps[0]["w_mid"].shape[0]

    # LSTM pack (lane width 4H): [w_ih ; w_hh ; b].  i,f,g,o column order kept.
    p_lstm = jnp.concatenate([lstm["w_ih"], lstm["w_hh"], lstm["b"]], axis=0)

    # Coupling packs.  The on/off even/odd interleave is absorbed by expanding
    # w_in (zero rows at 'on' positions) and w_out/b_out (zero cols at 'off'
    # positions) so the kernel never de-interleaves lanes.
    w_in_exp, w_mid_flat, b_mid_flat = [], [], []
    w_out_exp, b_out_exp = [], []
    w_emb_cols, b_in_cols = [], []
    for l, cp in enumerate(cps):
        mc = (mask_config + l) % 2
        off_start = 1 if mc else 0      # off = odd original positions when mc==1
        on_start = 0 if mc else 1
        w_in_exp.append(jnp.zeros((W, mid), jnp.float32)
                        .at[off_start::2, :].set(cp["w_in"][:W2]))
        w_emb_cols.append(cp["w_in"][W2:])                  # (H, mid)
        b_in_cols.append(cp["b_in"])                        # (1, mid)
        w_mid_flat.append(cp["w_mid"].reshape(n_mid * mid, mid))
        b_mid_flat.append(cp["b_mid"].reshape(n_mid, mid))
        w_out_exp.append(jnp.zeros((mid, W), jnp.float32)
                         .at[:, on_start::2].set(cp["w_out"]))
        b_out_exp.append(jnp.zeros((1, W), jnp.float32)
                         .at[:, on_start::2].set(cp["b_out"]))

    p_c32 = jnp.concatenate(w_in_exp + w_mid_flat + b_mid_flat, axis=0)
    p_emb = jnp.concatenate(
        [jnp.concatenate(w_emb_cols, axis=1),
         jnp.concatenate(b_in_cols, axis=1)], axis=0)       # (H+1, L*mid)

    scale = params["scale"]
    exp_scale = jnp.exp(scale)                               # (1, W)
    log_det = jnp.sum(scale)                                 # scalar
    logdet_row = jnp.zeros((1, W), jnp.float32).at[0, 0].set(log_det)
    p_cw = jnp.concatenate(w_out_exp + b_out_exp + [exp_scale, logdet_row], axis=0)

    prepared = {"p_lstm": p_lstm, "p_c32": p_c32, "p_emb": p_emb, "p_cw": p_cw}
    dims = {"H": H, "mid": mid, "L": L, "n_mid": n_mid}
    return prepared, dims


# ---------------------------------------------------------------------------
# Pure-JAX reference (mirrors the PyTorch module) for a correctness check
# ---------------------------------------------------------------------------
def nice_ts_reference(x, time, params, mask_config):
    prec = jax.lax.Precision.HIGHEST
    B, T, len_input = x.shape
    W2 = len_input // 2
    lstm = params["lstm"]
    H = lstm["w_hh"].shape[0]
    x_cat = jnp.concatenate([x, time], axis=-1)
    h = jnp.zeros((B, H), jnp.float32)
    c = jnp.zeros((B, H), jnp.float32)
    for t in range(T):
        gates = (jnp.dot(x_cat[:, t, :], lstm["w_ih"], precision=prec)
                 + jnp.dot(h, lstm["w_hh"], precision=prec) + lstm["b"])
        i_g = jax.nn.sigmoid(gates[:, 0:H])
        f_g = jax.nn.sigmoid(gates[:, H:2 * H])
        g_g = jnp.tanh(gates[:, 2 * H:3 * H])
        o_g = jax.nn.sigmoid(gates[:, 3 * H:4 * H])
        c = f_g * c + i_g * g_g
        h = o_g * jnp.tanh(c)
    emb = h
    inp = x[:, -1, :]
    for idx, cp in enumerate(params["coupling"]):
        mc = (mask_config + idx) % 2
        x3 = inp.reshape(B, W2, 2)
        if mc:
            on, off = x3[:, :, 0], x3[:, :, 1]
        else:
            off, on = x3[:, :, 0], x3[:, :, 1]
        a = jax.nn.relu(jnp.dot(jnp.concatenate([off, emb], axis=-1),
                                cp["w_in"], precision=prec) + cp["b_in"])
        for j in range(cp["w_mid"].shape[0]):
            a = jax.nn.relu(jnp.dot(a, cp["w_mid"][j], precision=prec) + cp["b_mid"][j])
        shift = jnp.dot(a, cp["w_out"], precision=prec) + cp["b_out"]
        on = on + shift
        if mc:
            x3 = jnp.stack([on, off], axis=2)
        else:
            x3 = jnp.stack([off, on], axis=2)
        inp = x3.reshape(B, len_input)
    z = inp * jnp.exp(params["scale"])
    log_det = jnp.sum(params["scale"])
    log_pz = jnp.sum(-0.5 * z * z - 0.5 * jnp.log(2.0 * jnp.pi), axis=1)
    return log_pz + log_det


if __name__ == "__main__":
    # Small shapes consistent with the module's forward.
    B, T = 2, 8
    len_input = 16        # must be even
    t_feat = 2
    len_input_rnn = len_input + t_feat   # LSTM input_size = len_input + time feats
    rnn_embedding_dim = 8
    mid_dim = 32
    hidden = 3            # 1 in_block + (hidden-1)=2 mid blocks + out_block
    n_coupling = 4
    mask_config = 1

    key = jax.random.PRNGKey(0)
    kx, kt, kp = jax.random.split(key, 3)
    x = jax.random.normal(kx, (B, T, len_input), dtype=jnp.float32)
    time = jax.random.normal(kt, (B, T, t_feat), dtype=jnp.float32)

    params = init_params(kp, len_input, rnn_embedding_dim, mid_dim, hidden,
                         n_coupling, len_input_rnn)
    prepared, dims = prepare_params(params, len_input, mask_config)  # one-time

    # TODO(synk): prior is assumed to be a standard Normal (the PyTorch module
    # accepts an arbitrary `prior` distribution object).
    fwd = jax.jit(functools.partial(nice_ts_forward, dims=dims))
    log_ll = fwd(x, time, prepared)
    jax.block_until_ready(log_ll)
    assert log_ll.shape == (B,)

    ref = nice_ts_reference(x, time, params, mask_config)
    assert bool(jnp.allclose(log_ll, ref, rtol=2e-3, atol=2e-3)), (log_ll, ref)
    print("KERNEL_OK")
</pallas_src>

<mosaic_0001>
module attributes {stable_mosaic.version = 11 : i64} {
  func.func @_nice_ts_fused_kernel(%arg0: memref<2x8x16xf32, #tpu.memory_space<vmem>>, %arg1: memref<2x8x2xf32, #tpu.memory_space<vmem>>, %arg2: memref<27x32xf32, #tpu.memory_space<vmem>>, %arg3: memref<328x32xf32, #tpu.memory_space<vmem>>, %arg4: memref<9x128xf32, #tpu.memory_space<vmem>>, %arg5: memref<134x16xf32, #tpu.memory_space<vmem>>, %arg6: memref<2x1xf32, #tpu.memory_space<vmem>>) attributes {dimension_semantics = [], scalar_prefetch = 0 : i64, scratch_operands = 0 : i64, tpu.core_type = #tpu.core_type<tc>} {
    %c0 = arith.constant 0 : index
    %c0_0 = arith.constant 0 : index
    %c0_1 = arith.constant 0 : index
    %0 = vector.load %arg0[%c0, %c0_0, %c0_1] : memref<2x8x16xf32, #tpu.memory_space<vmem>>, vector<2x8x16xf32>
    %1 = vector.shape_cast %0 : vector<2x8x16xf32> to vector<16x16xf32>
    %c0_2 = arith.constant 0 : index
    %c0_3 = arith.constant 0 : index
    %c0_4 = arith.constant 0 : index
    %2 = vector.load %arg1[%c0_2, %c0_3, %c0_4] : memref<2x8x2xf32, #tpu.memory_space<vmem>>, vector<2x8x2xf32>
    %3 = vector.shape_cast %2 : vector<2x8x2xf32> to vector<16x2xf32>
    %c0_5 = arith.constant 0 : index
    %c0_6 = arith.constant 0 : index
    %4 = vector.load %arg2[%c0_5, %c0_6] : memref<27x32xf32, #tpu.memory_space<vmem>>, vector<16x32xf32>
    %cst = arith.constant dense<0.000000e+00> : vector<16x32xf32>
    %5 = tpu.matmul %1, %4, %cst {dimension_numbers = #tpu.dot_dimension_numbers<[1], [0], [0], [1], [0, 0, 1, 1], [], []>} : vector<16x16xf32>, vector<16x32xf32>, vector<16x32xf32> -> vector<16x32xf32>
    %c16 = arith.constant 16 : index
    %c0_7 = arith.constant 0 : index
    %6 = vector.load %arg2[%c16, %c0_7] : memref<27x32xf32, #tpu.memory_space<vmem>>, vector<2x32xf32>
    %cst_8 = arith.constant dense<0.000000e+00> : vector<16x32xf32>
    %7 = tpu.matmul %3, %6, %cst_8 {dimension_numbers = #tpu.dot_dimension_numbers<[1], [0], [0], [1], [0, 0, 1, 1], [], []>} : vector<16x2xf32>, vector<2x32xf32>, vector<16x32xf32> -> vector<16x32xf32>
    %8 = arith.addf %5, %7 : vector<16x32xf32>
    %c26 = arith.constant 26 : index
    %c0_9 = arith.constant 0 : index
    %9 = vector.load %arg2[%c26, %c0_9] : memref<27x32xf32, #tpu.memory_space<vmem>>, vector<1x32xf32>
    %10 = vector.broadcast %9 : vector<1x32xf32> to vector<16x32xf32>
    %11 = arith.addf %8, %10 : vector<16x32xf32>
    %12 = vector.shape_cast %11 : vector<16x32xf32> to vector<2x8x32xf32>
    %c18 = arith.constant 18 : index
    %c0_10 = arith.constant 0 : index
    %13 = vector.load %arg2[%c18, %c0_10] : memref<27x32xf32, #tpu.memory_space<vmem>>, vector<8x32xf32>
    %cst_11 = arith.constant 0.000000e+00 : f32
    %14 = vector.broadcast %cst_11 : f32 to vector<2x8xf32>
    %cst_12 = arith.constant 0.000000e+00 : f32
    %15 = vector.broadcast %cst_12 : f32 to vector<2x8xf32>
    %16 = vector.extract_strided_slice %12 {offsets = [0, 0, 0], sizes = [2, 1, 32], strides = [1, 1, 1]} : vector<2x8x32xf32> to vector<2x1x32xf32>
    %17 = vector.shape_cast %16 : vector<2x1x32xf32> to vector<2x32xf32>
    %cst_13 = arith.constant dense<0.000000e+00> : vector<2x32xf32>
    %18 = tpu.matmul %14, %13, %cst_13 {dimension_numbers = #tpu.dot_dimension_numbers<[1], [0], [0], [1], [0, 0, 1, 1], [], []>} : vector<2x8xf32>, vector<8x32xf32>, vector<2x32xf32> -> vector<2x32xf32>
    %19 = arith.addf %17, %18 : vector<2x32xf32>
    %20 = arith.negf %19 : vector<2x32xf32>
    %21 = math.exp %20 : vector<2x32xf32>
    %cst_14 = arith.constant 1.000000e+00 : f32
    %22 = vector.broadcast %cst_14 : f32 to vector<2x32xf32>
    %23 = arith.addf %22, %21 : vector<2x32xf32>
    %24 = arith.divf %22, %23 : vector<2x32xf32>
    %25 = math.tanh %19 : vector<2x32xf32>
    %26 = vector.extract_strided_slice %24 {offsets = [0, 8], sizes = [2, 8], strides = [1, 1]} : vector<2x32xf32> to vector<2x8xf32>
    %27 = arith.mulf %26, %15 : vector<2x8xf32>
    %28 = vector.extract_strided_slice %24 {offsets = [0, 0], sizes = [2, 8], strides = [1, 1]} : vector<2x32xf32> to vector<2x8xf32>
    %29 = vector.extract_strided_slice %25 {offsets = [0, 16], sizes = [2, 8], strides = [1, 1]} : vector<2x32xf32> to vector<2x8xf32>
    %30 = arith.mulf %28, %29 : vector<2x8xf32>
    %31 = arith.addf %27, %30 : vector<2x8xf32>
    %32 = vector.extract_strided_slice %24 {offsets = [0, 24], sizes = [2, 8], strides = [1, 1]} : vector<2x32xf32> to vector<2x8xf32>
    %33 = math.tanh %31 : vector<2x8xf32>
    %34 = arith.mulf %32, %33 : vector<2x8xf32>
    %35 = vector.extract_strided_slice %12 {offsets = [0, 1, 0], sizes = [2, 1, 32], strides = [1, 1, 1]} : vector<2x8x32xf32> to vector<2x1x32xf32>
    %36 = vector.shape_cast %35 : vector<2x1x32xf32> to vector<2x32xf32>
    %cst_15 = arith.constant dense<0.000000e+00> : vector<2x32xf32>
    %37 = tpu.matmul %34, %13, %cst_15 {dimension_numbers = #tpu.dot_dimension_numbers<[1], [0], [0], [1], [0, 0, 1, 1], [], []>} : vector<2x8xf32>, vector<8x32xf32>, vector<2x32xf32> -> vector<2x32xf32>
    %38 = arith.addf %36, %37 : vector<2x32xf32>
    %39 = arith.negf %38 : vector<2x32xf32>
    %40 = math.exp %39 : vector<2x32xf32>
    %cst_16 = arith.constant 1.000000e+00 : f32
    %41 = vector.broadcast %cst_16 : f32 to vector<2x32xf32>
    %42 = arith.addf %41, %40 : vector<2x32xf32>
    %43 = arith.divf %41, %42 : vector<2x32xf32>
    %44 = math.tanh %38 : vector<2x32xf32>
    %45 = vector.extract_strided_slice %43 {offsets = [0, 8], sizes = [2, 8], strides = [1, 1]} : vector<2x32xf32> to vector<2x8xf32>
    %46 = arith.mulf %45, %31 : vector<2x8xf32>
    %47 = vector.extract_strided_slice %43 {offsets = [0, 0], sizes = [2, 8], strides = [1, 1]} : vector<2x32xf32> to vector<2x8xf32>
    %48 = vector.extract_strided_slice %44 {offsets = [0, 16], sizes = [2, 8], strides = [1, 1]} : vector<2x32xf32> to vector<2x8xf32>
    %49 = arith.mulf %47, %48 : vector<2x8xf32>
    %50 = arith.addf %46, %49 : vector<2x8xf32>
    %51 = vector.extract_strided_slice %43 {offsets = [0, 24], sizes = [2, 8], strides = [1, 1]} : vector<2x32xf32> to vector<2x8xf32>
    %52 = math.tanh %50 : vector<2x8xf32>
    %53 = arith.mulf %51, %52 : vector<2x8xf32>
    %54 = vector.extract_strided_slice %12 {offsets = [0, 2, 0], sizes = [2, 1, 32], strides = [1, 1, 1]} : vector<2x8x32xf32> to vector<2x1x32xf32>
    %55 = vector.shape_cast %54 : vector<2x1x32xf32> to vector<2x32xf32>
    %cst_17 = arith.constant dense<0.000000e+00> : vector<2x32xf32>
    %56 = tpu.matmul %53, %13, %cst_17 {dimension_numbers = #tpu.dot_dimension_numbers<[1], [0], [0], [1], [0, 0, 1, 1], [], []>} : vector<2x8xf32>, vector<8x32xf32>, vector<2x32xf32> -> vector<2x32xf32>
    %57 = arith.addf %55, %56 : vector<2x32xf32>
    %58 = arith.negf %57 : vector<2x32xf32>
    %59 = math.exp %58 : vector<2x32xf32>
    %cst_18 = arith.constant 1.000000e+00 : f32
    %60 = vector.broadcast %cst_18 : f32 to vector<2x32xf32>
    %61 = arith.addf %60, %59 : vector<2x32xf32>
    %62 = arith.divf %60, %61 : vector<2x32xf32>
    %63 = math.tanh %57 : vector<2x32xf32>
    %64 = vector.extract_strided_slice %62 {offsets = [0, 8], sizes = [2, 8], strides = [1, 1]} : vector<2x32xf32> to vector<2x8xf32>
    %65 = arith.mulf %64, %50 : vector<2x8xf32>
    %66 = vector.extract_strided_slice %62 {offsets = [0, 0], sizes = [2, 8], strides = [1, 1]} : vector<2x32xf32> to vector<2x8xf32>
    %67 = vector.extract_strided_slice %63 {offsets = [0, 16], sizes = [2, 8], strides = [1, 1]} : vector<2x32xf32> to vector<2x8xf32>
    %68 = arith.mulf %66, %67 : vector<2x8xf32>
    %69 = arith.addf %65, %68 : vector<2x8xf32>
    %70 = vector.extract_strided_slice %62 {offsets = [0, 24], sizes = [2, 8], strides = [1, 1]} : vector<2x32xf32> to vector<2x8xf32>
    %71 = math.tanh %69 : vector<2x8xf32>
    %72 = arith.mulf %70, %71 : vector<2x8xf32>
    %73 = vector.extract_strided_slice %12 {offsets = [0, 3, 0], sizes = [2, 1, 32], strides = [1, 1, 1]} : vector<2x8x32xf32> to vector<2x1x32xf32>
    %74 = vector.shape_cast %73 : vector<2x1x32xf32> to vector<2x32xf32>
    %cst_19 = arith.constant dense<0.000000e+00> : vector<2x32xf32>
    %75 = tpu.matmul %72, %13, %cst_19 {dimension_numbers = #tpu.dot_dimension_numbers<[1], [0], [0], [1], [0, 0, 1, 1], [], []>} : vector<2x8xf32>, vector<8x32xf32>, vector<2x32xf32> -> vector<2x32xf32>
    %76 = arith.addf %74, %75 : vector<2x32xf32>
    %77 = arith.negf %76 : vector<2x32xf32>
    %78 = math.exp %77 : vector<2x32xf32>
    %cst_20 = arith.constant 1.000000e+00 : f32
    %79 = vector.broadcast %cst_20 : f32 to vector<2x32xf32>
    %80 = arith.addf %79, %78 : vector<2x32xf32>
    %81 = arith.divf %79, %80 : vector<2x32xf32>
    %82 = math.tanh %76 : vector<2x32xf32>
    %83 = vector.extract_strided_slice %81 {offsets = [0, 8], sizes = [2, 8], strides = [1, 1]} : vector<2x32xf32> to vector<2x8xf32>
    %84 = arith.mulf %83, %69 : vector<2x8xf32>
    %85 = vector.extract_strided_slice %81 {offsets = [0, 0], sizes = [2, 8], strides = [1, 1]} : vector<2x32xf32> to vector<2x8xf32>
    %86 = vector.extract_strided_slice %82 {offsets = [0, 16], sizes = [2, 8], strides = [1, 1]} : vector<2x32xf32> to vector<2x8xf32>
    %87 = arith.mulf %85, %86 : vector<2x8xf32>
    %88 = arith.addf %84, %87 : vector<2x8xf32>
    %89 = vector.extract_strided_slice %81 {offsets = [0, 24], sizes = [2, 8], strides = [1, 1]} : vector<2x32xf32> to vector<2x8xf32>
    %90 = math.tanh %88 : vector<2x8xf32>
    %91 = arith.mulf %89, %90 : vector<2x8xf32>
    %92 = vector.extract_strided_slice %12 {offsets = [0, 4, 0], sizes = [2, 1, 32], strides = [1, 1, 1]} : vector<2x8x32xf32> to vector<2x1x32xf32>
    %93 = vector.shape_cast %92 : vector<2x1x32xf32> to vector<2x32xf32>
    %cst_21 = arith.constant dense<0.000000e+00> : vector<2x32xf32>
    %94 = tpu.matmul %91, %13, %cst_21 {dimension_numbers = #tpu.dot_dimension_numbers<[1], [0], [0], [1], [0, 0, 1, 1], [], []>} : vector<2x8xf32>, vector<8x32xf32>, vector<2x32xf32> -> vector<2x32xf32>
    %95 = arith.addf %93, %94 : vector<2x32xf32>
    %96 = arith.negf %95 : vector<2x32xf32>
    %97 = math.exp %96 : vector<2x32xf32>
    %cst_22 = arith.constant 1.000000e+00 : f32
    %98 = vector.broadcast %cst_22 : f32 to vector<2x32xf32>
    %99 = arith.addf %98, %97 : vector<2x32xf32>
    %100 = arith.divf %98, %99 : vector<2x32xf32>
    %101 = math.tanh %95 : vector<2x32xf32>
    %102 = vector.extract_strided_slice %100 {offsets = [0, 8], sizes = [2, 8], strides = [1, 1]} : vector<2x32xf32> to vector<2x8xf32>
    %103 = arith.mulf %102, %88 : vector<2x8xf32>
    %104 = vector.extract_strided_slice %100 {offsets = [0, 0], sizes = [2, 8], strides = [1, 1]} : vector<2x32xf32> to vector<2x8xf32>
    %105 = vector.extract_strided_slice %101 {offsets = [0, 16], sizes = [2, 8], strides = [1, 1]} : vector<2x32xf32> to vector<2x8xf32>
    %106 = arith.mulf %104, %105 : vector<2x8xf32>
    %107 = arith.addf %103, %106 : vector<2x8xf32>
    %108 = vector.extract_strided_slice %100 {offsets = [0, 24], sizes = [2, 8], strides = [1, 1]} : vector<2x32xf32> to vector<2x8xf32>
    %109 = math.tanh %107 : vector<2x8xf32>
    %110 = arith.mulf %108, %109 : vector<2x8xf32>
    %111 = vector.extract_strided_slice %12 {offsets = [0, 5, 0], sizes = [2, 1, 32], strides = [1, 1, 1]} : vector<2x8x32xf32> to vector<2x1x32xf32>
    %112 = vector.shape_cast %111 : vector<2x1x32xf32> to vector<2x32xf32>
    %cst_23 = arith.constant dense<0.000000e+00> : vector<2x32xf32>
    %113 = tpu.matmul %110, %13, %cst_23 {dimension_numbers = #tpu.dot_dimension_numbers<[1], [0], [0], [1], [0, 0, 1, 1], [], []>} : vector<2x8xf32>, vector<8x32xf32>, vector<2x32xf32> -> vector<2x32xf32>
    %114 = arith.addf %112, %113 : vector<2x32xf32>
    %115 = arith.negf %114 : vector<2x32xf32>
    %116 = math.exp %115 : vector<2x32xf32>
    %cst_24 = arith.constant 1.000000e+00 : f32
    %117 = vector.broadcast %cst_24 : f32 to vector<2x32xf32>
    %118 = arith.addf %117, %116 : vector<2x32xf32>
    %119 = arith.divf %117, %118 : vector<2x32xf32>
    %120 = math.tanh %114 : vector<2x32xf32>
    %121 = vector.extract_strided_slice %119 {offsets = [0, 8], sizes = [2, 8], strides = [1, 1]} : vector<2x32xf32> to vector<2x8xf32>
    %122 = arith.mulf %121, %107 : vector<2x8xf32>
    %123 = vector.extract_strided_slice %119 {offsets = [0, 0], sizes = [2, 8], strides = [1, 1]} : vector<2x32xf32> to vector<2x8xf32>
    %124 = vector.extract_strided_slice %120 {offsets = [0, 16], sizes = [2, 8], strides = [1, 1]} : vector<2x32xf32> to vector<2x8xf32>
    %125 = arith.mulf %123, %124 : vector<2x8xf32>
    %126 = arith.addf %122, %125 : vector<2x8xf32>
    %127 = vector.extract_strided_slice %119 {offsets = [0, 24], sizes = [2, 8], strides = [1, 1]} : vector<2x32xf32> to vector<2x8xf32>
    %128 = math.tanh %126 : vector<2x8xf32>
    %129 = arith.mulf %127, %128 : vector<2x8xf32>
    %130 = vector.extract_strided_slice %12 {offsets = [0, 6, 0], sizes = [2, 1, 32], strides = [1, 1, 1]} : vector<2x8x32xf32> to vector<2x1x32xf32>
    %131 = vector.shape_cast %130 : vector<2x1x32xf32> to vector<2x32xf32>
    %cst_25 = arith.constant dense<0.000000e+00> : vector<2x32xf32>
    %132 = tpu.matmul %129, %13, %cst_25 {dimension_numbers = #tpu.dot_dimension_numbers<[1], [0], [0], [1], [0, 0, 1, 1], [], []>} : vector<2x8xf32>, vector<8x32xf32>, vector<2x32xf32> -> vector<2x32xf32>
    %133 = arith.addf %131, %132 : vector<2x32xf32>
    %134 = arith.negf %133 : vector<2x32xf32>
    %135 = math.exp %134 : vector<2x32xf32>
    %cst_26 = arith.constant 1.000000e+00 : f32
    %136 = vector.broadcast %cst_26 : f32 to vector<2x32xf32>
    %137 = arith.addf %136, %135 : vector<2x32xf32>
    %138 = arith.divf %136, %137 : vector<2x32xf32>
    %139 = math.tanh %133 : vector<2x32xf32>
    %140 = vector.extract_strided_slice %138 {offsets = [0, 8], sizes = [2, 8], strides = [1, 1]} : vector<2x32xf32> to vector<2x8xf32>
    %141 = arith.mulf %140, %126 : vector<2x8xf32>
    %142 = vector.extract_strided_slice %138 {offsets = [0, 0], sizes = [2, 8], strides = [1, 1]} : vector<2x32xf32> to vector<2x8xf32>
    %143 = vector.extract_strided_slice %139 {offsets = [0, 16], sizes = [2, 8], strides = [1, 1]} : vector<2x32xf32> to vector<2x8xf32>
    %144 = arith.mulf %142, %143 : vector<2x8xf32>
    %145 = arith.addf %141, %144 : vector<2x8xf32>
    %146 = vector.extract_strided_slice %138 {offsets = [0, 24], sizes = [2, 8], strides = [1, 1]} : vector<2x32xf32> to vector<2x8xf32>
    %147 = math.tanh %145 : vector<2x8xf32>
    %148 = arith.mulf %146, %147 : vector<2x8xf32>
    %149 = vector.extract_strided_slice %12 {offsets = [0, 7, 0], sizes = [2, 1, 32], strides = [1, 1, 1]} : vector<2x8x32xf32> to vector<2x1x32xf32>
    %150 = vector.shape_cast %149 : vector<2x1x32xf32> to vector<2x32xf32>
    %cst_27 = arith.constant dense<0.000000e+00> : vector<2x32xf32>
    %151 = tpu.matmul %148, %13, %cst_27 {dimension_numbers = #tpu.dot_dimension_numbers<[1], [0], [0], [1], [0, 0, 1, 1], [], []>} : vector<2x8xf32>, vector<8x32xf32>, vector<2x32xf32> -> vector<2x32xf32>
    %152 = arith.addf %150, %151 : vector<2x32xf32>
    %153 = arith.negf %152 : vector<2x32xf32>
    %154 = math.exp %153 : vector<2x32xf32>
    %cst_28 = arith.constant 1.000000e+00 : f32
    %155 = vector.broadcast %cst_28 : f32 to vector<2x32xf32>
    %156 = arith.addf %155, %154 : vector<2x32xf32>
    %157 = arith.divf %155, %156 : vector<2x32xf32>
    %158 = math.tanh %152 : vector<2x32xf32>
    %159 = vector.extract_strided_slice %157 {offsets = [0, 8], sizes = [2, 8], strides = [1, 1]} : vector<2x32xf32> to vector<2x8xf32>
    %160 = arith.mulf %159, %145 : vector<2x8xf32>
    %161 = vector.extract_strided_slice %157 {offsets = [0, 0], sizes = [2, 8], strides = [1, 1]} : vector<2x32xf32> to vector<2x8xf32>
    %162 = vector.extract_strided_slice %158 {offsets = [0, 16], sizes = [2, 8], strides = [1, 1]} : vector<2x32xf32> to vector<2x8xf32>
    %163 = arith.mulf %161, %162 : vector<2x8xf32>
    %164 = arith.addf %160, %163 : vector<2x8xf32>
    %165 = vector.extract_strided_slice %157 {offsets = [0, 24], sizes = [2, 8], strides = [1, 1]} : vector<2x32xf32> to vector<2x8xf32>
    %166 = math.tanh %164 : vector<2x8xf32>
    %167 = arith.mulf %165, %166 : vector<2x8xf32>
    %c0_29 = arith.constant 0 : index
    %c0_30 = arith.constant 0 : index
    %168 = vector.load %arg4[%c0_29, %c0_30] : memref<9x128xf32, #tpu.memory_space<vmem>>, vector<8x128xf32>
    %cst_31 = arith.constant dense<0.000000e+00> : vector<2x128xf32>
    %169 = tpu.matmul %167, %168, %cst_31 {dimension_numbers = #tpu.dot_dimension_numbers<[1], [0], [0], [1], [0, 0, 1, 1], [], []>} : vector<2x8xf32>, vector<8x128xf32>, vector<2x128xf32> -> vector<2x128xf32>
    %c8 = arith.constant 8 : index
    %c0_32 = arith.constant 0 : index
    %170 = vector.load %arg4[%c8, %c0_32] : memref<9x128xf32, #tpu.memory_space<vmem>>, vector<1x128xf32>
    %171 = vector.broadcast %170 : vector<1x128xf32> to vector<2x128xf32>
    %172 = arith.addf %169, %171 : vector<2x128xf32>
    %173 = vector.extract_strided_slice %0 {offsets = [0, 7, 0], sizes = [2, 1, 16], strides = [1, 1, 1]} : vector<2x8x16xf32> to vector<2x1x16xf32>
    %174 = vector.shape_cast %173 : vector<2x1x16xf32> to vector<2x16xf32>
    %c0_33 = arith.constant 0 : index
    %c0_34 = arith.constant 0 : index
    %175 = vector.load %arg3[%c0_33, %c0_34] : memref<328x32xf32, #tpu.memory_space<vmem>>, vector<16x32xf32>
    %cst_35 = arith.constant dense<0.000000e+00> : vector<2x32xf32>
    %176 = tpu.matmul %174, %175, %cst_35 {dimension_numbers = #tpu.dot_dimension_numbers<[1], [0], [0], [1], [0, 0, 1, 1], [], []>} : vector<2x16xf32>, vector<16x32xf32>, vector<2x32xf32> -> vector<2x32xf32>
    %177 = vector.extract_strided_slice %172 {offsets = [0, 0], sizes = [2, 32], strides = [1, 1]} : vector<2x128xf32> to vector<2x32xf32>
    %178 = arith.addf %176, %177 : vector<2x32xf32>
    %cst_36 = arith.constant 0.000000e+00 : f32
    %179 = vector.broadcast %cst_36 : f32 to vector<2x32xf32>
    %180 = arith.maximumf %178, %179 : vector<2x32xf32>
    %c64 = arith.constant 64 : index
    %c0_37 = arith.constant 0 : index
    %181 = vector.load %arg3[%c64, %c0_37] : memref<328x32xf32, #tpu.memory_space<vmem>>, vector<32x32xf32>
    %cst_38 = arith.constant dense<0.000000e+00> : vector<2x32xf32>
    %182 = tpu.matmul %180, %181, %cst_38 {dimension_numbers = #tpu.dot_dimension_numbers<[1], [0], [0], [1], [0, 0, 1, 1], [], []>} : vector<2x32xf32>, vector<32x32xf32>, vector<2x32xf32> -> vector<2x32xf32>
    %c320 = arith.constant 320 : index
    %c0_39 = arith.constant 0 : index
    %183 = vector.load %arg3[%c320, %c0_39] : memref<328x32xf32, #tpu.memory_space<vmem>>, vector<1x32xf32>
    %184 = vector.broadcast %183 : vector<1x32xf32> to vector<2x32xf32>
    %185 = arith.addf %182, %184 : vector<2x32xf32>
    %cst_40 = arith.constant 0.000000e+00 : f32
    %186 = vector.broadcast %cst_40 : f32 to vector<2x32xf32>
    %187 = arith.maximumf %185, %186 : vector<2x32xf32>
    %c96 = arith.constant 96 : index
    %c0_41 = arith.constant 0 : index
    %188 = vector.load %arg3[%c96, %c0_41] : memref<328x32xf32, #tpu.memory_space<vmem>>, vector<32x32xf32>
    %cst_42 = arith.constant dense<0.000000e+00> : vector<2x32xf32>
    %189 = tpu.matmul %187, %188, %cst_42 {dimension_numbers = #tpu.dot_dimension_numbers<[1], [0], [0], [1], [0, 0, 1, 1], [], []>} : vector<2x32xf32>, vector<32x32xf32>, vector<2x32xf32> -> vector<2x32xf32>
    %c321 = arith.constant 321 : index
    %c0_43 = arith.constant 0 : index
    %190 = vector.load %arg3[%c321, %c0_43] : memref<328x32xf32, #tpu.memory_space<vmem>>, vector<1x32xf32>
    %191 = vector.broadcast %190 : vector<1x32xf32> to vector<2x32xf32>
    %192 = arith.addf %189, %191 : vector<2x32xf32>
    %cst_44 = arith.constant 0.000000e+00 : f32
    %193 = vector.broadcast %cst_44 : f32 to vector<2x32xf32>
    %194 = arith.maximumf %192, %193 : vector<2x32xf32>
    %c0_45 = arith.constant 0 : index
    %c0_46 = arith.constant 0 : index
    %195 = vector.load %arg5[%c0_45, %c0_46] : memref<134x16xf32, #tpu.memory_space<vmem>>, vector<32x16xf32>
    %cst_47 = arith.constant dense<0.000000e+00> : vector<2x16xf32>
    %196 = tpu.matmul %194, %195, %cst_47 {dimension_numbers = #tpu.dot_dimension_numbers<[1], [0], [0], [1], [0, 0, 1, 1], [], []>} : vector<2x32xf32>, vector<32x16xf32>, vector<2x16xf32> -> vector<2x16xf32>
    %c128 = arith.constant 128 : index
    %c0_48 = arith.constant 0 : index
    %197 = vector.load %arg5[%c128, %c0_48] : memref<134x16xf32, #tpu.memory_space<vmem>>, vector<1x16xf32>
    %198 = vector.broadcast %197 : vector<1x16xf32> to vector<2x16xf32>
    %199 = arith.addf %196, %198 : vector<2x16xf32>
    %200 = arith.addf %174, %199 : vector<2x16xf32>
    %c16_49 = arith.constant 16 : index
    %c0_50 = arith.constant 0 : index
    %201 = vector.load %arg3[%c16_49, %c0_50] : memref<328x32xf32, #tpu.memory_space<vmem>>, vector<16x32xf32>
    %cst_51 = arith.constant dense<0.000000e+00> : vector<2x32xf32>
    %202 = tpu.matmul %200, %201, %cst_51 {dimension_numbers = #tpu.dot_dimension_numbers<[1], [0], [0], [1], [0, 0, 1, 1], [], []>} : vector<2x16xf32>, vector<16x32xf32>, vector<2x32xf32> -> vector<2x32xf32>
    %203 = vector.extract_strided_slice %172 {offsets = [0, 32], sizes = [2, 32], strides = [1, 1]} : vector<2x128xf32> to vector<2x32xf32>
    %204 = arith.addf %202, %203 : vector<2x32xf32>
    %cst_52 = arith.constant 0.000000e+00 : f32
    %205 = vector.broadcast %cst_52 : f32 to vector<2x32xf32>
    %206 = arith.maximumf %204, %205 : vector<2x32xf32>
    %c128_53 = arith.constant 128 : index
    %c0_54 = arith.constant 0 : index
    %207 = vector.load %arg3[%c128_53, %c0_54] : memref<328x32xf32, #tpu.memory_space<vmem>>, vector<32x32xf32>
    %cst_55 = arith.constant dense<0.000000e+00> : vector<2x32xf32>
    %208 = tpu.matmul %206, %207, %cst_55 {dimension_numbers = #tpu.dot_dimension_numbers<[1], [0], [0], [1], [0, 0, 1, 1], [], []>} : vector<2x32xf32>, vector<32x32xf32>, vector<2x32xf32> -> vector<2x32xf32>
    %c322 = arith.constant 322 : index
    %c0_56 = arith.constant 0 : index
    %209 = vector.load %arg3[%c322, %c0_56] : memref<328x32xf32, #tpu.memory_space<vmem>>, vector<1x32xf32>
    %210 = vector.broadcast %209 : vector<1x32xf32> to vector<2x32xf32>
    %211 = arith.addf %208, %210 : vector<2x32xf32>
    %cst_57 = arith.constant 0.000000e+00 : f32
    %212 = vector.broadcast %cst_57 : f32 to vector<2x32xf32>
    %213 = arith.maximumf %211, %212 : vector<2x32xf32>
    %c160 = arith.constant 160 : index
    %c0_58 = arith.constant 0 : index
    %214 = vector.load %arg3[%c160, %c0_58] : memref<328x32xf32, #tpu.memory_space<vmem>>, vector<32x32xf32>
    %cst_59 = arith.constant dense<0.000000e+00> : vector<2x32xf32>
    %215 = tpu.matmul %213, %214, %cst_59 {dimension_numbers = #tpu.dot_dimension_numbers<[1], [0], [0], [1], [0, 0, 1, 1], [], []>} : vector<2x32xf32>, vector<32x32xf32>, vector<2x32xf32> -> vector<2x32xf32>
    %c323 = arith.constant 323 : index
    %c0_60 = arith.constant 0 : index
    %216 = vector.load %arg3[%c323, %c0_60] : memref<328x32xf32, #tpu.memory_space<vmem>>, vector<1x32xf32>
    %217 = vector.broadcast %216 : vector<1x32xf32> to vector<2x32xf32>
    %218 = arith.addf %215, %217 : vector<2x32xf32>
    %cst_61 = arith.constant 0.000000e+00 : f32
    %219 = vector.broadcast %cst_61 : f32 to vector<2x32xf32>
    %220 = arith.maximumf %218, %219 : vector<2x32xf32>
    %c32 = arith.constant 32 : index
    %c0_62 = arith.constant 0 : index
    %221 = vector.load %arg5[%c32, %c0_62] : memref<134x16xf32, #tpu.memory_space<vmem>>, vector<32x16xf32>
    %cst_63 = arith.constant dense<0.000000e+00> : vector<2x16xf32>
    %222 = tpu.matmul %220, %221, %cst_63 {dimension_numbers = #tpu.dot_dimension_numbers<[1], [0], [0], [1], [0, 0, 1, 1], [], []>} : vector<2x32xf32>, vector<32x16xf32>, vector<2x16xf32> -> vector<2x16xf32>
    %c129 = arith.constant 129 : index
    %c0_64 = arith.constant 0 : index
    %223 = vector.load %arg5[%c129, %c0_64] : memref<134x16xf32, #tpu.memory_space<vmem>>, vector<1x16xf32>
    %224 = vector.broadcast %223 : vector<1x16xf32> to vector<2x16xf32>
    %225 = arith.addf %222, %224 : vector<2x16xf32>
    %226 = arith.addf %200, %225 : vector<2x16xf32>
    %c32_65 = arith.constant 32 : index
    %c0_66 = arith.constant 0 : index
    %227 = vector.load %arg3[%c32_65, %c0_66] : memref<328x32xf32, #tpu.memory_space<vmem>>, vector<16x32xf32>
    %cst_67 = arith.constant dense<0.000000e+00> : vector<2x32xf32>
    %228 = tpu.matmul %226, %227, %cst_67 {dimension_numbers = #tpu.dot_dimension_numbers<[1], [0], [0], [1], [0, 0, 1, 1], [], []>} : vector<2x16xf32>, vector<16x32xf32>, vector<2x32xf32> -> vector<2x32xf32>
    %229 = vector.extract_strided_slice %172 {offsets = [0, 64], sizes = [2, 32], strides = [1, 1]} : vector<2x128xf32> to vector<2x32xf32>
    %230 = arith.addf %228, %229 : vector<2x32xf32>
    %cst_68 = arith.constant 0.000000e+00 : f32
    %231 = vector.broadcast %cst_68 : f32 to vector<2x32xf32>
    %232 = arith.maximumf %230, %231 : vector<2x32xf32>
    %c192 = arith.constant 192 : index
    %c0_69 = arith.constant 0 : index
    %233 = vector.load %arg3[%c192, %c0_69] : memref<328x32xf32, #tpu.memory_space<vmem>>, vector<32x32xf32>
    %cst_70 = arith.constant dense<0.000000e+00> : vector<2x32xf32>
    %234 = tpu.matmul %232, %233, %cst_70 {dimension_numbers = #tpu.dot_dimension_numbers<[1], [0], [0], [1], [0, 0, 1, 1], [], []>} : vector<2x32xf32>, vector<32x32xf32>, vector<2x32xf32> -> vector<2x32xf32>
    %c324 = arith.constant 324 : index
    %c0_71 = arith.constant 0 : index
    %235 = vector.load %arg3[%c324, %c0_71] : memref<328x32xf32, #tpu.memory_space<vmem>>, vector<1x32xf32>
    %236 = vector.broadcast %235 : vector<1x32xf32> to vector<2x32xf32>
    %237 = arith.addf %234, %236 : vector<2x32xf32>
    %cst_72 = arith.constant 0.000000e+00 : f32
    %238 = vector.broadcast %cst_72 : f32 to vector<2x32xf32>
    %239 = arith.maximumf %237, %238 : vector<2x32xf32>
    %c224 = arith.constant 224 : index
    %c0_73 = arith.constant 0 : index
    %240 = vector.load %arg3[%c224, %c0_73] : memref<328x32xf32, #tpu.memory_space<vmem>>, vector<32x32xf32>
    %cst_74 = arith.constant dense<0.000000e+00> : vector<2x32xf32>
    %241 = tpu.matmul %239, %240, %cst_74 {dimension_numbers = #tpu.dot_dimension_numbers<[1], [0], [0], [1], [0, 0, 1, 1], [], []>} : vector<2x32xf32>, vector<32x32xf32>, vector<2x32xf32> -> vector<2x32xf32>
    %c325 = arith.constant 325 : index
    %c0_75 = arith.constant 0 : index
    %242 = vector.load %arg3[%c325, %c0_75] : memref<328x32xf32, #tpu.memory_space<vmem>>, vector<1x32xf32>
    %243 = vector.broadcast %242 : vector<1x32xf32> to vector<2x32xf32>
    %244 = arith.addf %241, %243 : vector<2x32xf32>
    %cst_76 = arith.constant 0.000000e+00 : f32
    %245 = vector.broadcast %cst_76 : f32 to vector<2x32xf32>
    %246 = arith.maximumf %244, %245 : vector<2x32xf32>
    %c64_77 = arith.constant 64 : index
    %c0_78 = arith.constant 0 : index
    %247 = vector.load %arg5[%c64_77, %c0_78] : memref<134x16xf32, #tpu.memory_space<vmem>>, vector<32x16xf32>
    %cst_79 = arith.constant dense<0.000000e+00> : vector<2x16xf32>
    %248 = tpu.matmul %246, %247, %cst_79 {dimension_numbers = #tpu.dot_dimension_numbers<[1], [0], [0], [1], [0, 0, 1, 1], [], []>} : vector<2x32xf32>, vector<32x16xf32>, vector<2x16xf32> -> vector<2x16xf32>
    %c130 = arith.constant 130 : index
    %c0_80 = arith.constant 0 : index
    %249 = vector.load %arg5[%c130, %c0_80] : memref<134x16xf32, #tpu.memory_space<vmem>>, vector<1x16xf32>
    %250 = vector.broadcast %249 : vector<1x16xf32> to vector<2x16xf32>
    %251 = arith.addf %248, %250 : vector<2x16xf32>
    %252 = arith.addf %226, %251 : vector<2x16xf32>
    %c48 = arith.constant 48 : index
    %c0_81 = arith.constant 0 : index
    %253 = vector.load %arg3[%c48, %c0_81] : memref<328x32xf32, #tpu.memory_space<vmem>>, vector<16x32xf32>
    %cst_82 = arith.constant dense<0.000000e+00> : vector<2x32xf32>
    %254 = tpu.matmul %252, %253, %cst_82 {dimension_numbers = #tpu.dot_dimension_numbers<[1], [0], [0], [1], [0, 0, 1, 1], [], []>} : vector<2x16xf32>, vector<16x32xf32>, vector<2x32xf32> -> vector<2x32xf32>
    %255 = vector.extract_strided_slice %172 {offsets = [0, 96], sizes = [2, 32], strides = [1, 1]} : vector<2x128xf32> to vector<2x32xf32>
    %256 = arith.addf %254, %255 : vector<2x32xf32>
    %cst_83 = arith.constant 0.000000e+00 : f32
    %257 = vector.broadcast %cst_83 : f32 to vector<2x32xf32>
    %258 = arith.maximumf %256, %257 : vector<2x32xf32>
    %c256 = arith.constant 256 : index
    %c0_84 = arith.constant 0 : index
    %259 = vector.load %arg3[%c256, %c0_84] : memref<328x32xf32, #tpu.memory_space<vmem>>, vector<32x32xf32>
    %cst_85 = arith.constant dense<0.000000e+00> : vector<2x32xf32>
    %260 = tpu.matmul %258, %259, %cst_85 {dimension_numbers = #tpu.dot_dimension_numbers<[1], [0], [0], [1], [0, 0, 1, 1], [], []>} : vector<2x32xf32>, vector<32x32xf32>, vector<2x32xf32> -> vector<2x32xf32>
    %c326 = arith.constant 326 : index
    %c0_86 = arith.constant 0 : index
    %261 = vector.load %arg3[%c326, %c0_86] : memref<328x32xf32, #tpu.memory_space<vmem>>, vector<1x32xf32>
    %262 = vector.broadcast %261 : vector<1x32xf32> to vector<2x32xf32>
    %263 = arith.addf %260, %262 : vector<2x32xf32>
    %cst_87 = arith.constant 0.000000e+00 : f32
    %264 = vector.broadcast %cst_87 : f32 to vector<2x32xf32>
    %265 = arith.maximumf %263, %264 : vector<2x32xf32>
    %c288 = arith.constant 288 : index
    %c0_88 = arith.constant 0 : index
    %266 = vector.load %arg3[%c288, %c0_88] : memref<328x32xf32, #tpu.memory_space<vmem>>, vector<32x32xf32>
    %cst_89 = arith.constant dense<0.000000e+00> : vector<2x32xf32>
    %267 = tpu.matmul %265, %266, %cst_89 {dimension_numbers = #tpu.dot_dimension_numbers<[1], [0], [0], [1], [0, 0, 1, 1], [], []>} : vector<2x32xf32>, vector<32x32xf32>, vector<2x32xf32> -> vector<2x32xf32>
    %c327 = arith.constant 327 : index
    %c0_90 = arith.constant 0 : index
    %268 = vector.load %arg3[%c327, %c0_90] : memref<328x32xf32, #tpu.memory_space<vmem>>, vector<1x32xf32>
    %269 = vector.broadcast %268 : vector<1x32xf32> to vector<2x32xf32>
    %270 = arith.addf %267, %269 : vector<2x32xf32>
    %cst_91 = arith.constant 0.000000e+00 : f32
    %271 = vector.broadcast %cst_91 : f32 to vector<2x32xf32>
    %272 = arith.maximumf %270, %271 : vector<2x32xf32>
    %c96_92 = arith.constant 96 : index
    %c0_93 = arith.constant 0 : index
    %273 = vector.load %arg5[%c96_92, %c0_93] : memref<134x16xf32, #tpu.memory_space<vmem>>, vector<32x16xf32>
    %cst_94 = arith.constant dense<0.000000e+00> : vector<2x16xf32>
    %274 = tpu.matmul %272, %273, %cst_94 {dimension_numbers = #tpu.dot_dimension_numbers<[1], [0], [0], [1], [0, 0, 1, 1], [], []>} : vector<2x32xf32>, vector<32x16xf32>, vector<2x16xf32> -> vector<2x16xf32>
    %c131 = arith.constant 131 : index
    %c0_95 = arith.constant 0 : index
    %275 = vector.load %arg5[%c131, %c0_95] : memref<134x16xf32, #tpu.memory_space<vmem>>, vector<1x16xf32>
    %276 = vector.broadcast %275 : vector<1x16xf32> to vector<2x16xf32>
    %277 = arith.addf %274, %276 : vector<2x16xf32>
    %278 = arith.addf %252, %277 : vector<2x16xf32>
    %c132 = arith.constant 132 : index
    %c0_96 = arith.constant 0 : index
    %279 = vector.load %arg5[%c132, %c0_96] : memref<134x16xf32, #tpu.memory_space<vmem>>, vector<1x16xf32>
    %280 = vector.broadcast %279 : vector<1x16xf32> to vector<2x16xf32>
    %281 = arith.mulf %278, %280 : vector<2x16xf32>
    %cst_97 = arith.constant -5.000000e-01 : f32
    %282 = vector.broadcast %cst_97 : f32 to vector<2x16xf32>
    %283 = arith.mulf %282, %281 : vector<2x16xf32>
    %284 = arith.mulf %283, %281 : vector<2x16xf32>
    %cst_98 = arith.constant 0.918938517 : f32
    %285 = vector.broadcast %cst_98 : f32 to vector<2x16xf32>
    %286 = arith.subf %284, %285 : vector<2x16xf32>
    %cst_99 = arith.constant dense<0.000000e+00> : vector<2xf32>
    %287 = vector.multi_reduction <add>, %286, %cst_99 [1] : vector<2x16xf32> to vector<2xf32>
    %288 = vector.shape_cast %287 : vector<2xf32> to vector<2x1xf32>
    %c133 = arith.constant 133 : index
    %c0_100 = arith.constant 0 : index
    %289 = vector.load %arg5[%c133, %c0_100] : memref<134x16xf32, #tpu.memory_space<vmem>>, vector<1x1xf32>
    %290 = vector.broadcast %289 : vector<1x1xf32> to vector<2x1xf32>
    %291 = arith.addf %288, %290 : vector<2x1xf32>
    %c0_101 = arith.constant 0 : index
    %c0_102 = arith.constant 0 : index
    %292 = vector.load %arg6[%c0_101, %c0_102] : memref<2x1xf32, #tpu.memory_space<vmem>>, vector<2x1xf32>
    tpu.vector_store %arg6[%c0_101, %c0_102], %291 {strides = array<i32>} : memref<2x1xf32, #tpu.memory_space<vmem>>, vector<2x1xf32>,
    return
  }
}

</mosaic_0001>

<llo_original>
// kernel: nice_ts_forward.1
$region0: #{nice_ts_forward.1}
  #allocation0 [shape = 'u32[]', space=smem, size = 0x4, offset = 0x4, fixed_abs, tag = 'smem constant byte address 0x4 - core index']
  #allocation1 [shape = 'u32[144,128]{1,0:T(1,128)}', space=vmem, size = 0x12000, scoped, tag = 'internal scratch']
  %s0 = inlined_call_operand.vmem [shape: f32[2,8,16], index: 0, kind: input, shape index: {}]
  %s1 = inlined_call_operand.vmem [shape: f32[2,8,2], index: 1, kind: input, shape index: {}]
  %s2 = inlined_call_operand.vmem [shape: f32[27,32], index: 2, kind: input, shape index: {}]
  %s3 = inlined_call_operand.vmem [shape: f32[328,32], index: 3, kind: input, shape index: {}]
  %s4 = inlined_call_operand.vmem [shape: f32[9,128], index: 4, kind: input, shape index: {}]
  %s5 = inlined_call_operand.vmem [shape: f32[134,16], index: 5, kind: input, shape index: {}]
  %s6 = inlined_call_operand.vmem [shape: f32[2,1], index: 6, kind: output, shape index: {}]
  %s7 = sld [smem:[#allocation0]]
  $region34: #{nice_ts_forward.1} parent=0
    _
  %s9 = ssub.s32 1, %s7
  %s10 = scalar_select 0, %s9, %s7
  // Predicated region
  $region2: #{nice_ts_forward.1} parent=0 // pred_check
    _
  $region3: #{nice_ts_forward.1} parent=0 // pred_check_branch
    %12 = sbr.rel (0) target = $region5
  $region4: #{nice_ts_forward.1} parent=0 // pred_region
    _
  $region5: #{nice_ts_forward.1} parent=0 // pred_fallthru
    _
  // Predicated region
  $region6: #{nice_ts_forward.1} parent=0 // pred_check
    _
  $region7: #{nice_ts_forward.1} parent=0 // pred_check_branch
    %14 = sbr.rel (0) target = $region9
  $region8: #{nice_ts_forward.1} parent=0 // pred_region
    _
  $region9: #{nice_ts_forward.1} parent=0 // pred_fallthru
    _
  // Predicated region
  $region10: #{nice_ts_forward.1} parent=0 // pred_check
    _
  $region11: #{nice_ts_forward.1} parent=0 // pred_check_branch
    %16 = sbr.rel (0) target = $region13
  $region12: #{nice_ts_forward.1} parent=0 // pred_region
    _
  $region13: #{nice_ts_forward.1} parent=0 // pred_fallthru
    _
  // Predicated region
  $region14: #{nice_ts_forward.1} parent=0 // pred_check
    _
  $region15: #{nice_ts_forward.1} parent=0 // pred_check_branch
    %18 = sbr.rel (0) target = $region17
  $region16: #{nice_ts_forward.1} parent=0 // pred_region
    _
  $region17: #{nice_ts_forward.1} parent=0 // pred_fallthru
    _
  // Predicated region
  $region18: #{nice_ts_forward.1} parent=0 // pred_check
    _
  $region19: #{nice_ts_forward.1} parent=0 // pred_check_branch
    %20 = sbr.rel (0) target = $region21
  $region20: #{nice_ts_forward.1} parent=0 // pred_region
    _
  $region21: #{nice_ts_forward.1} parent=0 // pred_fallthru
    _
  // Predicated region
  $region22: #{nice_ts_forward.1} parent=0 // pred_check
    _
  $region23: #{nice_ts_forward.1} parent=0 // pred_check_branch
    %22 = sbr.rel (0) target = $region25
  $region24: #{nice_ts_forward.1} parent=0 // pred_region
    _
  $region25: #{nice_ts_forward.1} parent=0 // pred_fallthru
    _
  %v23 = vld [vmem:[%s0] sm:$0xff]
  %v24 = vld [vmem:[%s0 + $0x8] sm:$0xff]
  %v25 = vld [vmem:[%s1] sm:$0xff]
  %v26 = vld [vmem:[%s1 + $0x8] sm:$0xff]
  %v27 = vld [vmem:[%s2] sm:$0xff]
  %v28 = vld [vmem:[%s2 + $0x8] sm:$0xff]
  %v29 = vld [vmem:[%s2 + $0x10] sm:$0x3]
  %vm30 = vcmask 15360
  %v32 = vsel %vm30, %v25, 0
  %v35 = vsel %vm30, %v26, 0
  %vm37 = vcmask 1041408
  %v39 = vsel %vm37, %v29, 0
  %41 = vmatprep.subr.mxu0 0.0
  %42 = vmatpush1.msra.mxu0 %v39
  %43 = vmatprep.subr.mxu0 0.0
  %44 = vmatpush1.msra.mxu0 0.0
  %45 = vmatprep.subr.mxu0 0.0
  %46 = vmatpush1.msra.mxu0 0.0
  %47 = vmatprep.subr.mxu0 0.0
  %48 = vmatpush1.msra.mxu0 0.0
  %49 = vmatprep.subr.mxu0 0.0
  %50 = vmatpush1.msra.mxu0 0.0
  %51 = vmatprep.subr.mxu0 0.0
  %52 = vmatpush1.msra.mxu0 0.0
  %53 = vmatprep.subr.mxu0 0.0
  %54 = vmatpush1.msra.mxu0 0.0
  %55 = vmatprep.subr.mxu0 0.0
  %56 = vmatpush1.msra.mxu0 0.0
  %57 = vmatprep.subr.mxu0 0.0
  %58 = vmatpush1.msra.mxu0 0.0
  %59 = vmatprep.subr.mxu0 0.0
  %60 = vmatpush1.msra.mxu0 0.0
  %61 = vmatprep.subr.mxu0 0.0
  %62 = vmatpush1.msra.mxu0 0.0
  %63 = vmatprep.subr.mxu0 0.0
  %64 = vmatpush1.msra.mxu0 0.0
  %65 = vmatprep.subr.mxu0 0.0
  %66 = vmatpush1.msra.mxu0 0.0
  %67 = vmatprep.subr.mxu0 0.0
  %68 = vmatpush1.msra.mxu0 0.0
  %69 = vmatprep.subr.mxu0 0.0
  %70 = vmatpush1.msra.mxu0 0.0
  %71 = vmatprep.subr.mxu0 0.0
  %72 = vmatpush1.msra.mxu0 0.0
  %73 = vmatprep.subr.mxu0 0.0
  %74 = vmatpush1.msra.mxu0 0.0
  %75 = vmatprep.subr.mxu0 0.0
  %76 = vmatpush1.msra.mxu0 0.0
  %77 = vmatprep.subr.mxu0 0.0
  %78 = vmatpush1.msra.mxu0 0.0
  %79 = vmatprep.subr.mxu0 0.0
  %80 = vmatpush1.msra.mxu0 0.0
  %81 = vmatprep.subr.mxu0 0.0
  %82 = vmatpush1.msra.mxu0 0.0
  %83 = vmatprep.subr.mxu0 0.0
  %84 = vmatpush1.msra.mxu0 0.0
  %85 = vmatprep.subr.mxu0 0.0
  %86 = vmatpush1.msra.mxu0 0.0
  %87 = vmatprep.subr.mxu0 0.0
  %88 = vmatpush1.msra.mxu0 0.0
  %89 = vmatprep.subr.mxu0 0.0
  %90 = vmatpush1.msra.mxu0 0.0
  %91 = vmatprep.subr.mxu0 0.0
  %92 = vmatpush1.msra.mxu0 0.0
  %93 = vmatprep.subr.mxu0 0.0
  %94 = vmatpush1.msra.mxu0 0.0
  %95 = vmatprep.subr.mxu0 0.0
  %96 = vmatpush1.msra.mxu0 0.0
  %97 = vmatprep.subr.mxu0 0.0
  %98 = vmatpush1.msra.mxu0 0.0
  %99 = vmatprep.subr.mxu0 0.0
  %100 = vmatpush1.msra.mxu0 0.0
  %101 = vmatprep.subr.mxu0 0.0
  %102 = vmatpush1.msra.mxu0 0.0
  %103 = vmatprep.subr.mxu0 0.0
  %104 = vmatpush1.msra.mxu0 0.0
  %105 = vmatprep.mubr.f32.mxu0 0.0
  %106 = vmatmul.mubr.f32.gmra.mrb[0].mxu0 %v32
  %v107 = vpop.f32.mrb[0].mxu0
  %v108 = vadd.f32 0.0, %v107
  %v109 = vpop.f32.mrb[0].mxu0
  %110 = vmatprep.mubr.f32.mxu0 0.0
  %111 = vmatmul.mubr.f32.gmra.mrb[0].mxu0 %v35
  %v112 = vpop.f32.mrb[0].mxu0
  %v113 = vadd.f32 0.0, %v112
  %v114 = vpop.f32.mrb[0].mxu0
  %115 = vdwg.mxu0
  %vm116 = vcmask 130048
  %v118 = vsel %vm116, %v23, 0
  %v121 = vsel %vm116, %v24, 0
  %123 = vmatprep.subr.mxu0 0.0
  %124 = vmatpush1.msra.mxu0 %v27
  %125 = vmatprep.subr.mxu0 0.0
  %126 = vmatpush1.msra.mxu0 %v28
  %127 = vmatprep.subr.mxu0 0.0
  %128 = vmatpush1.msra.mxu0 0.0
  %129 = vmatprep.subr.mxu0 0.0
  %130 = vmatpush1.msra.mxu0 0.0
  %131 = vmatprep.subr.mxu0 0.0
  %132 = vmatpush1.msra.mxu0 0.0
  %133 = vmatprep.subr.mxu0 0.0
  %134 = vmatpush1.msra.mxu0 0.0
  %135 = vmatprep.subr.mxu0 0.0
  %136 = vmatpush1.msra.mxu0 0.0
  %137 = vmatprep.subr.mxu0 0.0
  %138 = vmatpush1.msra.mxu0 0.0
  %139 = vmatprep.subr.mxu0 0.0
  %140 = vmatpush1.msra.mxu0 0.0
  %141 = vmatprep.subr.mxu0 0.0
  %142 = vmatpush1.msra.mxu0 0.0
  %143 = vmatprep.subr.mxu0 0.0
  %144 = vmatpush1.msra.mxu0 0.0
  %145 = vmatprep.subr.mxu0 0.0
  %146 = vmatpush1.msra.mxu0 0.0
  %147 = vmatprep.subr.mxu0 0.0
  %148 = vmatpush1.msra.mxu0 0.0
  %149 = vmatprep.subr.mxu0 0.0
  %150 = vmatpush1.msra.mxu0 0.0
  %151 = vmatprep.subr.mxu0 0.0
  %152 = vmatpush1.msra.mxu0 0.0
  %153 = vmatprep.subr.mxu0 0.0
  %154 = vmatpush1.msra.mxu0 0.0
  %155 = vmatprep.subr.mxu0 0.0
  %156 = vmatpush1.msra.mxu0 0.0
  %157 = vmatprep.subr.mxu0 0.0
  %158 = vmatpush1.msra.mxu0 0.0
  %159 = vmatprep.subr.mxu0 0.0
  %160 = vmatpush1.msra.mxu0 0.0
  %161 = vmatprep.subr.mxu0 0.0
  %162 = vmatpush1.msra.mxu0 0.0
  %163 = vmatprep.subr.mxu0 0.0
  %164 = vmatpush1.msra.mxu0 0.0
  %165 = vmatprep.subr.mxu0 0.0
  %166 = vmatpush1.msra.mxu0 0.0
  %167 = vmatprep.subr.mxu0 0.0
  %168 = vmatpush1.msra.mxu0 0.0
  %169 = vmatprep.subr.mxu0 0.0
  %170 = vmatpush1.msra.mxu0 0.0
  %171 = vmatprep.subr.mxu0 0.0
  %172 = vmatpush1.msra.mxu0 0.0
  %173 = vmatprep.subr.mxu0 0.0
  %174 = vmatpush1.msra.mxu0 0.0
  %175 = vmatprep.subr.mxu0 0.0
  %176 = vmatpush1.msra.mxu0 0.0
  %177 = vmatprep.subr.mxu0 0.0
  %178 = vmatpush1.msra.mxu0 0.0
  %179 = vmatprep.subr.mxu0 0.0
  %180 = vmatpush1.msra.mxu0 0.0
  %181 = vmatprep.subr.mxu0 0.0
  %182 = vmatpush1.msra.mxu0 0.0
  %183 = vmatprep.subr.mxu0 0.0
  %184 = vmatpush1.msra.mxu0 0.0
  %185 = vmatprep.subr.mxu0 0.0
  %186 = vmatpush1.msra.mxu0 0.0
  %187 = vmatprep.mubr.f32.mxu0 0.0
  %188 = vmatmul.mubr.f32.gmra.mrb[0].mxu0 %v118
  %v189 = vpop.f32.mrb[0].mxu0
  %v190 = vadd.f32 %v108, %v189
  %v191 = vpop.f32.mrb[0].mxu0
  %192 = vmatprep.mubr.f32.mxu0 0.0
  %193 = vmatmul.mubr.f32.gmra.mrb[0].mxu0 %v121
  %v194 = vpop.f32.mrb[0].mxu0
  %v195 = vadd.f32 %v113, %v194
  %v196 = vpop.f32.mrb[0].mxu0
  %197 = vdwg.mxu0
  %v198 = vld [vmem:[%s2 + $0x1a] sm:$0x1]
  %v199 = vlaneseq
  %v200 = vshrl.u32 %v199, 7
  %v201 = vsub.s32 0, %v200
  %v202 = vrot.slane %v198, %v201
  %v203 = vadd.f32 %v190, %v202
  %v204 = vadd.f32 %v195, %v202
  %v205 = vld [vmem:[%s2 + $0x12] sm:$0xff]
  %vm206 = vcmask 64512
  %v208 = vsel %vm206, 0.0, 0
  %210 = vmatprep.subr.mxu0 0.0
  %211 = vmatpush1.msra.mxu0 %v205
  %212 = vmatprep.subr.mxu0 0.0
  %213 = vmatpush1.msra.mxu0 0.0
  %214 = vmatprep.subr.mxu0 0.0
  %215 = vmatpush1.msra.mxu0 0.0
  %216 = vmatprep.subr.mxu0 0.0
  %217 = vmatpush1.msra.mxu0 0.0
  %218 = vmatprep.subr.mxu0 0.0
  %219 = vmatpush1.msra.mxu0 0.0
  %220 = vmatprep.subr.mxu0 0.0
  %221 = vmatpush1.msra.mxu0 0.0
  %222 = vmatprep.subr.mxu0 0.0
  %223 = vmatpush1.msra.mxu0 0.0
  %224 = vmatprep.subr.mxu0 0.0
  %225 = vmatpush1.msra.mxu0 0.0
  %226 = vmatprep.subr.mxu0 0.0
  %227 = vmatpush1.msra.mxu0 0.0
  %228 = vmatprep.subr.mxu0 0.0
  %229 = vmatpush1.msra.mxu0 0.0
  %230 = vmatprep.subr.mxu0 0.0
  %231 = vmatpush1.msra.mxu0 0.0
  %232 = vmatprep.subr.mxu0 0.0
  %233 = vmatpush1.msra.mxu0 0.0
  %234 = vmatprep.subr.mxu0 0.0
  %235 = vmatpush1.msra.mxu0 0.0
  %236 = vmatprep.subr.mxu0 0.0
  %237 = vmatpush1.msra.mxu0 0.0
  %238 = vmatprep.subr.mxu0 0.0
  %239 = vmatpush1.msra.mxu0 0.0
  %240 = vmatprep.subr.mxu0 0.0
  %241 = vmatpush1.msra.mxu0 0.0
  %242 = vmatprep.subr.mxu0 0.0
  %243 = vmatpush1.msra.mxu0 0.0
  %244 = vmatprep.subr.mxu0 0.0
  %245 = vmatpush1.msra.mxu0 0.0
  %246 = vmatprep.subr.mxu0 0.0
  %247 = vmatpush1.msra.mxu0 0.0
  %248 = vmatprep.subr.mxu0 0.0
  %249 = vmatpush1.msra.mxu0 0.0
  %250 = vmatprep.subr.mxu0 0.0
  %251 = vmatpush1.msra.mxu0 0.0
  %252 = vmatprep.subr.mxu0 0.0
  %253 = vmatpush1.msra.mxu0 0.0
  %254 = vmatprep.subr.mxu0 0.0
  %255 = vmatpush1.msra.mxu0 0.0
  %256 = vmatprep.subr.mxu0 0.0
  %257 = vmatpush1.msra.mxu0 0.0
  %258 = vmatprep.subr.mxu0 0.0
  %259 = vmatpush1.msra.mxu0 0.0
  %260 = vmatprep.subr.mxu0 0.0
  %261 = vmatpush1.msra.mxu0 0.0
  %262 = vmatprep.subr.mxu0 0.0
  %263 = vmatpush1.msra.mxu0 0.0
  %264 = vmatprep.subr.mxu0 0.0
  %265 = vmatpush1.msra.mxu0 0.0
  %266 = vmatprep.subr.mxu0 0.0
  %267 = vmatpush1.msra.mxu0 0.0
  %268 = vmatprep.subr.mxu0 0.0
  %269 = vmatpush1.msra.mxu0 0.0
  %270 = vmatprep.subr.mxu0 0.0
  %271 = vmatpush1.msra.mxu0 0.0
  %272 = vmatprep.subr.mxu0 0.0
  %273 = vmatpush1.msra.mxu0 0.0
  %274 = vmatprep.mubr.f32.mxu0 0.0
  %275 = vmatmul.mubr.f32.gmra.mrb[0].mxu0 %v208
  %v276 = vpop.f32.mrb[0].mxu0
  %v277 = vadd.f32 0.0, %v276
  %v278 = vpop.f32.mrb[0].mxu0
  %279 = vdwg.mxu0
  %v281 = vrot.slane %v277, 1
  %v284 = vadd.f32 %v203, %v277
  %v285 = vadd.f32 %v204, %v281
  %v286 = vxor.u32 %v284, 2147483648
  %v287 = vxor.u32 %v285, 2147483648
  %v288 = vmul.f32 %v286, 1.442695
  %v289 = vpow.pop %v288
  %v290 = vmul.f32 %v287, 1.442695
  %v291 = vpow.pop %v290
  %v292 = vadd.f32 %v289, 1.0
  %v293 = vadd.f32 %v291, 1.0
  %v294 = vrcp.pop %v292
  %v295 = vmul.f32 1.0, %v294
  %v296 = vrcp.pop %v293
  %v297 = vmul.f32 1.0, %v296
  %v298 = vtanh.pop %v284
  %v299 = vtanh.pop %v285
  %v300 = vmul.f32 %v295, 0.0
  %v301 = vmul.f32 %v297, 0.0
  %304 = vrot.lane.b32.xlu0 %v298, 112
  %v305 = vpop.permute.xlu0 %304
  %306 = vrot.lane.b32.xlu0 %v299, 112
  %v307 = vpop.permute.xlu0 %306
  %v310 = vmul.f32 %v295, %v305
  %v311 = vmul.f32 %v297, %v307
  %314 = vrot.lane.b32.xlu0 %v310, 8
  %v315 = vpop.permute.xlu0 %314
  %316 = vrot.lane.b32.xlu0 %v311, 8
  %v317 = vpop.permute.xlu0 %316
  %v320 = vadd.f32 %v300, %v315
  %v321 = vadd.f32 %v301, %v317
  %v322 = vtanh.pop %v320
  %v323 = vtanh.pop %v321
  %326 = vrot.lane.b32.xlu0 %v322, 16
  %v327 = vpop.permute.xlu0 %326
  %328 = vrot.lane.b32.xlu0 %v323, 16
  %v329 = vpop.permute.xlu0 %328
  %v332 = vmul.f32 %v295, %v327
  %v333 = vmul.f32 %v297, %v329
  %v336 = vrot.slane %v333, 7
  %vm337 = vcmask 1041409
  %v338 = vsel %vm337, %v336, %v332
  %339 = vrot.lane.b32.xlu0 %v338, 104
  %v340 = vpop.permute.xlu0 %339
  %v341 = vsel %vm206, %v340, 0
  %343 = vmatprep.subr.mxu0 0.0
  %344 = vmatpush1.msra.mxu0 %v205
  %345 = vmatprep.subr.mxu0 0.0
  %346 = vmatpush1.msra.mxu0 0.0
  %347 = vmatprep.subr.mxu0 0.0
  %348 = vmatpush1.msra.mxu0 0.0
  %349 = vmatprep.subr.mxu0 0.0
  %350 = vmatpush1.msra.mxu0 0.0
  %351 = vmatprep.subr.mxu0 0.0
  %352 = vmatpush1.msra.mxu0 0.0
  %353 = vmatprep.subr.mxu0 0.0
  %354 = vmatpush1.msra.mxu0 0.0
  %355 = vmatprep.subr.mxu0 0.0
  %356 = vmatpush1.msra.mxu0 0.0
  %357 = vmatprep.subr.mxu0 0.0
  %358 = vmatpush1.msra.mxu0 0.0
  %359 = vmatprep.subr.mxu0 0.0
  %360 = vmatpush1.msra.mxu0 0.0
  %361 = vmatprep.subr.mxu0 0.0
  %362 = vmatpush1.msra.mxu0 0.0
  %363 = vmatprep.subr.mxu0 0.0
  %364 = vmatpush1.msra.mxu0 0.0
  %365 = vmatprep.subr.mxu0 0.0
  %366 = vmatpush1.msra.mxu0 0.0
  %367 = vmatprep.subr.mxu0 0.0
  %368 = vmatpush1.msra.mxu0 0.0
  %369 = vmatprep.subr.mxu0 0.0
  %370 = vmatpush1.msra.mxu0 0.0
  %371 = vmatprep.subr.mxu0 0.0
  %372 = vmatpush1.msra.mxu0 0.0
  %373 = vmatprep.subr.mxu0 0.0
  %374 = vmatpush1.msra.mxu0 0.0
  %375 = vmatprep.subr.mxu0 0.0
  %376 = vmatpush1.msra.mxu0 0.0
  %377 = vmatprep.subr.mxu0 0.0
  %378 = vmatpush1.msra.mxu0 0.0
  %379 = vmatprep.subr.mxu0 0.0
  %380 = vmatpush1.msra.mxu0 0.0
  %381 = vmatprep.subr.mxu0 0.0
  %382 = vmatpush1.msra.mxu0 0.0
  %383 = vmatprep.subr.mxu0 0.0
  %384 = vmatpush1.msra.mxu0 0.0
  %385 = vmatprep.subr.mxu0 0.0
  %386 = vmatpush1.msra.mxu0 0.0
  %387 = vmatprep.subr.mxu0 0.0
  %388 = vmatpush1.msra.mxu0 0.0
  %389 = vmatprep.subr.mxu0 0.0
  %390 = vmatpush1.msra.mxu0 0.0
  %391 = vmatprep.subr.mxu0 0.0
  %392 = vmatpush1.msra.mxu0 0.0
  %393 = vmatprep.subr.mxu0 0.0
  %394 = vmatpush1.msra.mxu0 0.0
  %395 = vmatprep.subr.mxu0 0.0
  %396 = vmatpush1.msra.mxu0 0.0
  %397 = vmatprep.subr.mxu0 0.0
  %398 = vmatpush1.msra.mxu0 0.0
  %399 = vmatprep.subr.mxu0 0.0
  %400 = vmatpush1.msra.mxu0 0.0
  %401 = vmatprep.subr.mxu0 0.0
  %402 = vmatpush1.msra.mxu0 0.0
  %403 = vmatprep.subr.mxu0 0.0
  %404 = vmatpush1.msra.mxu0 0.0
  %405 = vmatprep.subr.mxu0 0.0
  %406 = vmatpush1.msra.mxu0 0.0
  %407 = vmatprep.mubr.f32.mxu0 0.0
  %408 = vmatmul.mubr.f32.gmra.mrb[0].mxu0 %v341
  %v409 = vpop.f32.mrb[0].mxu0
  %v410 = vadd.f32 0.0, %v409
  %v411 = vpop.f32.mrb[0].mxu0
  %412 = vdwg.mxu0
  %v414 = vrot.slane %v410, 7
  %v417 = vadd.f32 %v203, %v414
  %v418 = vadd.f32 %v204, %v410
  %v419 = vxor.u32 %v417, 2147483648
  %v420 = vxor.u32 %v418, 2147483648
  %v421 = vmul.f32 %v419, 1.442695
  %v422 = vpow.pop %v421
  %v423 = vmul.f32 %v420, 1.442695
  %v424 = vpow.pop %v423
  %v425 = vadd.f32 %v422, 1.0
  %v426 = vadd.f32 %v424, 1.0
  %v427 = vrcp.pop %v425
  %v428 = vmul.f32 1.0, %v427
  %v429 = vrcp.pop %v426
  %v430 = vmul.f32 1.0, %v429
  %v431 = vtanh.pop %v417
  %v432 = vtanh.pop %v418
  %v435 = vrot.slane %v320, 7
  %v436 = vrot.slane %v321, 7
  %v439 = vmul.f32 %v428, %v435
  %v440 = vmul.f32 %v430, %v436
  %443 = vrot.lane.b32.xlu0 %v431, 112
  %v444 = vpop.permute.xlu0 %443
  %445 = vrot.lane.b32.xlu0 %v432, 112
  %v446 = vpop.permute.xlu0 %445
  %v449 = vmul.f32 %v428, %v444
  %v450 = vmul.f32 %v430, %v446
  %453 = vrot.lane.b32.xlu0 %v449, 8
  %v454 = vpop.permute.xlu0 %453
  %455 = vrot.lane.b32.xlu0 %v450, 8
  %v456 = vpop.permute.xlu0 %455
  %v459 = vadd.f32 %v439, %v454
  %v460 = vadd.f32 %v440, %v456
  %v461 = vtanh.pop %v459
  %v462 = vtanh.pop %v460
  %465 = vrot.lane.b32.xlu0 %v461, 16
  %v466 = vpop.permute.xlu0 %465
  %467 = vrot.lane.b32.xlu0 %v462, 16
  %v468 = vpop.permute.xlu0 %467
  %v471 = vmul.f32 %v428, %v466
  %v472 = vmul.f32 %v430, %v468
  %v475 = vrot.slane %v471, 1
  %v476 = vsel %vm337, %v472, %v475
  %477 = vrot.lane.b32.xlu0 %v476, 104
  %v478 = vpop.permute.xlu0 %477
  %v479 = vsel %vm206, %v478, 0
  %481 = vmatprep.subr.mxu0 0.0
  %482 = vmatpush1.msra.mxu0 %v205
  %483 = vmatprep.subr.mxu0 0.0
  %484 = vmatpush1.msra.mxu0 0.0
  %485 = vmatprep.subr.mxu0 0.0
  %486 = vmatpush1.msra.mxu0 0.0
  %487 = vmatprep.subr.mxu0 0.0
  %488 = vmatpush1.msra.mxu0 0.0
  %489 = vmatprep.subr.mxu0 0.0
  %490 = vmatpush1.msra.mxu0 0.0
  %491 = vmatprep.subr.mxu0 0.0
  %492 = vmatpush1.msra.mxu0 0.0
  %493 = vmatprep.subr.mxu0 0.0
  %494 = vmatpush1.msra.mxu0 0.0
  %495 = vmatprep.subr.mxu0 0.0
  %496 = vmatpush1.msra.mxu0 0.0
  %497 = vmatprep.subr.mxu0 0.0
  %498 = vmatpush1.msra.mxu0 0.0
  %499 = vmatprep.subr.mxu0 0.0
  %500 = vmatpush1.msra.mxu0 0.0
  %501 = vmatprep.subr.mxu0 0.0
  %502 = vmatpush1.msra.mxu0 0.0
  %503 = vmatprep.subr.mxu0 0.0
  %504 = vmatpush1.msra.mxu0 0.0
  %505 = vmatprep.subr.mxu0 0.0
  %506 = vmatpush1.msra.mxu0 0.0
  %507 = vmatprep.subr.mxu0 0.0
  %508 = vmatpush1.msra.mxu0 0.0
  %509 = vmatprep.subr.mxu0 0.0
  %510 = vmatpush1.msra.mxu0 0.0
  %511 = vmatprep.subr.mxu0 0.0
  %512 = vmatpush1.msra.mxu0 0.0
  %513 = vmatprep.subr.mxu0 0.0
  %514 = vmatpush1.msra.mxu0 0.0
  %515 = vmatprep.subr.mxu0 0.0
  %516 = vmatpush1.msra.mxu0 0.0
  %517 = vmatprep.subr.mxu0 0.0
  %518 = vmatpush1.msra.mxu0 0.0
  %519 = vmatprep.subr.mxu0 0.0
  %520 = vmatpush1.msra.mxu0 0.0
  %521 = vmatprep.subr.mxu0 0.0
  %522 = vmatpush1.msra.mxu0 0.0
  %523 = vmatprep.subr.mxu0 0.0
  %524 = vmatpush1.msra.mxu0 0.0
  %525 = vmatprep.subr.mxu0 0.0
  %526 = vmatpush1.msra.mxu0 0.0
  %527 = vmatprep.subr.mxu0 0.0
  %528 = vmatpush1.msra.mxu0 0.0
  %529 = vmatprep.subr.mxu0 0.0
  %530 = vmatpush1.msra.mxu0 0.0
  %531 = vmatprep.subr.mxu0 0.0
  %532 = vmatpush1.msra.mxu0 0.0
  %533 = vmatprep.subr.mxu0 0.0
  %534 = vmatpush1.msra.mxu0 0.0
  %535 = vmatprep.subr.mxu0 0.0
  %536 = vmatpush1.msra.mxu0 0.0
  %537 = vmatprep.subr.mxu0 0.0
  %538 = vmatpush1.msra.mxu0 0.0
  %539 = vmatprep.subr.mxu0 0.0
  %540 = vmatpush1.msra.mxu0 0.0
  %541 = vmatprep.subr.mxu0 0.0
  %542 = vmatpush1.msra.mxu0 0.0
  %543 = vmatprep.subr.mxu0 0.0
  %544 = vmatpush1.msra.mxu0 0.0
  %545 = vmatprep.mubr.f32.mxu0 0.0
  %546 = vmatmul.mubr.f32.gmra.mrb[0].mxu0 %v479
  %v547 = vpop.f32.mrb[0].mxu0
  %v548 = vadd.f32 0.0, %v547
  %v549 = vpop.f32.mrb[0].mxu0
  %550 = vdwg.mxu0
  %v552 = vrot.slane %v548, 6
  %v553 = vrot.slane %v548, 7
  %v556 = vadd.f32 %v203, %v552
  %v557 = vadd.f32 %v204, %v553
  %v558 = vxor.u32 %v556, 2147483648
  %v559 = vxor.u32 %v557, 2147483648
  %v560 = vmul.f32 %v558, 1.442695
  %v561 = vpow.pop %v560
  %v562 = vmul.f32 %v559, 1.442695
  %v563 = vpow.pop %v562
  %v564 = vadd.f32 %v561, 1.0
  %v565 = vadd.f32 %v563, 1.0
  %v566 = vrcp.pop %v564
  %v567 = vmul.f32 1.0, %v566
  %v568 = vrcp.pop %v565
  %v569 = vmul.f32 1.0, %v568
  %v570 = vtanh.pop %v556
  %v571 = vtanh.pop %v557
  %v574 = vrot.slane %v459, 7
  %v575 = vrot.slane %v460, 7
  %v578 = vmul.f32 %v567, %v574
  %v579 = vmul.f32 %v569, %v575
  %582 = vrot.lane.b32.xlu0 %v570, 112
  %v583 = vpop.permute.xlu0 %582
  %584 = vrot.lane.b32.xlu0 %v571, 112
  %v585 = vpop.permute.xlu0 %584
  %v588 = vmul.f32 %v567, %v583
  %v589 = vmul.f32 %v569, %v585
  %592 = vrot.lane.b32.xlu0 %v588, 8
  %v593 = vpop.permute.xlu0 %592
  %594 = vrot.lane.b32.xlu0 %v589, 8
  %v595 = vpop.permute.xlu0 %594
  %v598 = vadd.f32 %v578, %v593
  %v599 = vadd.f32 %v579, %v595
  %v600 = vtanh.pop %v598
  %v601 = vtanh.pop %v599
  %604 = vrot.lane.b32.xlu0 %v600, 16
  %v605 = vpop.permute.xlu0 %604
  %606 = vrot.lane.b32.xlu0 %v601, 16
  %v607 = vpop.permute.xlu0 %606
  %v610 = vmul.f32 %v567, %v605
  %v611 = vmul.f32 %v569, %v607
  %v614 = vrot.slane %v610, 2
  %v615 = vrot.slane %v611, 1
  %v616 = vsel %vm337, %v615, %v614
  %617 = vrot.lane.b32.xlu0 %v616, 104
  %v618 = vpop.permute.xlu0 %617
  %v619 = vsel %vm206, %v618, 0
  %621 = vmatprep.subr.mxu0 0.0
  %622 = vmatpush1.msra.mxu0 %v205
  %623 = vmatprep.subr.mxu0 0.0
  %624 = vmatpush1.msra.mxu0 0.0
  %625 = vmatprep.subr.mxu0 0.0
  %626 = vmatpush1.msra.mxu0 0.0
  %627 = vmatprep.subr.mxu0 0.0
  %628 = vmatpush1.msra.mxu0 0.0
  %629 = vmatprep.subr.mxu0 0.0
  %630 = vmatpush1.msra.mxu0 0.0
  %631 = vmatprep.subr.mxu0 0.0
  %632 = vmatpush1.msra.mxu0 0.0
  %633 = vmatprep.subr.mxu0 0.0
  %634 = vmatpush1.msra.mxu0 0.0
  %635 = vmatprep.subr.mxu0 0.0
  %636 = vmatpush1.msra.mxu0 0.0
  %637 = vmatprep.subr.mxu0 0.0
  %638 = vmatpush1.msra.mxu0 0.0
  %639 = vmatprep.subr.mxu0 0.0
  %640 = vmatpush1.msra.mxu0 0.0
  %641 = vmatprep.subr.mxu0 0.0
  %642 = vmatpush1.msra.mxu0 0.0
  %643 = vmatprep.subr.mxu0 0.0
  %644 = vmatpush1.msra.mxu0 0.0
  %645 = vmatprep.subr.mxu0 0.0
  %646 = vmatpush1.msra.mxu0 0.0
  %647 = vmatprep.subr.mxu0 0.0
  %648 = vmatpush1.msra.mxu0 0.0
  %649 = vmatprep.subr.mxu0 0.0
  %650 = vmatpush1.msra.mxu0 0.0
  %651 = vmatprep.subr.mxu0 0.0
  %652 = vmatpush1.msra.mxu0 0.0
  %653 = vmatprep.subr.mxu0 0.0
  %654 = vmatpush1.msra.mxu0 0.0
  %655 = vmatprep.subr.mxu0 0.0
  %656 = vmatpush1.msra.mxu0 0.0
  %657 = vmatprep.subr.mxu0 0.0
  %658 = vmatpush1.msra.mxu0 0.0
  %659 = vmatprep.subr.mxu0 0.0
  %660 = vmatpush1.msra.mxu0 0.0
  %661 = vmatprep.subr.mxu0 0.0
  %662 = vmatpush1.msra.mxu0 0.0
  %663 = vmatprep.subr.mxu0 0.0
  %664 = vmatpush1.msra.mxu0 0.0
  %665 = vmatprep.subr.mxu0 0.0
  %666 = vmatpush1.msra.mxu0 0.0
  %667 = vmatprep.subr.mxu0 0.0
  %668 = vmatpush1.msra.mxu0 0.0
  %669 = vmatprep.subr.mxu0 0.0
  %670 = vmatpush1.msra.mxu0 0.0
  %671 = vmatprep.subr.mxu0 0.0
  %672 = vmatpush1.msra.mxu0 0.0
  %673 = vmatprep.subr.mxu0 0.0
  %674 = vmatpush1.msra.mxu0 0.0
  %675 = vmatprep.subr.mxu0 0.0
  %676 = vmatpush1.msra.mxu0 0.0
  %677 = vmatprep.subr.mxu0 0.0
  %678 = vmatpush1.msra.mxu0 0.0
  %679 = vmatprep.subr.mxu0 0.0
  %680 = vmatpush1.msra.mxu0 0.0
  %681 = vmatprep.subr.mxu0 0.0
  %682 = vmatpush1.msra.mxu0 0.0
  %683 = vmatprep.subr.mxu0 0.0
  %684 = vmatpush1.msra.mxu0 0.0
  %685 = vmatprep.mubr.f32.mxu0 0.0
  %686 = vmatmul.mubr.f32.gmra.mrb[0].mxu0 %v619
  %v687 = vpop.f32.mrb[0].mxu0
  %v688 = vadd.f32 0.0, %v687
  %v689 = vpop.f32.mrb[0].mxu0
  %690 = vdwg.mxu0
  %v692 = vrot.slane %v688, 5
  %v693 = vrot.slane %v688, 6
  %v696 = vadd.f32 %v203, %v692
  %v697 = vadd.f32 %v204, %v693
  %v698 = vxor.u32 %v696, 2147483648
  %v699 = vxor.u32 %v697, 2147483648
  %v700 = vmul.f32 %v698, 1.442695
  %v701 = vpow.pop %v700
  %v702 = vmul.f32 %v699, 1.442695
  %v703 = vpow.pop %v702
  %v704 = vadd.f32 %v701, 1.0
  %v705 = vadd.f32 %v703, 1.0
  %v706 = vrcp.pop %v704
  %v707 = vmul.f32 1.0, %v706
  %v708 = vrcp.pop %v705
  %v709 = vmul.f32 1.0, %v708
  %v710 = vtanh.pop %v696
  %v711 = vtanh.pop %v697
  %v714 = vrot.slane %v598, 7
  %v715 = vrot.slane %v599, 7
  %v718 = vmul.f32 %v707, %v714
  %v719 = vmul.f32 %v709, %v715
  %722 = vrot.lane.b32.xlu0 %v710, 112
  %v723 = vpop.permute.xlu0 %722
  %724 = vrot.lane.b32.xlu0 %v711, 112
  %v725 = vpop.permute.xlu0 %724
  %v728 = vmul.f32 %v707, %v723
  %v729 = vmul.f32 %v709, %v725
  %732 = vrot.lane.b32.xlu0 %v728, 8
  %v733 = vpop.permute.xlu0 %732
  %734 = vrot.lane.b32.xlu0 %v729, 8
  %v735 = vpop.permute.xlu0 %734
  %v738 = vadd.f32 %v718, %v733
  %v739 = vadd.f32 %v719, %v735
  %v740 = vtanh.pop %v738
  %v741 = vtanh.pop %v739
  %744 = vrot.lane.b32.xlu0 %v740, 16
  %v745 = vpop.permute.xlu0 %744
  %746 = vrot.lane.b32.xlu0 %v741, 16
  %v747 = vpop.permute.xlu0 %746
  %v750 = vmul.f32 %v707, %v745
  %v751 = vmul.f32 %v709, %v747
  %v754 = vrot.slane %v750, 3
  %v755 = vrot.slane %v751, 2
  %v756 = vsel %vm337, %v755, %v754
  %757 = vrot.lane.b32.xlu0 %v756, 104
  %v758 = vpop.permute.xlu0 %757
  %v759 = vsel %vm206, %v758, 0
  %761 = vmatprep.subr.mxu0 0.0
  %762 = vmatpush1.msra.mxu0 %v205
  %763 = vmatprep.subr.mxu0 0.0
  %764 = vmatpush1.msra.mxu0 0.0
  %765 = vmatprep.subr.mxu0 0.0
  %766 = vmatpush1.msra.mxu0 0.0
  %767 = vmatprep.subr.mxu0 0.0
  %768 = vmatpush1.msra.mxu0 0.0
  %769 = vmatprep.subr.mxu0 0.0
  %770 = vmatpush1.msra.mxu0 0.0
  %771 = vmatprep.subr.mxu0 0.0
  %772 = vmatpush1.msra.mxu0 0.0
  %773 = vmatprep.subr.mxu0 0.0
  %774 = vmatpush1.msra.mxu0 0.0
  %775 = vmatprep.subr.mxu0 0.0
  %776 = vmatpush1.msra.mxu0 0.0
  %777 = vmatprep.subr.mxu0 0.0
  %778 = vmatpush1.msra.mxu0 0.0
  %779 = vmatprep.subr.mxu0 0.0
  %780 = vmatpush1.msra.mxu0 0.0
  %781 = vmatprep.subr.mxu0 0.0
  %782 = vmatpush1.msra.mxu0 0.0
  %783 = vmatprep.subr.mxu0 0.0
  %784 = vmatpush1.msra.mxu0 0.0
  %785 = vmatprep.subr.mxu0 0.0
  %786 = vmatpush1.msra.mxu0 0.0
  %787 = vmatprep.subr.mxu0 0.0
  %788 = vmatpush1.msra.mxu0 0.0
  %789 = vmatprep.subr.mxu0 0.0
  %790 = vmatpush1.msra.mxu0 0.0
  %791 = vmatprep.subr.mxu0 0.0
  %792 = vmatpush1.msra.mxu0 0.0
  %793 = vmatprep.subr.mxu0 0.0
  %794 = vmatpush1.msra.mxu0 0.0
  %795 = vmatprep.subr.mxu0 0.0
  %796 = vmatpush1.msra.mxu0 0.0
  %797 = vmatprep.subr.mxu0 0.0
  %798 = vmatpush1.msra.mxu0 0.0
  %799 = vmatprep.subr.mxu0 0.0
  %800 = vmatpush1.msra.mxu0 0.0
  %801 = vmatprep.subr.mxu0 0.0
  %802 = vmatpush1.msra.mxu0 0.0
  %803 = vmatprep.subr.mxu0 0.0
  %804 = vmatpush1.msra.mxu0 0.0
  %805 = vmatprep.subr.mxu0 0.0
  %806 = vmatpush1.msra.mxu0 0.0
  %807 = vmatprep.subr.mxu0 0.0
  %808 = vmatpush1.msra.mxu0 0.0
  %809 = vmatprep.subr.mxu0 0.0
  %810 = vmatpush1.msra.mxu0 0.0
  %811 = vmatprep.subr.mxu0 0.0
  %812 = vmatpush1.msra.mxu0 0.0
  %813 = vmatprep.subr.mxu0 0.0
  %814 = vmatpush1.msra.mxu0 0.0
  %815 = vmatprep.subr.mxu0 0.0
  %816 = vmatpush1.msra.mxu0 0.0
  %817 = vmatprep.subr.mxu0 0.0
  %818 = vmatpush1.msra.mxu0 0.0
  %819 = vmatprep.subr.mxu0 0.0
  %820 = vmatpush1.msra.mxu0 0.0
  %821 = vmatprep.subr.mxu0 0.0
  %822 = vmatpush1.msra.mxu0 0.0
  %823 = vmatprep.subr.mxu0 0.0
  %824 = vmatpush1.msra.mxu0 0.0
  %825 = vmatprep.mubr.f32.mxu0 0.0
  %826 = vmatmul.mubr.f32.gmra.mrb[0].mxu0 %v759
  %v827 = vpop.f32.mrb[0].mxu0
  %v828 = vadd.f32 0.0, %v827
  %v829 = vpop.f32.mrb[0].mxu0
  %830 = vdwg.mxu0
  %v832 = vrot.slane %v828, 4
  %v833 = vrot.slane %v828, 5
  %v836 = vadd.f32 %v203, %v832
  %v837 = vadd.f32 %v204, %v833
  %v838 = vxor.u32 %v836, 2147483648
  %v839 = vxor.u32 %v837, 2147483648
  %v840 = vmul.f32 %v838, 1.442695
  %v841 = vpow.pop %v840
  %v842 = vmul.f32 %v839, 1.442695
  %v843 = vpow.pop %v842
  %v844 = vadd.f32 %v841, 1.0
  %v845 = vadd.f32 %v843, 1.0
  %v846 = vrcp.pop %v844
  %v847 = vmul.f32 1.0, %v846
  %v848 = vrcp.pop %v845
  %v849 = vmul.f32 1.0, %v848
  %v850 = vtanh.pop %v836
  %v851 = vtanh.pop %v837
  %v854 = vrot.slane %v738, 7
  %v855 = vrot.slane %v739, 7
  %v858 = vmul.f32 %v847, %v854
  %v859 = vmul.f32 %v849, %v855
  %862 = vrot.lane.b32.xlu0 %v850, 112
  %v863 = vpop.permute.xlu0 %862
  %864 = vrot.lane.b32.xlu0 %v851, 112
  %v865 = vpop.permute.xlu0 %864
  %v868 = vmul.f32 %v847, %v863
  %v869 = vmul.f32 %v849, %v865
  %872 = vrot.lane.b32.xlu0 %v868, 8
  %v873 = vpop.permute.xlu0 %872
  %874 = vrot.lane.b32.xlu0 %v869, 8
  %v875 = vpop.permute.xlu0 %874
  %v878 = vadd.f32 %v858, %v873
  %v879 = vadd.f32 %v859, %v875
  %v880 = vtanh.pop %v878
  %v881 = vtanh.pop %v879
  %884 = vrot.lane.b32.xlu0 %v880, 16
  %v885 = vpop.permute.xlu0 %884
  %886 = vrot.lane.b32.xlu0 %v881, 16
  %v887 = vpop.permute.xlu0 %886
  %v890 = vmul.f32 %v847, %v885
  %v891 = vmul.f32 %v849, %v887
  %v894 = vrot.slane %v890, 4
  %v895 = vrot.slane %v891, 3
  %v896 = vsel %vm337, %v895, %v894
  %897 = vrot.lane.b32.xlu0 %v896, 104
  %v898 = vpop.permute.xlu0 %897
  %v899 = vsel %vm206, %v898, 0
  %901 = vmatprep.subr.mxu0 0.0
  %902 = vmatpush1.msra.mxu0 %v205
  %903 = vmatprep.subr.mxu0 0.0
  %904 = vmatpush1.msra.mxu0 0.0
  %905 = vmatprep.subr.mxu0 0.0
  %906 = vmatpush1.msra.mxu0 0.0
  %907 = vmatprep.subr.mxu0 0.0
  %908 = vmatpush1.msra.mxu0 0.0
  %909 = vmatprep.subr.mxu0 0.0
  %910 = vmatpush1.msra.mxu0 0.0
  %911 = vmatprep.subr.mxu0 0.0
  %912 = vmatpush1.msra.mxu0 0.0
  %913 = vmatprep.subr.mxu0 0.0
  %914 = vmatpush1.msra.mxu0 0.0
  %915 = vmatprep.subr.mxu0 0.0
  %916 = vmatpush1.msra.mxu0 0.0
  %917 = vmatprep.subr.mxu0 0.0
  %918 = vmatpush1.msra.mxu0 0.0
  %919 = vmatprep.subr.mxu0 0.0
  %920 = vmatpush1.msra.mxu0 0.0
  %921 = vmatprep.subr.mxu0 0.0
  %922 = vmatpush1.msra.mxu0 0.0
  %923 = vmatprep.subr.mxu0 0.0
  %924 = vmatpush1.msra.mxu0 0.0
  %925 = vmatprep.subr.mxu0 0.0
  %926 = vmatpush1.msra.mxu0 0.0
  %927 = vmatprep.subr.mxu0 0.0
  %928 = vmatpush1.msra.mxu0 0.0
  %929 = vmatprep.subr.mxu0 0.0
  %930 = vmatpush1.msra.mxu0 0.0
  %931 = vmatprep.subr.mxu0 0.0
  %932 = vmatpush1.msra.mxu0 0.0
  %933 = vmatprep.subr.mxu0 0.0
  %934 = vmatpush1.msra.mxu0 0.0
  %935 = vmatprep.subr.mxu0 0.0
  %936 = vmatpush1.msra.mxu0 0.0
  %937 = vmatprep.subr.mxu0 0.0
  %938 = vmatpush1.msra.mxu0 0.0
  %939 = vmatprep.subr.mxu0 0.0
  %940 = vmatpush1.msra.mxu0 0.0
  %941 = vmatprep.subr.mxu0 0.0
  %942 = vmatpush1.msra.mxu0 0.0
  %943 = vmatprep.subr.mxu0 0.0
  %944 = vmatpush1.msra.mxu0 0.0
  %945 = vmatprep.subr.mxu0 0.0
  %946 = vmatpush1.msra.mxu0 0.0
  %947 = vmatprep.subr.mxu0 0.0
  %948 = vmatpush1.msra.mxu0 0.0
  %949 = vmatprep.subr.mxu0 0.0
  %950 = vmatpush1.msra.mxu0 0.0
  %951 = vmatprep.subr.mxu0 0.0
  %952 = vmatpush1.msra.mxu0 0.0
  %953 = vmatprep.subr.mxu0 0.0
  %954 = vmatpush1.msra.mxu0 0.0
  %955 = vmatprep.subr.mxu0 0.0
  %956 = vmatpush1.msra.mxu0 0.0
  %957 = vmatprep.subr.mxu0 0.0
  %958 = vmatpush1.msra.mxu0 0.0
  %959 = vmatprep.subr.mxu0 0.0
  %960 = vmatpush1.msra.mxu0 0.0
  %961 = vmatprep.subr.mxu0 0.0
  %962 = vmatpush1.msra.mxu0 0.0
  %963 = vmatprep.subr.mxu0 0.0
  %964 = vmatpush1.msra.mxu0 0.0
  %965 = vmatprep.mubr.f32.mxu0 0.0
  %966 = vmatmul.mubr.f32.gmra.mrb[0].mxu0 %v899
  %v967 = vpop.f32.mrb[0].mxu0
  %v968 = vadd.f32 0.0, %v967
  %v969 = vpop.f32.mrb[0].mxu0
  %970 = vdwg.mxu0
  %v972 = vrot.slane %v968, 3
  %v973 = vrot.slane %v968, 4
  %v976 = vadd.f32 %v203, %v972
  %v977 = vadd.f32 %v204, %v973
  %v978 = vxor.u32 %v976, 2147483648
  %v979 = vxor.u32 %v977, 2147483648
  %v980 = vmul.f32 %v978, 1.442695
  %v981 = vpow.pop %v980
  %v982 = vmul.f32 %v979, 1.442695
  %v983 = vpow.pop %v982
  %v984 = vadd.f32 %v981, 1.0
  %v985 = vadd.f32 %v983, 1.0
  %v986 = vrcp.pop %v984
  %v987 = vmul.f32 1.0, %v986
  %v988 = vrcp.pop %v985
  %v989 = vmul.f32 1.0, %v988
  %v990 = vtanh.pop %v976
  %v991 = vtanh.pop %v977
  %v994 = vrot.slane %v878, 7
  %v995 = vrot.slane %v879, 7
  %v998 = vmul.f32 %v987, %v994
  %v999 = vmul.f32 %v989, %v995
  %1002 = vrot.lane.b32.xlu0 %v990, 112
  %v1003 = vpop.permute.xlu0 %1002
  %1004 = vrot.lane.b32.xlu0 %v991, 112
  %v1005 = vpop.permute.xlu0 %1004
  %v1008 = vmul.f32 %v987, %v1003
  %v1009 = vmul.f32 %v989, %v1005
  %1012 = vrot.lane.b32.xlu0 %v1008, 8
  %v1013 = vpop.permute.xlu0 %1012
  %1014 = vrot.lane.b32.xlu0 %v1009, 8
  %v1015 = vpop.permute.xlu0 %1014
  %v1018 = vadd.f32 %v998, %v1013
  %v1019 = vadd.f32 %v999, %v1015
  %v1020 = vtanh.pop %v1018
  %v1021 = vtanh.pop %v1019
  %1024 = vrot.lane.b32.xlu0 %v1020, 16
  %v1025 = vpop.permute.xlu0 %1024
  %1026 = vrot.lane.b32.xlu0 %v1021, 16
  %v1027 = vpop.permute.xlu0 %1026
  %v1030 = vmul.f32 %v987, %v1025
  %v1031 = vmul.f32 %v989, %v1027
  %v1034 = vrot.slane %v1030, 5
  %v1035 = vrot.slane %v1031, 4
  %v1036 = vsel %vm337, %v1035, %v1034
  %1037 = vrot.lane.b32.xlu0 %v1036, 104
  %v1038 = vpop.permute.xlu0 %1037
  %v1039 = vsel %vm206, %v1038, 0
  %1041 = vmatprep.subr.mxu0 0.0
  %1042 = vmatpush1.msra.mxu0 %v205
  %1043 = vmatprep.subr.mxu0 0.0
  %1044 = vmatpush1.msra.mxu0 0.0
  %1045 = vmatprep.subr.mxu0 0.0
  %1046 = vmatpush1.msra.mxu0 0.0
  %1047 = vmatprep.subr.mxu0 0.0
  %1048 = vmatpush1.msra.mxu0 0.0
  %1049 = vmatprep.subr.mxu0 0.0
  %1050 = vmatpush1.msra.mxu0 0.0
  %1051 = vmatprep.subr.mxu0 0.0
  %1052 = vmatpush1.msra.mxu0 0.0
  %1053 = vmatprep.subr.mxu0 0.0
  %1054 = vmatpush1.msra.mxu0 0.0
  %1055 = vmatprep.subr.mxu0 0.0
  %1056 = vmatpush1.msra.mxu0 0.0
  %1057 = vmatprep.subr.mxu0 0.0
  %1058 = vmatpush1.msra.mxu0 0.0
  %1059 = vmatprep.subr.mxu0 0.0
  %1060 = vmatpush1.msra.mxu0 0.0
  %1061 = vmatprep.subr.mxu0 0.0
  %1062 = vmatpush1.msra.mxu0 0.0
  %1063 = vmatprep.subr.mxu0 0.0
  %1064 = vmatpush1.msra.mxu0 0.0
  %1065 = vmatprep.subr.mxu0 0.0
  %1066 = vmatpush1.msra.mxu0 0.0
  %1067 = vmatprep.subr.mxu0 0.0
  %1068 = vmatpush1.msra.mxu0 0.0
  %1069 = vmatprep.subr.mxu0 0.0
  %1070 = vmatpush1.msra.mxu0 0.0
  %1071 = vmatprep.subr.mxu0 0.0
  %1072 = vmatpush1.msra.mxu0 0.0
  %1073 = vmatprep.subr.mxu0 0.0
  %1074 = vmatpush1.msra.mxu0 0.0
  %1075 = vmatprep.subr.mxu0 0.0
  %1076 = vmatpush1.msra.mxu0 0.0
  %1077 = vmatprep.subr.mxu0 0.0
  %1078 = vmatpush1.msra.mxu0 0.0
  %1079 = vmatprep.subr.mxu0 0.0
  %1080 = vmatpush1.msra.mxu0 0.0
  %1081 = vmatprep.subr.mxu0 0.0
  %1082 = vmatpush1.msra.mxu0 0.0
  %1083 = vmatprep.subr.mxu0 0.0
  %1084 = vmatpush1.msra.mxu0 0.0
  %1085 = vmatprep.subr.mxu0 0.0
  %1086 = vmatpush1.msra.mxu0 0.0
  %1087 = vmatprep.subr.mxu0 0.0
  %1088 = vmatpush1.msra.mxu0 0.0
  %1089 = vmatprep.subr.mxu0 0.0
  %1090 = vmatpush1.msra.mxu0 0.0
  %1091 = vmatprep.subr.mxu0 0.0
  %1092 = vmatpush1.msra.mxu0 0.0
  %1093 = vmatprep.subr.mxu0 0.0
  %1094 = vmatpush1.msra.mxu0 0.0
  %1095 = vmatprep.subr.mxu0 0.0
  %1096 = vmatpush1.msra.mxu0 0.0
  %1097 = vmatprep.subr.mxu0 0.0
  %1098 = vmatpush1.msra.mxu0 0.0
  %1099 = vmatprep.subr.mxu0 0.0
  %1100 = vmatpush1.msra.mxu0 0.0
  %1101 = vmatprep.subr.mxu0 0.0
  %1102 = vmatpush1.msra.mxu0 0.0
  %1103 = vmatprep.subr.mxu0 0.0
  %1104 = vmatpush1.msra.mxu0 0.0
  %1105 = vmatprep.mubr.f32.mxu0 0.0
  %1106 = vmatmul.mubr.f32.gmra.mrb[0].mxu0 %v1039
  %v1107 = vpop.f32.mrb[0].mxu0
  %v1108 = vadd.f32 0.0, %v1107
  %v1109 = vpop.f32.mrb[0].mxu0
  %1110 = vdwg.mxu0
  %v1112 = vrot.slane %v1108, 2
  %v1113 = vrot.slane %v1108, 3
  %v1116 = vadd.f32 %v203, %v1112
  %v1117 = vadd.f32 %v204, %v1113
  %v1118 = vxor.u32 %v1116, 2147483648
  %v1119 = vxor.u32 %v1117, 2147483648
  %v1120 = vmul.f32 %v1118, 1.442695
  %v1121 = vpow.pop %v1120
  %v1122 = vmul.f32 %v1119, 1.442695
  %v1123 = vpow.pop %v1122
  %v1124 = vadd.f32 %v1121, 1.0
  %v1125 = vadd.f32 %v1123, 1.0
  %v1126 = vrcp.pop %v1124
  %v1127 = vmul.f32 1.0, %v1126
  %v1128 = vrcp.pop %v1125
  %v1129 = vmul.f32 1.0, %v1128
  %v1130 = vtanh.pop %v1116
  %v1131 = vtanh.pop %v1117
  %v1134 = vrot.slane %v1018, 7
  %v1135 = vrot.slane %v1019, 7
  %v1138 = vmul.f32 %v1127, %v1134
  %v1139 = vmul.f32 %v1129, %v1135
  %1142 = vrot.lane.b32.xlu0 %v1130, 112
  %v1143 = vpop.permute.xlu0 %1142
  %1144 = vrot.lane.b32.xlu0 %v1131, 112
  %v1145 = vpop.permute.xlu0 %1144
  %v1148 = vmul.f32 %v1127, %v1143
  %v1149 = vmul.f32 %v1129, %v1145
  %1152 = vrot.lane.b32.xlu0 %v1148, 8
  %v1153 = vpop.permute.xlu0 %1152
  %1154 = vrot.lane.b32.xlu0 %v1149, 8
  %v1155 = vpop.permute.xlu0 %1154
  %v1158 = vadd.f32 %v1138, %v1153
  %v1159 = vadd.f32 %v1139, %v1155
  %v1160 = vtanh.pop %v1158
  %v1161 = vtanh.pop %v1159
  %1164 = vrot.lane.b32.xlu0 %v1160, 16
  %v1165 = vpop.permute.xlu0 %1164
  %1166 = vrot.lane.b32.xlu0 %v1161, 16
  %v1167 = vpop.permute.xlu0 %1166
  %v1170 = vmul.f32 %v1127, %v1165
  %v1171 = vmul.f32 %v1129, %v1167
  %v1174 = vrot.slane %v1170, 6
  %v1175 = vrot.slane %v1171, 5
  %v1176 = vsel %vm337, %v1175, %v1174
  %1177 = vrot.lane.b32.xlu0 %v1176, 104
  %v1178 = vpop.permute.xlu0 %1177
  %v1179 = vsel %vm206, %v1178, 0
  %1181 = vmatprep.subr.mxu0 0.0
  %1182 = vmatpush1.msra.mxu0 %v205
  %1183 = vmatprep.subr.mxu0 0.0
  %1184 = vmatpush1.msra.mxu0 0.0
  %1185 = vmatprep.subr.mxu0 0.0
  %1186 = vmatpush1.msra.mxu0 0.0
  %1187 = vmatprep.subr.mxu0 0.0
  %1188 = vmatpush1.msra.mxu0 0.0
  %1189 = vmatprep.subr.mxu0 0.0
  %1190 = vmatpush1.msra.mxu0 0.0
  %1191 = vmatprep.subr.mxu0 0.0
  %1192 = vmatpush1.msra.mxu0 0.0
  %1193 = vmatprep.subr.mxu0 0.0
  %1194 = vmatpush1.msra.mxu0 0.0
  %1195 = vmatprep.subr.mxu0 0.0
  %1196 = vmatpush1.msra.mxu0 0.0
  %1197 = vmatprep.subr.mxu0 0.0
  %1198 = vmatpush1.msra.mxu0 0.0
  %1199 = vmatprep.subr.mxu0 0.0
  %1200 = vmatpush1.msra.mxu0 0.0
  %1201 = vmatprep.subr.mxu0 0.0
  %1202 = vmatpush1.msra.mxu0 0.0
  %1203 = vmatprep.subr.mxu0 0.0
  %1204 = vmatpush1.msra.mxu0 0.0
  %1205 = vmatprep.subr.mxu0 0.0
  %1206 = vmatpush1.msra.mxu0 0.0
  %1207 = vmatprep.subr.mxu0 0.0
  %1208 = vmatpush1.msra.mxu0 0.0
  %1209 = vmatprep.subr.mxu0 0.0
  %1210 = vmatpush1.msra.mxu0 0.0
  %1211 = vmatprep.subr.mxu0 0.0
  %1212 = vmatpush1.msra.mxu0 0.0
  %1213 = vmatprep.subr.mxu0 0.0
  %1214 = vmatpush1.msra.mxu0 0.0
  %1215 = vmatprep.subr.mxu0 0.0
  %1216 = vmatpush1.msra.mxu0 0.0
  %1217 = vmatprep.subr.mxu0 0.0
  %1218 = vmatpush1.msra.mxu0 0.0
  %1219 = vmatprep.subr.mxu0 0.0
  %1220 = vmatpush1.msra.mxu0 0.0
  %1221 = vmatprep.subr.mxu0 0.0
  %1222 = vmatpush1.msra.mxu0 0.0
  %1223 = vmatprep.subr.mxu0 0.0
  %1224 = vmatpush1.msra.mxu0 0.0
  %1225 = vmatprep.subr.mxu0 0.0
  %1226 = vmatpush1.msra.mxu0 0.0
  %1227 = vmatprep.subr.mxu0 0.0
  %1228 = vmatpush1.msra.mxu0 0.0
  %1229 = vmatprep.subr.mxu0 0.0
  %1230 = vmatpush1.msra.mxu0 0.0
  %1231 = vmatprep.subr.mxu0 0.0
  %1232 = vmatpush1.msra.mxu0 0.0
  %1233 = vmatprep.subr.mxu0 0.0
  %1234 = vmatpush1.msra.mxu0 0.0
  %1235 = vmatprep.subr.mxu0 0.0
  %1236 = vmatpush1.msra.mxu0 0.0
  %1237 = vmatprep.subr.mxu0 0.0
  %1238 = vmatpush1.msra.mxu0 0.0
  %1239 = vmatprep.subr.mxu0 0.0
  %1240 = vmatpush1.msra.mxu0 0.0
  %1241 = vmatprep.subr.mxu0 0.0
  %1242 = vmatpush1.msra.mxu0 0.0
  %1243 = vmatprep.subr.mxu0 0.0
  %1244 = vmatpush1.msra.mxu0 0.0
  %1245 = vmatprep.mubr.f32.mxu0 0.0
  %1246 = vmatmul.mubr.f32.gmra.mrb[0].mxu0 %v1179
  %v1247 = vpop.f32.mrb[0].mxu0
  %v1248 = vadd.f32 0.0, %v1247
  %v1249 = vpop.f32.mrb[0].mxu0
  %1250 = vdwg.mxu0
  %v1252 = vrot.slane %v1248, 1
  %v1253 = vrot.slane %v1248, 2
  %v1256 = vadd.f32 %v203, %v1252
  %v1257 = vadd.f32 %v204, %v1253
  %v1258 = vxor.u32 %v1256, 2147483648
  %v1259 = vxor.u32 %v1257, 2147483648
  %v1260 = vmul.f32 %v1258, 1.442695
  %v1261 = vpow.pop %v1260
  %v1262 = vmul.f32 %v1259, 1.442695
  %v1263 = vpow.pop %v1262
  %v1264 = vadd.f32 %v1261, 1.0
  %v1265 = vadd.f32 %v1263, 1.0
  %v1266 = vrcp.pop %v1264
  %v1267 = vmul.f32 1.0, %v1266
  %v1268 = vrcp.pop %v1265
  %v1269 = vmul.f32 1.0, %v1268
  %v1270 = vtanh.pop %v1256
  %v1271 = vtanh.pop %v1257
  %v1274 = vrot.slane %v1158, 7
  %v1275 = vrot.slane %v1159, 7
  %v1278 = vmul.f32 %v1267, %v1274
  %v1279 = vmul.f32 %v1269, %v1275
  %1282 = vrot.lane.b32.xlu0 %v1270, 112
  %v1283 = vpop.permute.xlu0 %1282
  %1284 = vrot.lane.b32.xlu0 %v1271, 112
  %v1285 = vpop.permute.xlu0 %1284
  %v1288 = vmul.f32 %v1267, %v1283
  %v1289 = vmul.f32 %v1269, %v1285
  %1292 = vrot.lane.b32.xlu0 %v1288, 8
  %v1293 = vpop.permute.xlu0 %1292
  %1294 = vrot.lane.b32.xlu0 %v1289, 8
  %v1295 = vpop.permute.xlu0 %1294
  %v1298 = vadd.f32 %v1278, %v1293
  %v1299 = vadd.f32 %v1279, %v1295
  %v1300 = vtanh.pop %v1298
  %v1301 = vtanh.pop %v1299
  %1304 = vrot.lane.b32.xlu0 %v1300, 16
  %v1305 = vpop.permute.xlu0 %1304
  %1306 = vrot.lane.b32.xlu0 %v1301, 16
  %v1307 = vpop.permute.xlu0 %1306
  %v1310 = vmul.f32 %v1267, %v1305
  %v1311 = vmul.f32 %v1269, %v1307
  %v1312 = vld [vmem:[%s4] sm:$0xff]
  %v1313 = vld [vmem:[%s4 + $0x8] sm:$0x1]
  %v1314 = vlaneseq
  %v1315 = vshrl.u32 %v1314, 7
  %v1316 = vsub.s32 0, %v1315
  %v1317 = vrot.slane %v1313, %v1316
  %v1320 = vrot.slane %v1310, 7
  %v1321 = vrot.slane %v1311, 6
  %v1322 = vsel %vm337, %v1321, %v1320
  %1323 = vrot.lane.b32.xlu0 %v1322, 104
  %v1324 = vpop.permute.xlu0 %1323
  %v1325 = vsel %vm206, %v1324, 0
  %1327 = vmatprep.subr.mxu0 0.0
  %1328 = vmatpush1.msra.mxu0 %v1312
  %1329 = vmatprep.subr.mxu0 0.0
  %1330 = vmatpush1.msra.mxu0 0.0
  %1331 = vmatprep.subr.mxu0 0.0
  %1332 = vmatpush1.msra.mxu0 0.0
  %1333 = vmatprep.subr.mxu0 0.0
  %1334 = vmatpush1.msra.mxu0 0.0
  %1335 = vmatprep.subr.mxu0 0.0
  %1336 = vmatpush1.msra.mxu0 0.0
  %1337 = vmatprep.subr.mxu0 0.0
  %1338 = vmatpush1.msra.mxu0 0.0
  %1339 = vmatprep.subr.mxu0 0.0
  %1340 = vmatpush1.msra.mxu0 0.0
  %1341 = vmatprep.subr.mxu0 0.0
  %1342 = vmatpush1.msra.mxu0 0.0
  %1343 = vmatprep.subr.mxu0 0.0
  %1344 = vmatpush1.msra.mxu0 0.0
  %1345 = vmatprep.subr.mxu0 0.0
  %1346 = vmatpush1.msra.mxu0 0.0
  %1347 = vmatprep.subr.mxu0 0.0
  %1348 = vmatpush1.msra.mxu0 0.0
  %1349 = vmatprep.subr.mxu0 0.0
  %1350 = vmatpush1.msra.mxu0 0.0
  %1351 = vmatprep.subr.mxu0 0.0
  %1352 = vmatpush1.msra.mxu0 0.0
  %1353 = vmatprep.subr.mxu0 0.0
  %1354 = vmatpush1.msra.mxu0 0.0
  %1355 = vmatprep.subr.mxu0 0.0
  %1356 = vmatpush1.msra.mxu0 0.0
  %1357 = vmatprep.subr.mxu0 0.0
  %1358 = vmatpush1.msra.mxu0 0.0
  %1359 = vmatprep.subr.mxu0 0.0
  %1360 = vmatpush1.msra.mxu0 0.0
  %1361 = vmatprep.subr.mxu0 0.0
  %1362 = vmatpush1.msra.mxu0 0.0
  %1363 = vmatprep.subr.mxu0 0.0
  %1364 = vmatpush1.msra.mxu0 0.0
  %1365 = vmatprep.subr.mxu0 0.0
  %1366 = vmatpush1.msra.mxu0 0.0
  %1367 = vmatprep.subr.mxu0 0.0
  %1368 = vmatpush1.msra.mxu0 0.0
  %1369 = vmatprep.subr.mxu0 0.0
  %1370 = vmatpush1.msra.mxu0 0.0
  %1371 = vmatprep.subr.mxu0 0.0
  %1372 = vmatpush1.msra.mxu0 0.0
  %1373 = vmatprep.subr.mxu0 0.0
  %1374 = vmatpush1.msra.mxu0 0.0
  %1375 = vmatprep.subr.mxu0 0.0
  %1376 = vmatpush1.msra.mxu0 0.0
  %1377 = vmatprep.subr.mxu0 0.0
  %1378 = vmatpush1.msra.mxu0 0.0
  %1379 = vmatprep.subr.mxu0 0.0
  %1380 = vmatpush1.msra.mxu0 0.0
  %1381 = vmatprep.subr.mxu0 0.0
  %1382 = vmatpush1.msra.mxu0 0.0
  %1383 = vmatprep.subr.mxu0 0.0
  %1384 = vmatpush1.msra.mxu0 0.0
  %1385 = vmatprep.subr.mxu0 0.0
  %1386 = vmatpush1.msra.mxu0 0.0
  %1387 = vmatprep.subr.mxu0 0.0
  %1388 = vmatpush1.msra.mxu0 0.0
  %1389 = vmatprep.subr.mxu0 0.0
  %1390 = vmatpush1.msra.mxu0 0.0
  %1391 = vmatprep.mubr.f32.mxu0 0.0
  %1392 = vmatmul.mubr.f32.gmra.mrb[0].mxu0 %v1325
  %v1393 = vpop.f32.mrb[0].mxu0
  %v1394 = vadd.f32 %v1317, %v1393
  %v1395 = vpop.f32.mrb[0].mxu0
  %1396 = vdwg.mxu0
  %v1397 = vld [vmem:[%s3] sm:$0xff]
  %v1398 = vld [vmem:[%s3 + $0x8] sm:$0xff]
  %v1399 = vrot.slane %v23, 7
  %v1400 = vrot.slane %v24, 6
  %v1401 = vsel %vm337, %v1400, %v1399
  %v1402 = vsel %vm116, %v1401, 0
  %1404 = vmatprep.subr.mxu0 0.0
  %1405 = vmatpush1.msra.mxu0 %v1397
  %1406 = vmatprep.subr.mxu0 0.0
  %1407 = vmatpush1.msra.mxu0 %v1398
  %1408 = vmatprep.subr.mxu0 0.0
  %1409 = vmatpush1.msra.mxu0 0.0
  %1410 = vmatprep.subr.mxu0 0.0
  %1411 = vmatpush1.msra.mxu0 0.0
  %1412 = vmatprep.subr.mxu0 0.0
  %1413 = vmatpush1.msra.mxu0 0.0
  %1414 = vmatprep.subr.mxu0 0.0
  %1415 = vmatpush1.msra.mxu0 0.0
  %1416 = vmatprep.subr.mxu0 0.0
  %1417 = vmatpush1.msra.mxu0 0.0
  %1418 = vmatprep.subr.mxu0 0.0
  %1419 = vmatpush1.msra.mxu0 0.0
  %1420 = vmatprep.subr.mxu0 0.0
  %1421 = vmatpush1.msra.mxu0 0.0
  %1422 = vmatprep.subr.mxu0 0.0
  %1423 = vmatpush1.msra.mxu0 0.0
  %1424 = vmatprep.subr.mxu0 0.0
  %1425 = vmatpush1.msra.mxu0 0.0
  %1426 = vmatprep.subr.mxu0 0.0
  %1427 = vmatpush1.msra.mxu0 0.0
  %1428 = vmatprep.subr.mxu0 0.0
  %1429 = vmatpush1.msra.mxu0 0.0
  %1430 = vmatprep.subr.mxu0 0.0
  %1431 = vmatpush1.msra.mxu0 0.0
  %1432 = vmatprep.subr.mxu0 0.0
  %1433 = vmatpush1.msra.mxu0 0.0
  %1434 = vmatprep.subr.mxu0 0.0
  %1435 = vmatpush1.msra.mxu0 0.0
  %1436 = vmatprep.subr.mxu0 0.0
  %1437 = vmatpush1.msra.mxu0 0.0
  %1438 = vmatprep.subr.mxu0 0.0
  %1439 = vmatpush1.msra.mxu0 0.0
  %1440 = vmatprep.subr.mxu0 0.0
  %1441 = vmatpush1.msra.mxu0 0.0
  %1442 = vmatprep.subr.mxu0 0.0
  %1443 = vmatpush1.msra.mxu0 0.0
  %1444 = vmatprep.subr.mxu0 0.0
  %1445 = vmatpush1.msra.mxu0 0.0
  %1446 = vmatprep.subr.mxu0 0.0
  %1447 = vmatpush1.msra.mxu0 0.0
  %1448 = vmatprep.subr.mxu0 0.0
  %1449 = vmatpush1.msra.mxu0 0.0
  %1450 = vmatprep.subr.mxu0 0.0
  %1451 = vmatpush1.msra.mxu0 0.0
  %1452 = vmatprep.subr.mxu0 0.0
  %1453 = vmatpush1.msra.mxu0 0.0
  %1454 = vmatprep.subr.mxu0 0.0
  %1455 = vmatpush1.msra.mxu0 0.0
  %1456 = vmatprep.subr.mxu0 0.0
  %1457 = vmatpush1.msra.mxu0 0.0
  %1458 = vmatprep.subr.mxu0 0.0
  %1459 = vmatpush1.msra.mxu0 0.0
  %1460 = vmatprep.subr.mxu0 0.0
  %1461 = vmatpush1.msra.mxu0 0.0
  %1462 = vmatprep.subr.mxu0 0.0
  %1463 = vmatpush1.msra.mxu0 0.0
  %1464 = vmatprep.subr.mxu0 0.0
  %1465 = vmatpush1.msra.mxu0 0.0
  %1466 = vmatprep.subr.mxu0 0.0
  %1467 = vmatpush1.msra.mxu0 0.0
  %1468 = vmatprep.mubr.f32.mxu0 0.0
  %1469 = vmatmul.mubr.f32.gmra.mrb[0].mxu0 %v1402
  %v1470 = vpop.f32.mrb[0].mxu0
  %v1471 = vadd.f32 %v1394, %v1470
  %v1472 = vpop.f32.mrb[0].mxu0
  %1473 = vdwg.mxu0
  %v1474 = vmax.f32 %v1471, 0.0
  %v1475 = vld [vmem:[%s3 + $0x40] sm:$0xff]
  %v1476 = vld [vmem:[%s3 + $0x48] sm:$0xff]
  %v1477 = vld [vmem:[%s3 + $0x50] sm:$0xff]
  %v1478 = vld [vmem:[%s3 + $0x58] sm:$0xff]
  %v1479 = vld [vmem:[%s3 + $0x140] sm:$0x1]
  %v1480 = vlaneseq
  %v1481 = vshrl.u32 %v1480, 7
  %v1482 = vsub.s32 0, %v1481
  %v1483 = vrot.slane %v1479, %v1482
  %vm1484 = vcmask 261120
  %v1486 = vsel %vm1484, %v1474, 0
  %1488 = vmatprep.subr.mxu0 0.0
  %1489 = vmatpush1.msra.mxu0 %v1475
  %1490 = vmatprep.subr.mxu0 0.0
  %1491 = vmatpush1.msra.mxu0 %v1476
  %1492 = vmatprep.subr.mxu0 0.0
  %1493 = vmatpush1.msra.mxu0 %v1477
  %1494 = vmatprep.subr.mxu0 0.0
  %1495 = vmatpush1.msra.mxu0 %v1478
  %1496 = vmatprep.subr.mxu0 0.0
  %1497 = vmatpush1.msra.mxu0 0.0
  %1498 = vmatprep.subr.mxu0 0.0
  %1499 = vmatpush1.msra.mxu0 0.0
  %1500 = vmatprep.subr.mxu0 0.0
  %1501 = vmatpush1.msra.mxu0 0.0
  %1502 = vmatprep.subr.mxu0 0.0
  %1503 = vmatpush1.msra.mxu0 0.0
  %1504 = vmatprep.subr.mxu0 0.0
  %1505 = vmatpush1.msra.mxu0 0.0
  %1506 = vmatprep.subr.mxu0 0.0
  %1507 = vmatpush1.msra.mxu0 0.0
  %1508 = vmatprep.subr.mxu0 0.0
  %1509 = vmatpush1.msra.mxu0 0.0
  %1510 = vmatprep.subr.mxu0 0.0
  %1511 = vmatpush1.msra.mxu0 0.0
  %1512 = vmatprep.subr.mxu0 0.0
  %1513 = vmatpush1.msra.mxu0 0.0
  %1514 = vmatprep.subr.mxu0 0.0
  %1515 = vmatpush1.msra.mxu0 0.0
  %1516 = vmatprep.subr.mxu0 0.0
  %1517 = vmatpush1.msra.mxu0 0.0
  %1518 = vmatprep.subr.mxu0 0.0
  %1519 = vmatpush1.msra.mxu0 0.0
  %1520 = vmatprep.subr.mxu0 0.0
  %1521 = vmatpush1.msra.mxu0 0.0
  %1522 = vmatprep.subr.mxu0 0.0
  %1523 = vmatpush1.msra.mxu0 0.0
  %1524 = vmatprep.subr.mxu0 0.0
  %1525 = vmatpush1.msra.mxu0 0.0
  %1526 = vmatprep.subr.mxu0 0.0
  %1527 = vmatpush1.msra.mxu0 0.0
  %1528 = vmatprep.subr.mxu0 0.0
  %1529 = vmatpush1.msra.mxu0 0.0
  %1530 = vmatprep.subr.mxu0 0.0
  %1531 = vmatpush1.msra.mxu0 0.0
  %1532 = vmatprep.subr.mxu0 0.0
  %1533 = vmatpush1.msra.mxu0 0.0
  %1534 = vmatprep.subr.mxu0 0.0
  %1535 = vmatpush1.msra.mxu0 0.0
  %1536 = vmatprep.subr.mxu0 0.0
  %1537 = vmatpush1.msra.mxu0 0.0
  %1538 = vmatprep.subr.mxu0 0.0
  %1539 = vmatpush1.msra.mxu0 0.0
  %1540 = vmatprep.subr.mxu0 0.0
  %1541 = vmatpush1.msra.mxu0 0.0
  %1542 = vmatprep.subr.mxu0 0.0
  %1543 = vmatpush1.msra.mxu0 0.0
  %1544 = vmatprep.subr.mxu0 0.0
  %1545 = vmatpush1.msra.mxu0 0.0
  %1546 = vmatprep.subr.mxu0 0.0
  %1547 = vmatpush1.msra.mxu0 0.0
  %1548 = vmatprep.subr.mxu0 0.0
  %1549 = vmatpush1.msra.mxu0 0.0
  %1550 = vmatprep.subr.mxu0 0.0
  %1551 = vmatpush1.msra.mxu0 0.0
  %1552 = vmatprep.mubr.f32.mxu0 0.0
  %1553 = vmatmul.mubr.f32.gmra.mrb[0].mxu0 %v1486
  %v1554 = vpop.f32.mrb[0].mxu0
  %v1555 = vadd.f32 %v1483, %v1554
  %v1556 = vpop.f32.mrb[0].mxu0
  %1557 = vdwg.mxu0
  %v1558 = vmax.f32 %v1555, 0.0
  %v1559 = vld [vmem:[%s3 + $0x60] sm:$0xff]
  %v1560 = vld [vmem:[%s3 + $0x68] sm:$0xff]
  %v1561 = vld [vmem:[%s3 + $0x70] sm:$0xff]
  %v1562 = vld [vmem:[%s3 + $0x78] sm:$0xff]
  %v1563 = vld [vmem:[%s3 + $0x141] sm:$0x1]
  %v1564 = vlaneseq
  %v1565 = vshrl.u32 %v1564, 7
  %v1566 = vsub.s32 0, %v1565
  %v1567 = vrot.slane %v1563, %v1566
  %v1569 = vsel %vm1484, %v1558, 0
  %1571 = vmatprep.subr.mxu0 0.0
  %1572 = vmatpush1.msra.mxu0 %v1559
  %1573 = vmatprep.subr.mxu0 0.0
  %1574 = vmatpush1.msra.mxu0 %v1560
  %1575 = vmatprep.subr.mxu0 0.0
  %1576 = vmatpush1.msra.mxu0 %v1561
  %1577 = vmatprep.subr.mxu0 0.0
  %1578 = vmatpush1.msra.mxu0 %v1562
  %1579 = vmatprep.subr.mxu0 0.0
  %1580 = vmatpush1.msra.mxu0 0.0
  %1581 = vmatprep.subr.mxu0 0.0
  %1582 = vmatpush1.msra.mxu0 0.0
  %1583 = vmatprep.subr.mxu0 0.0
  %1584 = vmatpush1.msra.mxu0 0.0
  %1585 = vmatprep.subr.mxu0 0.0
  %1586 = vmatpush1.msra.mxu0 0.0
  %1587 = vmatprep.subr.mxu0 0.0
  %1588 = vmatpush1.msra.mxu0 0.0
  %1589 = vmatprep.subr.mxu0 0.0
  %1590 = vmatpush1.msra.mxu0 0.0
  %1591 = vmatprep.subr.mxu0 0.0
  %1592 = vmatpush1.msra.mxu0 0.0
  %1593 = vmatprep.subr.mxu0 0.0
  %1594 = vmatpush1.msra.mxu0 0.0
  %1595 = vmatprep.subr.mxu0 0.0
  %1596 = vmatpush1.msra.mxu0 0.0
  %1597 = vmatprep.subr.mxu0 0.0
  %1598 = vmatpush1.msra.mxu0 0.0
  %1599 = vmatprep.subr.mxu0 0.0
  %1600 = vmatpush1.msra.mxu0 0.0
  %1601 = vmatprep.subr.mxu0 0.0
  %1602 = vmatpush1.msra.mxu0 0.0
  %1603 = vmatprep.subr.mxu0 0.0
  %1604 = vmatpush1.msra.mxu0 0.0
  %1605 = vmatprep.subr.mxu0 0.0
  %1606 = vmatpush1.msra.mxu0 0.0
  %1607 = vmatprep.subr.mxu0 0.0
  %1608 = vmatpush1.msra.mxu0 0.0
  %1609 = vmatprep.subr.mxu0 0.0
  %1610 = vmatpush1.msra.mxu0 0.0
  %1611 = vmatprep.subr.mxu0 0.0
  %1612 = vmatpush1.msra.mxu0 0.0
  %1613 = vmatprep.subr.mxu0 0.0
  %1614 = vmatpush1.msra.mxu0 0.0
  %1615 = vmatprep.subr.mxu0 0.0
  %1616 = vmatpush1.msra.mxu0 0.0
  %1617 = vmatprep.subr.mxu0 0.0
  %1618 = vmatpush1.msra.mxu0 0.0
  %1619 = vmatprep.subr.mxu0 0.0
  %1620 = vmatpush1.msra.mxu0 0.0
  %1621 = vmatprep.subr.mxu0 0.0
  %1622 = vmatpush1.msra.mxu0 0.0
  %1623 = vmatprep.subr.mxu0 0.0
  %1624 = vmatpush1.msra.mxu0 0.0
  %1625 = vmatprep.subr.mxu0 0.0
  %1626 = vmatpush1.msra.mxu0 0.0
  %1627 = vmatprep.subr.mxu0 0.0
  %1628 = vmatpush1.msra.mxu0 0.0
  %1629 = vmatprep.subr.mxu0 0.0
  %1630 = vmatpush1.msra.mxu0 0.0
  %1631 = vmatprep.subr.mxu0 0.0
  %1632 = vmatpush1.msra.mxu0 0.0
  %1633 = vmatprep.subr.mxu0 0.0
  %1634 = vmatpush1.msra.mxu0 0.0
  %1635 = vmatprep.mubr.f32.mxu0 0.0
  %1636 = vmatmul.mubr.f32.gmra.mrb[0].mxu0 %v1569
  %v1637 = vpop.f32.mrb[0].mxu0
  %v1638 = vadd.f32 %v1567, %v1637
  %v1639 = vpop.f32.mrb[0].mxu0
  %1640 = vdwg.mxu0
  %v1641 = vmax.f32 %v1638, 0.0
  %v1642 = vld [vmem:[%s5] sm:$0xff]
  %v1643 = vld [vmem:[%s5 + $0x8] sm:$0xff]
  %v1644 = vld [vmem:[%s5 + $0x10] sm:$0xff]
  %v1645 = vld [vmem:[%s5 + $0x18] sm:$0xff]
  %v1646 = vld [vmem:[%s5 + $0x80] sm:$0x1]
  %v1647 = vlaneseq
  %v1648 = vshrl.u32 %v1647, 7
  %v1649 = vsub.s32 0, %v1648
  %v1650 = vrot.slane %v1646, %v1649
  %v1652 = vsel %vm1484, %v1641, 0
  %1654 = vmatprep.subr.mxu0 0.0
  %1655 = vmatpush1.msra.mxu0 %v1642
  %1656 = vmatprep.subr.mxu0 0.0
  %1657 = vmatpush1.msra.mxu0 %v1643
  %1658 = vmatprep.subr.mxu0 0.0
  %1659 = vmatpush1.msra.mxu0 %v1644
  %1660 = vmatprep.subr.mxu0 0.0
  %1661 = vmatpush1.msra.mxu0 %v1645
  %1662 = vmatprep.subr.mxu0 0.0
  %1663 = vmatpush1.msra.mxu0 0.0
  %1664 = vmatprep.subr.mxu0 0.0
  %1665 = vmatpush1.msra.mxu0 0.0
  %1666 = vmatprep.subr.mxu0 0.0
  %1667 = vmatpush1.msra.mxu0 0.0
  %1668 = vmatprep.subr.mxu0 0.0
  %1669 = vmatpush1.msra.mxu0 0.0
  %1670 = vmatprep.subr.mxu0 0.0
  %1671 = vmatpush1.msra.mxu0 0.0
  %1672 = vmatprep.subr.mxu0 0.0
  %1673 = vmatpush1.msra.mxu0 0.0
  %1674 = vmatprep.subr.mxu0 0.0
  %1675 = vmatpush1.msra.mxu0 0.0
  %1676 = vmatprep.subr.mxu0 0.0
  %1677 = vmatpush1.msra.mxu0 0.0
  %1678 = vmatprep.subr.mxu0 0.0
  %1679 = vmatpush1.msra.mxu0 0.0
  %1680 = vmatprep.subr.mxu0 0.0
  %1681 = vmatpush1.msra.mxu0 0.0
  %1682 = vmatprep.subr.mxu0 0.0
  %1683 = vmatpush1.msra.mxu0 0.0
  %1684 = vmatprep.subr.mxu0 0.0
  %1685 = vmatpush1.msra.mxu0 0.0
  %1686 = vmatprep.subr.mxu0 0.0
  %1687 = vmatpush1.msra.mxu0 0.0
  %1688 = vmatprep.subr.mxu0 0.0
  %1689 = vmatpush1.msra.mxu0 0.0
  %1690 = vmatprep.subr.mxu0 0.0
  %1691 = vmatpush1.msra.mxu0 0.0
  %1692 = vmatprep.subr.mxu0 0.0
  %1693 = vmatpush1.msra.mxu0 0.0
  %1694 = vmatprep.subr.mxu0 0.0
  %1695 = vmatpush1.msra.mxu0 0.0
  %1696 = vmatprep.subr.mxu0 0.0
  %1697 = vmatpush1.msra.mxu0 0.0
  %1698 = vmatprep.subr.mxu0 0.0
  %1699 = vmatpush1.msra.mxu0 0.0
  %1700 = vmatprep.subr.mxu0 0.0
  %1701 = vmatpush1.msra.mxu0 0.0
  %1702 = vmatprep.subr.mxu0 0.0
  %1703 = vmatpush1.msra.mxu0 0.0
  %1704 = vmatprep.subr.mxu0 0.0
  %1705 = vmatpush1.msra.mxu0 0.0
  %1706 = vmatprep.subr.mxu0 0.0
  %1707 = vmatpush1.msra.mxu0 0.0
  %1708 = vmatprep.subr.mxu0 0.0
  %1709 = vmatpush1.msra.mxu0 0.0
  %1710 = vmatprep.subr.mxu0 0.0
  %1711 = vmatpush1.msra.mxu0 0.0
  %1712 = vmatprep.subr.mxu0 0.0
  %1713 = vmatpush1.msra.mxu0 0.0
  %1714 = vmatprep.subr.mxu0 0.0
  %1715 = vmatpush1.msra.mxu0 0.0
  %1716 = vmatprep.subr.mxu0 0.0
  %1717 = vmatpush1.msra.mxu0 0.0
  %1718 = vmatprep.mubr.f32.mxu0 0.0
  %1719 = vmatmul.mubr.f32.gmra.mrb[0].mxu0 %v1652
  %v1720 = vpop.f32.mrb[0].mxu0
  %v1721 = vadd.f32 %v1650, %v1720
  %v1722 = vpop.f32.mrb[0].mxu0
  %1723 = vdwg.mxu0
  %v1725 = vrot.slane %v1721, 1
  %v1726 = vrot.slane %v1721, 2
  %v1729 = vadd.f32 %v23, %v1725
  %v1730 = vadd.f32 %v24, %v1726
  %v1731 = vld [vmem:[%s3 + $0x10] sm:$0xff]
  %v1732 = vld [vmem:[%s3 + $0x18] sm:$0xff]
  %v1735 = vrot.slane %v1729, 7
  %v1736 = vrot.slane %v1730, 6
  %v1737 = vsel %vm337, %v1736, %v1735
  %1739 = vrot.lane.b32.xlu0 %v1394, 96
  %v1740 = vpop.permute.xlu0 %1739
  %v1742 = vsel %vm116, %v1737, 0
  %1744 = vmatprep.subr.mxu0 0.0
  %1745 = vmatpush1.msra.mxu0 %v1731
  %1746 = vmatprep.subr.mxu0 0.0
  %1747 = vmatpush1.msra.mxu0 %v1732
  %1748 = vmatprep.subr.mxu0 0.0
  %1749 = vmatpush1.msra.mxu0 0.0
  %1750 = vmatprep.subr.mxu0 0.0
  %1751 = vmatpush1.msra.mxu0 0.0
  %1752 = vmatprep.subr.mxu0 0.0
  %1753 = vmatpush1.msra.mxu0 0.0
  %1754 = vmatprep.subr.mxu0 0.0
  %1755 = vmatpush1.msra.mxu0 0.0
  %1756 = vmatprep.subr.mxu0 0.0
  %1757 = vmatpush1.msra.mxu0 0.0
  %1758 = vmatprep.subr.mxu0 0.0
  %1759 = vmatpush1.msra.mxu0 0.0
  %1760 = vmatprep.subr.mxu0 0.0
  %1761 = vmatpush1.msra.mxu0 0.0
  %1762 = vmatprep.subr.mxu0 0.0
  %1763 = vmatpush1.msra.mxu0 0.0
  %1764 = vmatprep.subr.mxu0 0.0
  %1765 = vmatpush1.msra.mxu0 0.0
  %1766 = vmatprep.subr.mxu0 0.0
  %1767 = vmatpush1.msra.mxu0 0.0
  %1768 = vmatprep.subr.mxu0 0.0
  %1769 = vmatpush1.msra.mxu0 0.0
  %1770 = vmatprep.subr.mxu0 0.0
  %1771 = vmatpush1.msra.mxu0 0.0
  %1772 = vmatprep.subr.mxu0 0.0
  %1773 = vmatpush1.msra.mxu0 0.0
  %1774 = vmatprep.subr.mxu0 0.0
  %1775 = vmatpush1.msra.mxu0 0.0
  %1776 = vmatprep.subr.mxu0 0.0
  %1777 = vmatpush1.msra.mxu0 0.0
  %1778 = vmatprep.subr.mxu0 0.0
  %1779 = vmatpush1.msra.mxu0 0.0
  %1780 = vmatprep.subr.mxu0 0.0
  %1781 = vmatpush1.msra.mxu0 0.0
  %1782 = vmatprep.subr.mxu0 0.0
  %1783 = vmatpush1.msra.mxu0 0.0
  %1784 = vmatprep.subr.mxu0 0.0
  %1785 = vmatpush1.msra.mxu0 0.0
  %1786 = vmatprep.subr.mxu0 0.0
  %1787 = vmatpush1.msra.mxu0 0.0
  %1788 = vmatprep.subr.mxu0 0.0
  %1789 = vmatpush1.msra.mxu0 0.0
  %1790 = vmatprep.subr.mxu0 0.0
  %1791 = vmatpush1.msra.mxu0 0.0
  %1792 = vmatprep.subr.mxu0 0.0
  %1793 = vmatpush1.msra.mxu0 0.0
  %1794 = vmatprep.subr.mxu0 0.0
  %1795 = vmatpush1.msra.mxu0 0.0
  %1796 = vmatprep.subr.mxu0 0.0
  %1797 = vmatpush1.msra.mxu0 0.0
  %1798 = vmatprep.subr.mxu0 0.0
  %1799 = vmatpush1.msra.mxu0 0.0
  %1800 = vmatprep.subr.mxu0 0.0
  %1801 = vmatpush1.msra.mxu0 0.0
  %1802 = vmatprep.subr.mxu0 0.0
  %1803 = vmatpush1.msra.mxu0 0.0
  %1804 = vmatprep.subr.mxu0 0.0
  %1805 = vmatpush1.msra.mxu0 0.0
  %1806 = vmatprep.subr.mxu0 0.0
  %1807 = vmatpush1.msra.mxu0 0.0
  %1808 = vmatprep.mubr.f32.mxu0 0.0
  %1809 = vmatmul.mubr.f32.gmra.mrb[0].mxu0 %v1742
  %v1810 = vpop.f32.mrb[0].mxu0
  %v1811 = vadd.f32 %v1740, %v1810
  %v1812 = vpop.f32.mrb[0].mxu0
  %1813 = vdwg.mxu0
  %v1814 = vmax.f32 %v1811, 0.0
  %v1815 = vld [vmem:[%s3 + $0x80] sm:$0xff]
  %v1816 = vld [vmem:[%s3 + $0x88] sm:$0xff]
  %v1817 = vld [vmem:[%s3 + $0x90] sm:$0xff]
  %v1818 = vld [vmem:[%s3 + $0x98] sm:$0xff]
  %v1819 = vld [vmem:[%s3 + $0x142] sm:$0x1]
  %v1820 = vlaneseq
  %v1821 = vshrl.u32 %v1820, 7
  %v1822 = vsub.s32 0, %v1821
  %v1823 = vrot.slane %v1819, %v1822
  %v1825 = vsel %vm1484, %v1814, 0
  %1827 = vmatprep.subr.mxu0 0.0
  %1828 = vmatpush1.msra.mxu0 %v1815
  %1829 = vmatprep.subr.mxu0 0.0
  %1830 = vmatpush1.msra.mxu0 %v1816
  %1831 = vmatprep.subr.mxu0 0.0
  %1832 = vmatpush1.msra.mxu0 %v1817
  %1833 = vmatprep.subr.mxu0 0.0
  %1834 = vmatpush1.msra.mxu0 %v1818
  %1835 = vmatprep.subr.mxu0 0.0
  %1836 = vmatpush1.msra.mxu0 0.0
  %1837 = vmatprep.subr.mxu0 0.0
  %1838 = vmatpush1.msra.mxu0 0.0
  %1839 = vmatprep.subr.mxu0 0.0
  %1840 = vmatpush1.msra.mxu0 0.0
  %1841 = vmatprep.subr.mxu0 0.0
  %1842 = vmatpush1.msra.mxu0 0.0
  %1843 = vmatprep.subr.mxu0 0.0
  %1844 = vmatpush1.msra.mxu0 0.0
  %1845 = vmatprep.subr.mxu0 0.0
  %1846 = vmatpush1.msra.mxu0 0.0
  %1847 = vmatprep.subr.mxu0 0.0
  %1848 = vmatpush1.msra.mxu0 0.0
  %1849 = vmatprep.subr.mxu0 0.0
  %1850 = vmatpush1.msra.mxu0 0.0
  %1851 = vmatprep.subr.mxu0 0.0
  %1852 = vmatpush1.msra.mxu0 0.0
  %1853 = vmatprep.subr.mxu0 0.0
  %1854 = vmatpush1.msra.mxu0 0.0
  %1855 = vmatprep.subr.mxu0 0.0
  %1856 = vmatpush1.msra.mxu0 0.0
  %1857 = vmatprep.subr.mxu0 0.0
  %1858 = vmatpush1.msra.mxu0 0.0
  %1859 = vmatprep.subr.mxu0 0.0
  %1860 = vmatpush1.msra.mxu0 0.0
  %1861 = vmatprep.subr.mxu0 0.0
  %1862 = vmatpush1.msra.mxu0 0.0
  %1863 = vmatprep.subr.mxu0 0.0
  %1864 = vmatpush1.msra.mxu0 0.0
  %1865 = vmatprep.subr.mxu0 0.0
  %1866 = vmatpush1.msra.mxu0 0.0
  %1867 = vmatprep.subr.mxu0 0.0
  %1868 = vmatpush1.msra.mxu0 0.0
  %1869 = vmatprep.subr.mxu0 0.0
  %1870 = vmatpush1.msra.mxu0 0.0
  %1871 = vmatprep.subr.mxu0 0.0
  %1872 = vmatpush1.msra.mxu0 0.0
  %1873 = vmatprep.subr.mxu0 0.0
  %1874 = vmatpush1.msra.mxu0 0.0
  %1875 = vmatprep.subr.mxu0 0.0
  %1876 = vmatpush1.msra.mxu0 0.0
  %1877 = vmatprep.subr.mxu0 0.0
  %1878 = vmatpush1.msra.mxu0 0.0
  %1879 = vmatprep.subr.mxu0 0.0
  %1880 = vmatpush1.msra.mxu0 0.0
  %1881 = vmatprep.subr.mxu0 0.0
  %1882 = vmatpush1.msra.mxu0 0.0
  %1883 = vmatprep.subr.mxu0 0.0
  %1884 = vmatpush1.msra.mxu0 0.0
  %1885 = vmatprep.subr.mxu0 0.0
  %1886 = vmatpush1.msra.mxu0 0.0
  %1887 = vmatprep.subr.mxu0 0.0
  %1888 = vmatpush1.msra.mxu0 0.0
  %1889 = vmatprep.subr.mxu0 0.0
  %1890 = vmatpush1.msra.mxu0 0.0
  %1891 = vmatprep.mubr.f32.mxu0 0.0
  %1892 = vmatmul.mubr.f32.gmra.mrb[0].mxu0 %v1825
  %v1893 = vpop.f32.mrb[0].mxu0
  %v1894 = vadd.f32 %v1823, %v1893
  %v1895 = vpop.f32.mrb[0].mxu0
  %1896 = vdwg.mxu0
  %v1897 = vmax.f32 %v1894, 0.0
  %v1898 = vld [vmem:[%s3 + $0xa0] sm:$0xff]
  %v1899 = vld [vmem:[%s3 + $0xa8] sm:$0xff]
  %v1900 = vld [vmem:[%s3 + $0xb0] sm:$0xff]
  %v1901 = vld [vmem:[%s3 + $0xb8] sm:$0xff]
  %v1902 = vld [vmem:[%s3 + $0x143] sm:$0x1]
  %v1903 = vlaneseq
  %v1904 = vshrl.u32 %v1903, 7
  %v1905 = vsub.s32 0, %v1904
  %v1906 = vrot.slane %v1902, %v1905
  %v1908 = vsel %vm1484, %v1897, 0
  %1910 = vmatprep.subr.mxu0 0.0
  %1911 = vmatpush1.msra.mxu0 %v1898
  %1912 = vmatprep.subr.mxu0 0.0
  %1913 = vmatpush1.msra.mxu0 %v1899
  %1914 = vmatprep.subr.mxu0 0.0
  %1915 = vmatpush1.msra.mxu0 %v1900
  %1916 = vmatprep.subr.mxu0 0.0
  %1917 = vmatpush1.msra.mxu0 %v1901
  %1918 = vmatprep.subr.mxu0 0.0
  %1919 = vmatpush1.msra.mxu0 0.0
  %1920 = vmatprep.subr.mxu0 0.0
  %1921 = vmatpush1.msra.mxu0 0.0
  %1922 = vmatprep.subr.mxu0 0.0
  %1923 = vmatpush1.msra.mxu0 0.0
  %1924 = vmatprep.subr.mxu0 0.0
  %1925 = vmatpush1.msra.mxu0 0.0
  %1926 = vmatprep.subr.mxu0 0.0
  %1927 = vmatpush1.msra.mxu0 0.0
  %1928 = vmatprep.subr.mxu0 0.0
  %1929 = vmatpush1.msra.mxu0 0.0
  %1930 = vmatprep.subr.mxu0 0.0
  %1931 = vmatpush1.msra.mxu0 0.0
  %1932 = vmatprep.subr.mxu0 0.0
  %1933 = vmatpush1.msra.mxu0 0.0
  %1934 = vmatprep.subr.mxu0 0.0
  %1935 = vmatpush1.msra.mxu0 0.0
  %1936 = vmatprep.subr.mxu0 0.0
  %1937 = vmatpush1.msra.mxu0 0.0
  %1938 = vmatprep.subr.mxu0 0.0
  %1939 = vmatpush1.msra.mxu0 0.0
  %1940 = vmatprep.subr.mxu0 0.0
  %1941 = vmatpush1.msra.mxu0 0.0
  %1942 = vmatprep.subr.mxu0 0.0
  %1943 = vmatpush1.msra.mxu0 0.0
  %1944 = vmatprep.subr.mxu0 0.0
  %1945 = vmatpush1.msra.mxu0 0.0
  %1946 = vmatprep.subr.mxu0 0.0
  %1947 = vmatpush1.msra.mxu0 0.0
  %1948 = vmatprep.subr.mxu0 0.0
  %1949 = vmatpush1.msra.mxu0 0.0
  %1950 = vmatprep.subr.mxu0 0.0
  %1951 = vmatpush1.msra.mxu0 0.0
  %1952 = vmatprep.subr.mxu0 0.0
  %1953 = vmatpush1.msra.mxu0 0.0
  %1954 = vmatprep.subr.mxu0 0.0
  %1955 = vmatpush1.msra.mxu0 0.0
  %1956 = vmatprep.subr.mxu0 0.0
  %1957 = vmatpush1.msra.mxu0 0.0
  %1958 = vmatprep.subr.mxu0 0.0
  %1959 = vmatpush1.msra.mxu0 0.0
  %1960 = vmatprep.subr.mxu0 0.0
  %1961 = vmatpush1.msra.mxu0 0.0
  %1962 = vmatprep.subr.mxu0 0.0
  %1963 = vmatpush1.msra.mxu0 0.0
  %1964 = vmatprep.subr.mxu0 0.0
  %1965 = vmatpush1.msra.mxu0 0.0
  %1966 = vmatprep.subr.mxu0 0.0
  %1967 = vmatpush1.msra.mxu0 0.0
  %1968 = vmatprep.subr.mxu0 0.0
  %1969 = vmatpush1.msra.mxu0 0.0
  %1970 = vmatprep.subr.mxu0 0.0
  %1971 = vmatpush1.msra.mxu0 0.0
  %1972 = vmatprep.subr.mxu0 0.0
  %1973 = vmatpush1.msra.mxu0 0.0
  %1974 = vmatprep.mubr.f32.mxu0 0.0
  %1975 = vmatmul.mubr.f32.gmra.mrb[0].mxu0 %v1908
  %v1976 = vpop.f32.mrb[0].mxu0
  %v1977 = vadd.f32 %v1906, %v1976
  %v1978 = vpop.f32.mrb[0].mxu0
  %1979 = vdwg.mxu0
  %v1980 = vmax.f32 %v1977, 0.0
  %v1981 = vld [vmem:[%s5 + $0x20] sm:$0xff]
  %v1982 = vld [vmem:[%s5 + $0x28] sm:$0xff]
  %v1983 = vld [vmem:[%s5 + $0x30] sm:$0xff]
  %v1984 = vld [vmem:[%s5 + $0x38] sm:$0xff]
  %v1985 = vld [vmem:[%s5 + $0x81] sm:$0x1]
  %v1986 = vlaneseq
  %v1987 = vshrl.u32 %v1986, 7
  %v1988 = vsub.s32 0, %v1987
  %v1989 = vrot.slane %v1985, %v1988
  %v1991 = vsel %vm1484, %v1980, 0
  %1993 = vmatprep.subr.mxu0 0.0
  %1994 = vmatpush1.msra.mxu0 %v1981
  %1995 = vmatprep.subr.mxu0 0.0
  %1996 = vmatpush1.msra.mxu0 %v1982
  %1997 = vmatprep.subr.mxu0 0.0
  %1998 = vmatpush1.msra.mxu0 %v1983
  %1999 = vmatprep.subr.mxu0 0.0
  %2000 = vmatpush1.msra.mxu0 %v1984
  %2001 = vmatprep.subr.mxu0 0.0
  %2002 = vmatpush1.msra.mxu0 0.0
  %2003 = vmatprep.subr.mxu0 0.0
  %2004 = vmatpush1.msra.mxu0 0.0
  %2005 = vmatprep.subr.mxu0 0.0
  %2006 = vmatpush1.msra.mxu0 0.0
  %2007 = vmatprep.subr.mxu0 0.0
  %2008 = vmatpush1.msra.mxu0 0.0
  %2009 = vmatprep.subr.mxu0 0.0
  %2010 = vmatpush1.msra.mxu0 0.0
  %2011 = vmatprep.subr.mxu0 0.0
  %2012 = vmatpush1.msra.mxu0 0.0
  %2013 = vmatprep.subr.mxu0 0.0
  %2014 = vmatpush1.msra.mxu0 0.0
  %2015 = vmatprep.subr.mxu0 0.0
  %2016 = vmatpush1.msra.mxu0 0.0
  %2017 = vmatprep.subr.mxu0 0.0
  %2018 = vmatpush1.msra.mxu0 0.0
  %2019 = vmatprep.subr.mxu0 0.0
  %2020 = vmatpush1.msra.mxu0 0.0
  %2021 = vmatprep.subr.mxu0 0.0
  %2022 = vmatpush1.msra.mxu0 0.0
  %2023 = vmatprep.subr.mxu0 0.0
  %2024 = vmatpush1.msra.mxu0 0.0
  %2025 = vmatprep.subr.mxu0 0.0
  %2026 = vmatpush1.msra.mxu0 0.0
  %2027 = vmatprep.subr.mxu0 0.0
  %2028 = vmatpush1.msra.mxu0 0.0
  %2029 = vmatprep.subr.mxu0 0.0
  %2030 = vmatpush1.msra.mxu0 0.0
  %2031 = vmatprep.subr.mxu0 0.0
  %2032 = vmatpush1.msra.mxu0 0.0
  %2033 = vmatprep.subr.mxu0 0.0
  %2034 = vmatpush1.msra.mxu0 0.0
  %2035 = vmatprep.subr.mxu0 0.0
  %2036 = vmatpush1.msra.mxu0 0.0
  %2037 = vmatprep.subr.mxu0 0.0
  %2038 = vmatpush1.msra.mxu0 0.0
  %2039 = vmatprep.subr.mxu0 0.0
  %2040 = vmatpush1.msra.mxu0 0.0
  %2041 = vmatprep.subr.mxu0 0.0
  %2042 = vmatpush1.msra.mxu0 0.0
  %2043 = vmatprep.subr.mxu0 0.0
  %2044 = vmatpush1.msra.mxu0 0.0
  %2045 = vmatprep.subr.mxu0 0.0
  %2046 = vmatpush1.msra.mxu0 0.0
  %2047 = vmatprep.subr.mxu0 0.0
  %2048 = vmatpush1.msra.mxu0 0.0
  %2049 = vmatprep.subr.mxu0 0.0
  %2050 = vmatpush1.msra.mxu0 0.0
  %2051 = vmatprep.subr.mxu0 0.0
  %2052 = vmatpush1.msra.mxu0 0.0
  %2053 = vmatprep.subr.mxu0 0.0
  %2054 = vmatpush1.msra.mxu0 0.0
  %2055 = vmatprep.subr.mxu0 0.0
  %2056 = vmatpush1.msra.mxu0 0.0
  %2057 = vmatprep.mubr.f32.mxu0 0.0
  %2058 = vmatmul.mubr.f32.gmra.mrb[0].mxu0 %v1991
  %v2059 = vpop.f32.mrb[0].mxu0
  %v2060 = vadd.f32 %v1989, %v2059
  %v2061 = vpop.f32.mrb[0].mxu0
  %2062 = vdwg.mxu0
  %v2064 = vrot.slane %v2060, 1
  %v2065 = vrot.slane %v2060, 2
  %v2068 = vadd.f32 %v1729, %v2064
  %v2069 = vadd.f32 %v1730, %v2065
  %v2070 = vld [vmem:[%s3 + $0x20] sm:$0xff]
  %v2071 = vld [vmem:[%s3 + $0x28] sm:$0xff]
  %v2074 = vrot.slane %v2068, 7
  %v2075 = vrot.slane %v2069, 6
  %v2076 = vsel %vm337, %v2075, %v2074
  %2077 = vrot.lane.b32.xlu0 %v1394, 64
  %v2078 = vpop.permute.xlu0 %2077
  %v2080 = vsel %vm116, %v2076, 0
  %2082 = vmatprep.subr.mxu0 0.0
  %2083 = vmatpush1.msra.mxu0 %v2070
  %2084 = vmatprep.subr.mxu0 0.0
  %2085 = vmatpush1.msra.mxu0 %v2071
  %2086 = vmatprep.subr.mxu0 0.0
  %2087 = vmatpush1.msra.mxu0 0.0
  %2088 = vmatprep.subr.mxu0 0.0
  %2089 = vmatpush1.msra.mxu0 0.0
  %2090 = vmatprep.subr.mxu0 0.0
  %2091 = vmatpush1.msra.mxu0 0.0
  %2092 = vmatprep.subr.mxu0 0.0
  %2093 = vmatpush1.msra.mxu0 0.0
  %2094 = vmatprep.subr.mxu0 0.0
  %2095 = vmatpush1.msra.mxu0 0.0
  %2096 = vmatprep.subr.mxu0 0.0
  %2097 = vmatpush1.msra.mxu0 0.0
  %2098 = vmatprep.subr.mxu0 0.0
  %2099 = vmatpush1.msra.mxu0 0.0
  %2100 = vmatprep.subr.mxu0 0.0
  %2101 = vmatpush1.msra.mxu0 0.0
  %2102 = vmatprep.subr.mxu0 0.0
  %2103 = vmatpush1.msra.mxu0 0.0
  %2104 = vmatprep.subr.mxu0 0.0
  %2105 = vmatpush1.msra.mxu0 0.0
  %2106 = vmatprep.subr.mxu0 0.0
  %2107 = vmatpush1.msra.mxu0 0.0
  %2108 = vmatprep.subr.mxu0 0.0
  %2109 = vmatpush1.msra.mxu0 0.0
  %2110 = vmatprep.subr.mxu0 0.0
  %2111 = vmatpush1.msra.mxu0 0.0
  %2112 = vmatprep.subr.mxu0 0.0
  %2113 = vmatpush1.msra.mxu0 0.0
  %2114 = vmatprep.subr.mxu0 0.0
  %2115 = vmatpush1.msra.mxu0 0.0
  %2116 = vmatprep.subr.mxu0 0.0
  %2117 = vmatpush1.msra.mxu0 0.0
  %2118 = vmatprep.subr.mxu0 0.0
  %2119 = vmatpush1.msra.mxu0 0.0
  %2120 = vmatprep.subr.mxu0 0.0
  %2121 = vmatpush1.msra.mxu0 0.0
  %2122 = vmatprep.subr.mxu0 0.0
  %2123 = vmatpush1.msra.mxu0 0.0
  %2124 = vmatprep.subr.mxu0 0.0
  %2125 = vmatpush1.msra.mxu0 0.0
  %2126 = vmatprep.subr.mxu0 0.0
  %2127 = vmatpush1.msra.mxu0 0.0
  %2128 = vmatprep.subr.mxu0 0.0
  %2129 = vmatpush1.msra.mxu0 0.0
  %2130 = vmatprep.subr.mxu0 0.0
  %2131 = vmatpush1.msra.mxu0 0.0
  %2132 = vmatprep.subr.mxu0 0.0
  %2133 = vmatpush1.msra.mxu0 0.0
  %2134 = vmatprep.subr.mxu0 0.0
  %2135 = vmatpush1.msra.mxu0 0.0
  %2136 = vmatprep.subr.mxu0 0.0
  %2137 = vmatpush1.msra.mxu0 0.0
  %2138 = vmatprep.subr.mxu0 0.0
  %2139 = vmatpush1.msra.mxu0 0.0
  %2140 = vmatprep.subr.mxu0 0.0
  %2141 = vmatpush1.msra.mxu0 0.0
  %2142 = vmatprep.subr.mxu0 0.0
  %2143 = vmatpush1.msra.mxu0 0.0
  %2144 = vmatprep.subr.mxu0 0.0
  %2145 = vmatpush1.msra.mxu0 0.0
  %2146 = vmatprep.mubr.f32.mxu0 0.0
  %2147 = vmatmul.mubr.f32.gmra.mrb[0].mxu0 %v2080
  %v2148 = vpop.f32.mrb[0].mxu0
  %v2149 = vadd.f32 %v2078, %v2148
  %v2150 = vpop.f32.mrb[0].mxu0
  %2151 = vdwg.mxu0
  %v2152 = vmax.f32 %v2149, 0.0
  %v2153 = vld [vmem:[%s3 + $0xc0] sm:$0xff]
  %v2154 = vld [vmem:[%s3 + $0xc8] sm:$0xff]
  %v2155 = vld [vmem:[%s3 + $0xd0] sm:$0xff]
  %v2156 = vld [vmem:[%s3 + $0xd8] sm:$0xff]
  %v2157 = vld [vmem:[%s3 + $0x144] sm:$0x1]
  %v2158 = vlaneseq
  %v2159 = vshrl.u32 %v2158, 7
  %v2160 = vsub.s32 0, %v2159
  %v2161 = vrot.slane %v2157, %v2160
  %v2163 = vsel %vm1484, %v2152, 0
  %2165 = vmatprep.subr.mxu0 0.0
  %2166 = vmatpush1.msra.mxu0 %v2153
  %2167 = vmatprep.subr.mxu0 0.0
  %2168 = vmatpush1.msra.mxu0 %v2154
  %2169 = vmatprep.subr.mxu0 0.0
  %2170 = vmatpush1.msra.mxu0 %v2155
  %2171 = vmatprep.subr.mxu0 0.0
  %2172 = vmatpush1.msra.mxu0 %v2156
  %2173 = vmatprep.subr.mxu0 0.0
  %2174 = vmatpush1.msra.mxu0 0.0
  %2175 = vmatprep.subr.mxu0 0.0
  %2176 = vmatpush1.msra.mxu0 0.0
  %2177 = vmatprep.subr.mxu0 0.0
  %2178 = vmatpush1.msra.mxu0 0.0
  %2179 = vmatprep.subr.mxu0 0.0
  %2180 = vmatpush1.msra.mxu0 0.0
  %2181 = vmatprep.subr.mxu0 0.0
  %2182 = vmatpush1.msra.mxu0 0.0
  %2183 = vmatprep.subr.mxu0 0.0
  %2184 = vmatpush1.msra.mxu0 0.0
  %2185 = vmatprep.subr.mxu0 0.0
  %2186 = vmatpush1.msra.mxu0 0.0
  %2187 = vmatprep.subr.mxu0 0.0
  %2188 = vmatpush1.msra.mxu0 0.0
  %2189 = vmatprep.subr.mxu0 0.0
  %2190 = vmatpush1.msra.mxu0 0.0
  %2191 = vmatprep.subr.mxu0 0.0
  %2192 = vmatpush1.msra.mxu0 0.0
  %2193 = vmatprep.subr.mxu0 0.0
  %2194 = vmatpush1.msra.mxu0 0.0
  %2195 = vmatprep.subr.mxu0 0.0
  %2196 = vmatpush1.msra.mxu0 0.0
  %2197 = vmatprep.subr.mxu0 0.0
  %2198 = vmatpush1.msra.mxu0 0.0
  %2199 = vmatprep.subr.mxu0 0.0
  %2200 = vmatpush1.msra.mxu0 0.0
  %2201 = vmatprep.subr.mxu0 0.0
  %2202 = vmatpush1.msra.mxu0 0.0
  %2203 = vmatprep.subr.mxu0 0.0
  %2204 = vmatpush1.msra.mxu0 0.0
  %2205 = vmatprep.subr.mxu0 0.0
  %2206 = vmatpush1.msra.mxu0 0.0
  %2207 = vmatprep.subr.mxu0 0.0
  %2208 = vmatpush1.msra.mxu0 0.0
  %2209 = vmatprep.subr.mxu0 0.0
  %2210 = vmatpush1.msra.mxu0 0.0
  %2211 = vmatprep.subr.mxu0 0.0
  %2212 = vmatpush1.msra.mxu0 0.0
  %2213 = vmatprep.subr.mxu0 0.0
  %2214 = vmatpush1.msra.mxu0 0.0
  %2215 = vmatprep.subr.mxu0 0.0
  %2216 = vmatpush1.msra.mxu0 0.0
  %2217 = vmatprep.subr.mxu0 0.0
  %2218 = vmatpush1.msra.mxu0 0.0
  %2219 = vmatprep.subr.mxu0 0.0
  %2220 = vmatpush1.msra.mxu0 0.0
  %2221 = vmatprep.subr.mxu0 0.0
  %2222 = vmatpush1.msra.mxu0 0.0
  %2223 = vmatprep.subr.mxu0 0.0
  %2224 = vmatpush1.msra.mxu0 0.0
  %2225 = vmatprep.subr.mxu0 0.0
  %2226 = vmatpush1.msra.mxu0 0.0
  %2227 = vmatprep.subr.mxu0 0.0
  %2228 = vmatpush1.msra.mxu0 0.0
  %2229 = vmatprep.mubr.f32.mxu0 0.0
  %2230 = vmatmul.mubr.f32.gmra.mrb[0].mxu0 %v2163
  %v2231 = vpop.f32.mrb[0].mxu0
  %v2232 = vadd.f32 %v2161, %v2231
  %v2233 = vpop.f32.mrb[0].mxu0
  %2234 = vdwg.mxu0
  %v2235 = vmax.f32 %v2232, 0.0
  %v2236 = vld [vmem:[%s3 + $0xe0] sm:$0xff]
  %v2237 = vld [vmem:[%s3 + $0xe8] sm:$0xff]
  %v2238 = vld [vmem:[%s3 + $0xf0] sm:$0xff]
  %v2239 = vld [vmem:[%s3 + $0xf8] sm:$0xff]
  %v2240 = vld [vmem:[%s3 + $0x145] sm:$0x1]
  %v2241 = vlaneseq
  %v2242 = vshrl.u32 %v2241, 7
  %v2243 = vsub.s32 0, %v2242
  %v2244 = vrot.slane %v2240, %v2243
  %v2246 = vsel %vm1484, %v2235, 0
  %2248 = vmatprep.subr.mxu0 0.0
  %2249 = vmatpush1.msra.mxu0 %v2236
  %2250 = vmatprep.subr.mxu0 0.0
  %2251 = vmatpush1.msra.mxu0 %v2237
  %2252 = vmatprep.subr.mxu0 0.0
  %2253 = vmatpush1.msra.mxu0 %v2238
  %2254 = vmatprep.subr.mxu0 0.0
  %2255 = vmatpush1.msra.mxu0 %v2239
  %2256 = vmatprep.subr.mxu0 0.0
  %2257 = vmatpush1.msra.mxu0 0.0
  %2258 = vmatprep.subr.mxu0 0.0
  %2259 = vmatpush1.msra.mxu0 0.0
  %2260 = vmatprep.subr.mxu0 0.0
  %2261 = vmatpush1.msra.mxu0 0.0
  %2262 = vmatprep.subr.mxu0 0.0
  %2263 = vmatpush1.msra.mxu0 0.0
  %2264 = vmatprep.subr.mxu0 0.0
  %2265 = vmatpush1.msra.mxu0 0.0
  %2266 = vmatprep.subr.mxu0 0.0
  %2267 = vmatpush1.msra.mxu0 0.0
  %2268 = vmatprep.subr.mxu0 0.0
  %2269 = vmatpush1.msra.mxu0 0.0
  %2270 = vmatprep.subr.mxu0 0.0
  %2271 = vmatpush1.msra.mxu0 0.0
  %2272 = vmatprep.subr.mxu0 0.0
  %2273 = vmatpush1.msra.mxu0 0.0
  %2274 = vmatprep.subr.mxu0 0.0
  %2275 = vmatpush1.msra.mxu0 0.0
  %2276 = vmatprep.subr.mxu0 0.0
  %2277 = vmatpush1.msra.mxu0 0.0
  %2278 = vmatprep.subr.mxu0 0.0
  %2279 = vmatpush1.msra.mxu0 0.0
  %2280 = vmatprep.subr.mxu0 0.0
  %2281 = vmatpush1.msra.mxu0 0.0
  %2282 = vmatprep.subr.mxu0 0.0
  %2283 = vmatpush1.msra.mxu0 0.0
  %2284 = vmatprep.subr.mxu0 0.0
  %2285 = vmatpush1.msra.mxu0 0.0
  %2286 = vmatprep.subr.mxu0 0.0
  %2287 = vmatpush1.msra.mxu0 0.0
  %2288 = vmatprep.subr.mxu0 0.0
  %2289 = vmatpush1.msra.mxu0 0.0
  %2290 = vmatprep.subr.mxu0 0.0
  %2291 = vmatpush1.msra.mxu0 0.0
  %2292 = vmatprep.subr.mxu0 0.0
  %2293 = vmatpush1.msra.mxu0 0.0
  %2294 = vmatprep.subr.mxu0 0.0
  %2295 = vmatpush1.msra.mxu0 0.0
  %2296 = vmatprep.subr.mxu0 0.0
  %2297 = vmatpush1.msra.mxu0 0.0
  %2298 = vmatprep.subr.mxu0 0.0
  %2299 = vmatpush1.msra.mxu0 0.0
  %2300 = vmatprep.subr.mxu0 0.0
  %2301 = vmatpush1.msra.mxu0 0.0
  %2302 = vmatprep.subr.mxu0 0.0
  %2303 = vmatpush1.msra.mxu0 0.0
  %2304 = vmatprep.subr.mxu0 0.0
  %2305 = vmatpush1.msra.mxu0 0.0
  %2306 = vmatprep.subr.mxu0 0.0
  %2307 = vmatpush1.msra.mxu0 0.0
  %2308 = vmatprep.subr.mxu0 0.0
  %2309 = vmatpush1.msra.mxu0 0.0
  %2310 = vmatprep.subr.mxu0 0.0
  %2311 = vmatpush1.msra.mxu0 0.0
  %2312 = vmatprep.mubr.f32.mxu0 0.0
  %2313 = vmatmul.mubr.f32.gmra.mrb[0].mxu0 %v2246
  %v2314 = vpop.f32.mrb[0].mxu0
  %v2315 = vadd.f32 %v2244, %v2314
  %v2316 = vpop.f32.mrb[0].mxu0
  %2317 = vdwg.mxu0
  %v2318 = vmax.f32 %v2315, 0.0
  %v2319 = vld [vmem:[%s5 + $0x40] sm:$0xff]
  %v2320 = vld [vmem:[%s5 + $0x48] sm:$0xff]
  %v2321 = vld [vmem:[%s5 + $0x50] sm:$0xff]
  %v2322 = vld [vmem:[%s5 + $0x58] sm:$0xff]
  %v2323 = vld [vmem:[%s5 + $0x82] sm:$0x1]
  %v2324 = vlaneseq
  %v2325 = vshrl.u32 %v2324, 7
  %v2326 = vsub.s32 0, %v2325
  %v2327 = vrot.slane %v2323, %v2326
  %v2329 = vsel %vm1484, %v2318, 0
  %2331 = vmatprep.subr.mxu0 0.0
  %2332 = vmatpush1.msra.mxu0 %v2319
  %2333 = vmatprep.subr.mxu0 0.0
  %2334 = vmatpush1.msra.mxu0 %v2320
  %2335 = vmatprep.subr.mxu0 0.0
  %2336 = vmatpush1.msra.mxu0 %v2321
  %2337 = vmatprep.subr.mxu0 0.0
  %2338 = vmatpush1.msra.mxu0 %v2322
  %2339 = vmatprep.subr.mxu0 0.0
  %2340 = vmatpush1.msra.mxu0 0.0
  %2341 = vmatprep.subr.mxu0 0.0
  %2342 = vmatpush1.msra.mxu0 0.0
  %2343 = vmatprep.subr.mxu0 0.0
  %2344 = vmatpush1.msra.mxu0 0.0
  %2345 = vmatprep.subr.mxu0 0.0
  %2346 = vmatpush1.msra.mxu0 0.0
  %2347 = vmatprep.subr.mxu0 0.0
  %2348 = vmatpush1.msra.mxu0 0.0
  %2349 = vmatprep.subr.mxu0 0.0
  %2350 = vmatpush1.msra.mxu0 0.0
  %2351 = vmatprep.subr.mxu0 0.0
  %2352 = vmatpush1.msra.mxu0 0.0
  %2353 = vmatprep.subr.mxu0 0.0
  %2354 = vmatpush1.msra.mxu0 0.0
  %2355 = vmatprep.subr.mxu0 0.0
  %2356 = vmatpush1.msra.mxu0 0.0
  %2357 = vmatprep.subr.mxu0 0.0
  %2358 = vmatpush1.msra.mxu0 0.0
  %2359 = vmatprep.subr.mxu0 0.0
  %2360 = vmatpush1.msra.mxu0 0.0
  %2361 = vmatprep.subr.mxu0 0.0
  %2362 = vmatpush1.msra.mxu0 0.0
  %2363 = vmatprep.subr.mxu0 0.0
  %2364 = vmatpush1.msra.mxu0 0.0
  %2365 = vmatprep.subr.mxu0 0.0
  %2366 = vmatpush1.msra.mxu0 0.0
  %2367 = vmatprep.subr.mxu0 0.0
  %2368 = vmatpush1.msra.mxu0 0.0
  %2369 = vmatprep.subr.mxu0 0.0
  %2370 = vmatpush1.msra.mxu0 0.0
  %2371 = vmatprep.subr.mxu0 0.0
  %2372 = vmatpush1.msra.mxu0 0.0
  %2373 = vmatprep.subr.mxu0 0.0
  %2374 = vmatpush1.msra.mxu0 0.0
  %2375 = vmatprep.subr.mxu0 0.0
  %2376 = vmatpush1.msra.mxu0 0.0
  %2377 = vmatprep.subr.mxu0 0.0
  %2378 = vmatpush1.msra.mxu0 0.0
  %2379 = vmatprep.subr.mxu0 0.0
  %2380 = vmatpush1.msra.mxu0 0.0
  %2381 = vmatprep.subr.mxu0 0.0
  %2382 = vmatpush1.msra.mxu0 0.0
  %2383 = vmatprep.subr.mxu0 0.0
  %2384 = vmatpush1.msra.mxu0 0.0
  %2385 = vmatprep.subr.mxu0 0.0
  %2386 = vmatpush1.msra.mxu0 0.0
  %2387 = vmatprep.subr.mxu0 0.0
  %2388 = vmatpush1.msra.mxu0 0.0
  %2389 = vmatprep.subr.mxu0 0.0
  %2390 = vmatpush1.msra.mxu0 0.0
  %2391 = vmatprep.subr.mxu0 0.0
  %2392 = vmatpush1.msra.mxu0 0.0
  %2393 = vmatprep.subr.mxu0 0.0
  %2394 = vmatpush1.msra.mxu0 0.0
  %2395 = vmatprep.mubr.f32.mxu0 0.0
  %2396 = vmatmul.mubr.f32.gmra.mrb[0].mxu0 %v2329
  %v2397 = vpop.f32.mrb[0].mxu0
  %v2398 = vadd.f32 %v2327, %v2397
  %v2399 = vpop.f32.mrb[0].mxu0
  %2400 = vdwg.mxu0
  %v2402 = vrot.slane %v2398, 1
  %v2403 = vrot.slane %v2398, 2
  %v2406 = vadd.f32 %v2068, %v2402
  %v2407 = vadd.f32 %v2069, %v2403
  %v2408 = vld [vmem:[%s3 + $0x30] sm:$0xff]
  %v2409 = vld [vmem:[%s3 + $0x38] sm:$0xff]
  %v2412 = vrot.slane %v2406, 7
  %v2413 = vrot.slane %v2407, 6
  %v2414 = vsel %vm337, %v2413, %v2412
  %2415 = vrot.lane.b32.xlu0 %v1394, 32
  %v2416 = vpop.permute.xlu0 %2415
  %v2418 = vsel %vm116, %v2414, 0
  %2420 = vmatprep.subr.mxu0 0.0
  %2421 = vmatpush1.msra.mxu0 %v2408
  %2422 = vmatprep.subr.mxu0 0.0
  %2423 = vmatpush1.msra.mxu0 %v2409
  %2424 = vmatprep.subr.mxu0 0.0
  %2425 = vmatpush1.msra.mxu0 0.0
  %2426 = vmatprep.subr.mxu0 0.0
  %2427 = vmatpush1.msra.mxu0 0.0
  %2428 = vmatprep.subr.mxu0 0.0
  %2429 = vmatpush1.msra.mxu0 0.0
  %2430 = vmatprep.subr.mxu0 0.0
  %2431 = vmatpush1.msra.mxu0 0.0
  %2432 = vmatprep.subr.mxu0 0.0
  %2433 = vmatpush1.msra.mxu0 0.0
  %2434 = vmatprep.subr.mxu0 0.0
  %2435 = vmatpush1.msra.mxu0 0.0
  %2436 = vmatprep.subr.mxu0 0.0
  %2437 = vmatpush1.msra.mxu0 0.0
  %2438 = vmatprep.subr.mxu0 0.0
  %2439 = vmatpush1.msra.mxu0 0.0
  %2440 = vmatprep.subr.mxu0 0.0
  %2441 = vmatpush1.msra.mxu0 0.0
  %2442 = vmatprep.subr.mxu0 0.0
  %2443 = vmatpush1.msra.mxu0 0.0
  %2444 = vmatprep.subr.mxu0 0.0
  %2445 = vmatpush1.msra.mxu0 0.0
  %2446 = vmatprep.subr.mxu0 0.0
  %2447 = vmatpush1.msra.mxu0 0.0
  %2448 = vmatprep.subr.mxu0 0.0
  %2449 = vmatpush1.msra.mxu0 0.0
  %2450 = vmatprep.subr.mxu0 0.0
  %2451 = vmatpush1.msra.mxu0 0.0
  %2452 = vmatprep.subr.mxu0 0.0
  %2453 = vmatpush1.msra.mxu0 0.0
  %2454 = vmatprep.subr.mxu0 0.0
  %2455 = vmatpush1.msra.mxu0 0.0
  %2456 = vmatprep.subr.mxu0 0.0
  %2457 = vmatpush1.msra.mxu0 0.0
  %2458 = vmatprep.subr.mxu0 0.0
  %2459 = vmatpush1.msra.mxu0 0.0
  %2460 = vmatprep.subr.mxu0 0.0
  %2461 = vmatpush1.msra.mxu0 0.0
  %2462 = vmatprep.subr.mxu0 0.0
  %2463 = vmatpush1.msra.mxu0 0.0
  %2464 = vmatprep.subr.mxu0 0.0
  %2465 = vmatpush1.msra.mxu0 0.0
  %2466 = vmatprep.subr.mxu0 0.0
  %2467 = vmatpush1.msra.mxu0 0.0
  %2468 = vmatprep.subr.mxu0 0.0
  %2469 = vmatpush1.msra.mxu0 0.0
  %2470 = vmatprep.subr.mxu0 0.0
  %2471 = vmatpush1.msra.mxu0 0.0
  %2472 = vmatprep.subr.mxu0 0.0
  %2473 = vmatpush1.msra.mxu0 0.0
  %2474 = vmatprep.subr.mxu0 0.0
  %2475 = vmatpush1.msra.mxu0 0.0
  %2476 = vmatprep.subr.mxu0 0.0
  %2477 = vmatpush1.msra.mxu0 0.0
  %2478 = vmatprep.subr.mxu0 0.0
  %2479 = vmatpush1.msra.mxu0 0.0
  %2480 = vmatprep.subr.mxu0 0.0
  %2481 = vmatpush1.msra.mxu0 0.0
  %2482 = vmatprep.subr.mxu0 0.0
  %2483 = vmatpush1.msra.mxu0 0.0
  %2484 = vmatprep.mubr.f32.mxu0 0.0
  %2485 = vmatmul.mubr.f32.gmra.mrb[0].mxu0 %v2418
  %v2486 = vpop.f32.mrb[0].mxu0
  %v2487 = vadd.f32 %v2416, %v2486
  %v2488 = vpop.f32.mrb[0].mxu0
  %2489 = vdwg.mxu0
  %v2490 = vmax.f32 %v2487, 0.0
  %v2491 = vld [vmem:[%s3 + $0x100] sm:$0xff]
  %v2492 = vld [vmem:[%s3 + $0x108] sm:$0xff]
  %v2493 = vld [vmem:[%s3 + $0x110] sm:$0xff]
  %v2494 = vld [vmem:[%s3 + $0x118] sm:$0xff]
  %v2495 = vld [vmem:[%s3 + $0x146] sm:$0x1]
  %v2496 = vlaneseq
  %v2497 = vshrl.u32 %v2496, 7
  %v2498 = vsub.s32 0, %v2497
  %v2499 = vrot.slane %v2495, %v2498
  %v2501 = vsel %vm1484, %v2490, 0
  %2503 = vmatprep.subr.mxu0 0.0
  %2504 = vmatpush1.msra.mxu0 %v2491
  %2505 = vmatprep.subr.mxu0 0.0
  %2506 = vmatpush1.msra.mxu0 %v2492
  %2507 = vmatprep.subr.mxu0 0.0
  %2508 = vmatpush1.msra.mxu0 %v2493
  %2509 = vmatprep.subr.mxu0 0.0
  %2510 = vmatpush1.msra.mxu0 %v2494
  %2511 = vmatprep.subr.mxu0 0.0
  %2512 = vmatpush1.msra.mxu0 0.0
  %2513 = vmatprep.subr.mxu0 0.0
  %2514 = vmatpush1.msra.mxu0 0.0
  %2515 = vmatprep.subr.mxu0 0.0
  %2516 = vmatpush1.msra.mxu0 0.0
  %2517 = vmatprep.subr.mxu0 0.0
  %2518 = vmatpush1.msra.mxu0 0.0
  %2519 = vmatprep.subr.mxu0 0.0
  %2520 = vmatpush1.msra.mxu0 0.0
  %2521 = vmatprep.subr.mxu0 0.0
  %2522 = vmatpush1.msra.mxu0 0.0
  %2523 = vmatprep.subr.mxu0 0.0
  %2524 = vmatpush1.msra.mxu0 0.0
  %2525 = vmatprep.subr.mxu0 0.0
  %2526 = vmatpush1.msra.mxu0 0.0
  %2527 = vmatprep.subr.mxu0 0.0
  %2528 = vmatpush1.msra.mxu0 0.0
  %2529 = vmatprep.subr.mxu0 0.0
  %2530 = vmatpush1.msra.mxu0 0.0
  %2531 = vmatprep.subr.mxu0 0.0
  %2532 = vmatpush1.msra.mxu0 0.0
  %2533 = vmatprep.subr.mxu0 0.0
  %2534 = vmatpush1.msra.mxu0 0.0
  %2535 = vmatprep.subr.mxu0 0.0
  %2536 = vmatpush1.msra.mxu0 0.0
  %2537 = vmatprep.subr.mxu0 0.0
  %2538 = vmatpush1.msra.mxu0 0.0
  %2539 = vmatprep.subr.mxu0 0.0
  %2540 = vmatpush1.msra.mxu0 0.0
  %2541 = vmatprep.subr.mxu0 0.0
  %2542 = vmatpush1.msra.mxu0 0.0
  %2543 = vmatprep.subr.mxu0 0.0
  %2544 = vmatpush1.msra.mxu0 0.0
  %2545 = vmatprep.subr.mxu0 0.0
  %2546 = vmatpush1.msra.mxu0 0.0
  %2547 = vmatprep.subr.mxu0 0.0
  %2548 = vmatpush1.msra.mxu0 0.0
  %2549 = vmatprep.subr.mxu0 0.0
  %2550 = vmatpush1.msra.mxu0 0.0
  %2551 = vmatprep.subr.mxu0 0.0
  %2552 = vmatpush1.msra.mxu0 0.0
  %2553 = vmatprep.subr.mxu0 0.0
  %2554 = vmatpush1.msra.mxu0 0.0
  %2555 = vmatprep.subr.mxu0 0.0
  %2556 = vmatpush1.msra.mxu0 0.0
  %2557 = vmatprep.subr.mxu0 0.0
  %2558 = vmatpush1.msra.mxu0 0.0
  %2559 = vmatprep.subr.mxu0 0.0
  %2560 = vmatpush1.msra.mxu0 0.0
  %2561 = vmatprep.subr.mxu0 0.0
  %2562 = vmatpush1.msra.mxu0 0.0
  %2563 = vmatprep.subr.mxu0 0.0
  %2564 = vmatpush1.msra.mxu0 0.0
  %2565 = vmatprep.subr.mxu0 0.0
  %2566 = vmatpush1.msra.mxu0 0.0
  %2567 = vmatprep.mubr.f32.mxu0 0.0
  %2568 = vmatmul.mubr.f32.gmra.mrb[0].mxu0 %v2501
  %v2569 = vpop.f32.mrb[0].mxu0
  %v2570 = vadd.f32 %v2499, %v2569
  %v2571 = vpop.f32.mrb[0].mxu0
  %2572 = vdwg.mxu0
  %v2573 = vmax.f32 %v2570, 0.0
  %v2574 = vld [vmem:[%s3 + $0x120] sm:$0xff]
  %v2575 = vld [vmem:[%s3 + $0x128] sm:$0xff]
  %v2576 = vld [vmem:[%s3 + $0x130] sm:$0xff]
  %v2577 = vld [vmem:[%s3 + $0x138] sm:$0xff]
  %v2578 = vld [vmem:[%s3 + $0x147] sm:$0x1]
  %v2579 = vlaneseq
  %v2580 = vshrl.u32 %v2579, 7
  %v2581 = vsub.s32 0, %v2580
  %v2582 = vrot.slane %v2578, %v2581
  %v2584 = vsel %vm1484, %v2573, 0
  %2586 = vmatprep.subr.mxu0 0.0
  %2587 = vmatpush1.msra.mxu0 %v2574
  %2588 = vmatprep.subr.mxu0 0.0
  %2589 = vmatpush1.msra.mxu0 %v2575
  %2590 = vmatprep.subr.mxu0 0.0
  %2591 = vmatpush1.msra.mxu0 %v2576
  %2592 = vmatprep.subr.mxu0 0.0
  %2593 = vmatpush1.msra.mxu0 %v2577
  %2594 = vmatprep.subr.mxu0 0.0
  %2595 = vmatpush1.msra.mxu0 0.0
  %2596 = vmatprep.subr.mxu0 0.0
  %2597 = vmatpush1.msra.mxu0 0.0
  %2598 = vmatprep.subr.mxu0 0.0
  %2599 = vmatpush1.msra.mxu0 0.0
  %2600 = vmatprep.subr.mxu0 0.0
  %2601 = vmatpush1.msra.mxu0 0.0
  %2602 = vmatprep.subr.mxu0 0.0
  %2603 = vmatpush1.msra.mxu0 0.0
  %2604 = vmatprep.subr.mxu0 0.0
  %2605 = vmatpush1.msra.mxu0 0.0
  %2606 = vmatprep.subr.mxu0 0.0
  %2607 = vmatpush1.msra.mxu0 0.0
  %2608 = vmatprep.subr.mxu0 0.0
  %2609 = vmatpush1.msra.mxu0 0.0
  %2610 = vmatprep.subr.mxu0 0.0
  %2611 = vmatpush1.msra.mxu0 0.0
  %2612 = vmatprep.subr.mxu0 0.0
  %2613 = vmatpush1.msra.mxu0 0.0
  %2614 = vmatprep.subr.mxu0 0.0
  %2615 = vmatpush1.msra.mxu0 0.0
  %2616 = vmatprep.subr.mxu0 0.0
  %2617 = vmatpush1.msra.mxu0 0.0
  %2618 = vmatprep.subr.mxu0 0.0
  %2619 = vmatpush1.msra.mxu0 0.0
  %2620 = vmatprep.subr.mxu0 0.0
  %2621 = vmatpush1.msra.mxu0 0.0
  %2622 = vmatprep.subr.mxu0 0.0
  %2623 = vmatpush1.msra.mxu0 0.0
  %2624 = vmatprep.subr.mxu0 0.0
  %2625 = vmatpush1.msra.mxu0 0.0
  %2626 = vmatprep.subr.mxu0 0.0
  %2627 = vmatpush1.msra.mxu0 0.0
  %2628 = vmatprep.subr.mxu0 0.0
  %2629 = vmatpush1.msra.mxu0 0.0
  %2630 = vmatprep.subr.mxu0 0.0
  %2631 = vmatpush1.msra.mxu0 0.0
  %2632 = vmatprep.subr.mxu0 0.0
  %2633 = vmatpush1.msra.mxu0 0.0
  %2634 = vmatprep.subr.mxu0 0.0
  %2635 = vmatpush1.msra.mxu0 0.0
  %2636 = vmatprep.subr.mxu0 0.0
  %2637 = vmatpush1.msra.mxu0 0.0
  %2638 = vmatprep.subr.mxu0 0.0
  %2639 = vmatpush1.msra.mxu0 0.0
  %2640 = vmatprep.subr.mxu0 0.0
  %2641 = vmatpush1.msra.mxu0 0.0
  %2642 = vmatprep.subr.mxu0 0.0
  %2643 = vmatpush1.msra.mxu0 0.0
  %2644 = vmatprep.subr.mxu0 0.0
  %2645 = vmatpush1.msra.mxu0 0.0
  %2646 = vmatprep.subr.mxu0 0.0
  %2647 = vmatpush1.msra.mxu0 0.0
  %2648 = vmatprep.subr.mxu0 0.0
  %2649 = vmatpush1.msra.mxu0 0.0
  %2650 = vmatprep.mubr.f32.mxu0 0.0
  %2651 = vmatmul.mubr.f32.gmra.mrb[0].mxu0 %v2584
  %v2652 = vpop.f32.mrb[0].mxu0
  %v2653 = vadd.f32 %v2582, %v2652
  %v2654 = vpop.f32.mrb[0].mxu0
  %2655 = vdwg.mxu0
  %v2656 = vmax.f32 %v2653, 0.0
  %v2657 = vld [vmem:[%s5 + $0x60] sm:$0xff]
  %v2658 = vld [vmem:[%s5 + $0x68] sm:$0xff]
  %v2659 = vld [vmem:[%s5 + $0x70] sm:$0xff]
  %v2660 = vld [vmem:[%s5 + $0x78] sm:$0xff]
  %v2661 = vld [vmem:[%s5 + $0x83] sm:$0x1]
  %v2662 = vlaneseq
  %v2663 = vshrl.u32 %v2662, 7
  %v2664 = vsub.s32 0, %v2663
  %v2665 = vrot.slane %v2661, %v2664
  %v2667 = vsel %vm1484, %v2656, 0
  %2669 = vmatprep.subr.mxu0 0.0
  %2670 = vmatpush1.msra.mxu0 %v2657
  %2671 = vmatprep.subr.mxu0 0.0
  %2672 = vmatpush1.msra.mxu0 %v2658
  %2673 = vmatprep.subr.mxu0 0.0
  %2674 = vmatpush1.msra.mxu0 %v2659
  %2675 = vmatprep.subr.mxu0 0.0
  %2676 = vmatpush1.msra.mxu0 %v2660
  %2677 = vmatprep.subr.mxu0 0.0
  %2678 = vmatpush1.msra.mxu0 0.0
  %2679 = vmatprep.subr.mxu0 0.0
  %2680 = vmatpush1.msra.mxu0 0.0
  %2681 = vmatprep.subr.mxu0 0.0
  %2682 = vmatpush1.msra.mxu0 0.0
  %2683 = vmatprep.subr.mxu0 0.0
  %2684 = vmatpush1.msra.mxu0 0.0
  %2685 = vmatprep.subr.mxu0 0.0
  %2686 = vmatpush1.msra.mxu0 0.0
  %2687 = vmatprep.subr.mxu0 0.0
  %2688 = vmatpush1.msra.mxu0 0.0
  %2689 = vmatprep.subr.mxu0 0.0
  %2690 = vmatpush1.msra.mxu0 0.0
  %2691 = vmatprep.subr.mxu0 0.0
  %2692 = vmatpush1.msra.mxu0 0.0
  %2693 = vmatprep.subr.mxu0 0.0
  %2694 = vmatpush1.msra.mxu0 0.0
  %2695 = vmatprep.subr.mxu0 0.0
  %2696 = vmatpush1.msra.mxu0 0.0
  %2697 = vmatprep.subr.mxu0 0.0
  %2698 = vmatpush1.msra.mxu0 0.0
  %2699 = vmatprep.subr.mxu0 0.0
  %2700 = vmatpush1.msra.mxu0 0.0
  %2701 = vmatprep.subr.mxu0 0.0
  %2702 = vmatpush1.msra.mxu0 0.0
  %2703 = vmatprep.subr.mxu0 0.0
  %2704 = vmatpush1.msra.mxu0 0.0
  %2705 = vmatprep.subr.mxu0 0.0
  %2706 = vmatpush1.msra.mxu0 0.0
  %2707 = vmatprep.subr.mxu0 0.0
  %2708 = vmatpush1.msra.mxu0 0.0
  %2709 = vmatprep.subr.mxu0 0.0
  %2710 = vmatpush1.msra.mxu0 0.0
  %2711 = vmatprep.subr.mxu0 0.0
  %2712 = vmatpush1.msra.mxu0 0.0
  %2713 = vmatprep.subr.mxu0 0.0
  %2714 = vmatpush1.msra.mxu0 0.0
  %2715 = vmatprep.subr.mxu0 0.0
  %2716 = vmatpush1.msra.mxu0 0.0
  %2717 = vmatprep.subr.mxu0 0.0
  %2718 = vmatpush1.msra.mxu0 0.0
  %2719 = vmatprep.subr.mxu0 0.0
  %2720 = vmatpush1.msra.mxu0 0.0
  %2721 = vmatprep.subr.mxu0 0.0
  %2722 = vmatpush1.msra.mxu0 0.0
  %2723 = vmatprep.subr.mxu0 0.0
  %2724 = vmatpush1.msra.mxu0 0.0
  %2725 = vmatprep.subr.mxu0 0.0
  %2726 = vmatpush1.msra.mxu0 0.0
  %2727 = vmatprep.subr.mxu0 0.0
  %2728 = vmatpush1.msra.mxu0 0.0
  %2729 = vmatprep.subr.mxu0 0.0
  %2730 = vmatpush1.msra.mxu0 0.0
  %2731 = vmatprep.subr.mxu0 0.0
  %2732 = vmatpush1.msra.mxu0 0.0
  %2733 = vmatprep.mubr.f32.mxu0 0.0
  %2734 = vmatmul.mubr.f32.gmra.mrb[0].mxu0 %v2667
  %v2735 = vpop.f32.mrb[0].mxu0
  %v2736 = vadd.f32 %v2665, %v2735
  %v2737 = vpop.f32.mrb[0].mxu0
  %2738 = vdwg.mxu0
  %v2740 = vrot.slane %v2736, 1
  %v2741 = vrot.slane %v2736, 2
  %v2744 = vadd.f32 %v2406, %v2740
  %v2745 = vadd.f32 %v2407, %v2741
  %v2746 = vld [vmem:[%s5 + $0x84] sm:$0x1]
  %v2747 = vlaneseq
  %v2748 = vshrl.u32 %v2747, 7
  %v2749 = vsub.s32 0, %v2748
  %v2750 = vrot.slane %v2746, %v2749
  %v2751 = vmul.f32 %v2744, %v2750
  %v2752 = vmul.f32 %v2745, %v2750
  %v2753 = vmul.f32 %v2751, -0.5
  %v2754 = vmul.f32 %v2752, -0.5
  %v2755 = vmul.f32 %v2753, %v2751
  %v2756 = vmul.f32 %v2754, %v2752
  %v2757 = vsub.f32 %v2755, 0.9189385
  %v2758 = vsub.f32 %v2756, 0.9189385
  %v2761 = vrot.slane %v2758, 7
  %vm2764 = vcmask 130055
  %v2765 = vsel %vm2764, %v2757, 0.0
  %2766 = vadd.xlane.f32.xlu0 %v2765
  %v2767 = vpop.xlane.xlu0 %2766
  %vm2768 = vcmask 122880
  %v2769 = vsel %vm2768, %v2761, 0.0
  %2770 = vadd.xlane.f32.xlu0 %v2769
  %v2771 = vpop.xlane.xlu0 %2770
  %v2772 = vld [vmem:[%s5 + $0x85] sm:$0x1]
  %v2773 = vlaneseq
  %v2774 = vshrl.u32 %v2773, 7
  %v2775 = vsub.s32 0, %v2774
  %v2776 = vrot.slane %v2772, %v2775
  %v2777 = vadd.f32 %v2767, %v2776
  %v2778 = vadd.f32 %v2771, %v2776
  %vm2779 = vcmask 7175
  %2780 = vst.msk [vmem:[%s6 - $0x7] sm:$0x80] %vm2779, %v2777
  %vm2781 = vcmask 0
  %2782 = vst.msk [vmem:[%s6 + $0x1] sm:$0x1] %vm2781, %v2778
  // Predicated region
  $region26: #{nice_ts_forward.1} parent=0 // pred_check
    _
  $region27: #{nice_ts_forward.1} parent=0 // pred_check_branch
    %2784 = sbr.rel (0) target = $region29
  $region28: #{nice_ts_forward.1} parent=0 // pred_region
    _
  $region29: #{nice_ts_forward.1} parent=0 // pred_fallthru
    _
  // Predicated region
  $region30: #{nice_ts_forward.1} parent=0 // pred_check
    _
  $region31: #{nice_ts_forward.1} parent=0 // pred_check_branch
    %2786 = sbr.rel (0) target = $region33
  $region32: #{nice_ts_forward.1} parent=0 // pred_region
    _
  $region33: #{nice_ts_forward.1} parent=0 // pred_fallthru
    _

</llo_original>
